<compile_context>
chip_gen: v5e
topology: v5e:2x2
jax: 0.10.0
libtpu: 0.0.40
codegen_flags: <defaults>
</compile_context>

<pallas_src>
import jax
import jax.numpy as jnp
import numpy as np
from jax.experimental import pallas as pl
from jax.experimental.pallas import tpu as pltpu


def _silu(x):
    return x * jax.nn.sigmoid(x)


def _round_up(x, m):
    return ((x + m - 1) // m) * m


def _vmem_limit_bytes():
    """Scoped VMEM limit derived from the actual part (v7x: 64 MiB, v5e/v6e: 128)."""
    cap = 64 * 1024 * 1024
    try:
        info = pltpu.get_tpu_info()
        cap = int(getattr(info, "vmem_capacity_bytes", cap))
    except Exception:
        pass
    # Leave ~16 MiB for compiler-internal scratch; cap at 100 MiB on 128 MiB parts.
    return int(min(max(cap - 16 * 1024 * 1024, 32 * 1024 * 1024), 100 * 1024 * 1024))


def _choose_tile_n(n_atoms, n_feat, maxm_pad, weight_bytes, vmem_limit):
    # Per-tile-atom VMEM bytes (bf16 double-buffered streams + f32 intermediates):
    #   l1 dbl 12F + l0 dbl 4F + VW f32 12F + vn/pre/h/s1/gate ~14F
    #   + v1flat (f32+bf16 copy) ~9F + alpha/seg/pos/idx constants.
    per_atom = 52 * n_feat + 4 * maxm_pad + 640
    headroom = 6 * 1024 * 1024
    budget = max(vmem_limit - 2 * weight_bytes - headroom, 4 * 1024 * 1024)
    t = budget // per_atom
    t = max(128, min(4096, (t // 128) * 128))
    t = min(t, _round_up(n_atoms, 128))   # never tile past the padded problem
    return int(t)


def _make_lane_masks(out_lanes):
    """[8, out_lanes] f32: rows 0-2 j-select, 3-5 k-select, 6 diag, 7 zero."""
    lane = np.arange(out_lanes)
    jj, kk = lane // 3, lane % 3
    valid = lane < 9
    m = np.zeros((8, out_lanes), np.float32)
    for c in range(3):
        m[c] = ((jj == c) & valid)
        m[3 + c] = ((kk == c) & valid)
    m[6] = ((jj == kk) & valid)
    return jnp.asarray(m)


def polarizability_kernel(pos_ref, l0_ref, l1_ref, idxm_ref, masks_ref,
                          wmix1_ref, w11s_ref, w11v_ref, b11_ref,
                          w21_ref, b21_ref,
                          wmix2_ref, w12s_ref, w12v_ref, b12_ref,
                          w22_ref, b22_ref,
                          out_ref):
    f32 = jnp.float32
    bf16 = jnp.bfloat16
    T = l0_ref.shape[0]                     # atoms per tile
    M = wmix1_ref.shape[1] // 2             # n_mid
    maxm_pad = out_ref.shape[1]

    s = l0_ref[...]                         # [T, F]  bf16
    vflat = l1_ref[...]                     # [3T, F] bf16, row = j*T + n

    # ------------- gated-equivariant block 1 (fused V|W, bf16 MXU) -----------
    VW = jnp.dot(vflat, wmix1_ref[...], preferred_element_type=f32)   # [3T, 2M]
    V = VW[:, :M]
    W = VW[:, M:]
    V0, V1, V2 = V[0:T], V[T:2 * T], V[2 * T:3 * T]
    vn = jnp.sqrt(V0 * V0 + V1 * V1 + V2 * V2)                        # [T, M] f32

    pre = (jnp.dot(s, w11s_ref[...], preferred_element_type=f32)
           + jnp.dot(vn.astype(bf16), w11v_ref[...], preferred_element_type=f32)
           + b11_ref[...])
    h = _silu(pre)                                                    # [T, H1] f32
    x = (jnp.dot(h.astype(bf16), w21_ref[...], preferred_element_type=f32)
         + b21_ref[...])                                              # [T, 2M]
    s1 = _silu(x[:, :M])                                              # [T, M]
    gate1 = x[:, M:]                                                  # [T, M]
    # v1flat[j*T+n, :] = gate1[n] * W[j*T+n]  (one tiled multiply, no concat)
    v1flat = (jnp.tile(gate1, (3, 1)) * W).astype(bf16)               # [3T, M]

    # ------------- gated-equivariant block 2 (output block, fused N=2) -------
    VW2 = jnp.dot(v1flat, wmix2_ref[...], preferred_element_type=f32) # [3T, 2]
    Vb = VW2[:, 0:1]
    W2 = VW2[:, 1:2]
    V0, V1, V2 = Vb[0:T], Vb[T:2 * T], Vb[2 * T:3 * T]
    vn2 = jnp.sqrt(V0 * V0 + V1 * V1 + V2 * V2)                       # [T, 1]

    pre = (jnp.dot(s1.astype(bf16), w12s_ref[...], preferred_element_type=f32)
           + vn2 * w12v_ref[...]            # [T,1] x [1,H2] broadcast (K=1 row)
           + b12_ref[...])
    h = _silu(pre)                                                    # [T, H2]
    x = (jnp.dot(h.astype(bf16), w22_ref[...], preferred_element_type=f32)
         + b22_ref[...])                                              # [T, 2]
    s_out = x[:, 0:1]
    gate2 = x[:, 1:2]
    v0 = gate2 * W2[0:T]
    v1 = gate2 * W2[T:2 * T]
    v2 = gate2 * W2[2 * T:3 * T]                                      # [T, 1] each

    # -------- rank-1 tensor assembly, lane-dense [T, 128] via const masks ----
    # alpha[n, 3*j + k] = s[n]*d_jk + v[n,j]*r[n,k] + v[n,k]*r[n,j]
    pos = pos_ref[...]                                                # [T, 3] f32
    r0, r1, r2 = pos[:, 0:1], pos[:, 1:2], pos[:, 2:3]
    m = masks_ref[...]                                                # [8, 128]
    j0, j1, j2 = m[0:1], m[1:2], m[2:3]
    k0, k1, k2 = m[3:4], m[4:5], m[5:6]
    dg = m[6:7]
    vj = v0 * j0 + v1 * j1 + v2 * j2                                  # [T, 128]
    vk = v0 * k0 + v1 * k1 + v2 * k2
    rj = r0 * j0 + r1 * j1 + r2 * j2
    rk = r0 * k0 + r1 * k1 + r2 * k2
    alpha = vj * rk + vk * rj + s_out * dg                            # [T, 128]

    # -------- per-molecule scatter-add: one-hot segment matmul (f32) ---------
    # Padded atoms carry a sentinel idx >= maxm_pad, so they never match.
    idxm = idxm_ref[...]                                              # [1, T]
    seg = (jax.lax.broadcasted_iota(jnp.int32, (maxm_pad, T), 0)
           == idxm).astype(f32)                                       # [maxm_pad, T]
    partial = jnp.dot(seg, alpha, preferred_element_type=f32)         # [maxm_pad, 128]

    @pl.when(pl.program_id(1) == 0)
    def _():
        out_ref[...] = jnp.zeros_like(out_ref)

    out_ref[...] += partial[None, :, :]


def polarizability_forward(positions, l0, l1, idx_m, params, maxm):
    """Pallas wrapper. l1 is given in PyTorch layout [N, 3, F]."""
    n_atoms, n_feat = l0.shape
    n_in = params["wmix1"].shape[0]
    n_mid = params["wmix1"].shape[1] // 2
    f32, bf16 = jnp.float32, jnp.bfloat16

    maxm_pad = _round_up(max(maxm, 1), 8)
    out_lanes = 128

    # ---- weights: pre-split / fused in the wrapper, MXU operands in bf16 -----
    wmix1 = params["wmix1"].astype(bf16)               # [F, 2M]  (V | W fused)
    w11s = params["w11"][:n_in].astype(bf16)           # [F, H1]
    w11v = params["w11"][n_in:].astype(bf16)           # [M, H1]
    b11 = params["b11"].astype(f32)                    # [1, H1]
    w21 = params["w21"].astype(bf16)                   # [H1, 2M] (s | gate fused)
    b21 = params["b21"].astype(f32)                    # [1, 2M]
    wmix2 = params["wmix2"].astype(bf16)               # [M, 2]   (V | W fused)
    w12s = params["w12"][:n_mid].astype(bf16)          # [M, H2]
    w12v = params["w12"][n_mid:].astype(f32)           # [1, H2]  (VPU broadcast)
    b12 = params["b12"].astype(f32)                    # [1, H2]
    w22 = params["w22"].astype(bf16)                   # [H2, 2]  (s | gate fused)
    b22 = params["b22"].astype(f32)                    # [1, 2]
    weights = [wmix1, w11s, w11v, b11, w21, b21,
               wmix2, w12s, w12v, b12, w22, b22]
    weight_bytes = int(sum(int(np.prod(w.shape)) * w.dtype.itemsize
                           for w in weights))

    vmem_limit = _vmem_limit_bytes()
    tile_n = _choose_tile_n(n_atoms, n_feat, maxm_pad, weight_bytes, vmem_limit)

    nt_needed = max(1, -(-n_atoms // tile_n))
    num_cores = 2 if nt_needed >= 2 else 1       # v7x megacore; harmless on 1-TC chips
    npc = -(-nt_needed // num_cores)             # atom tiles per core
    nt_total = num_cores * npc
    n_pad = nt_total * tile_n
    pad = n_pad - n_atoms

    # ---- data layout plumbing (all in XLA, once per call) --------------------
    pos_p = jnp.pad(positions.astype(f32), ((0, pad), (0, 0)))
    l0_p = jnp.pad(l0.astype(bf16), ((0, pad), (0, 0)))
    # l1 [N,3,F] -> per-tile spatial-major flat slab [nt_total*3*tile_n, F] (bf16)
    l1_sm = jnp.pad(jnp.transpose(l1.astype(bf16), (1, 0, 2)),
                    ((0, 0), (0, pad), (0, 0)))                        # [3, N_pad, F]
    l1_flat = (l1_sm.reshape(3, nt_total, tile_n, n_feat)
               .transpose(1, 0, 2, 3)
               .reshape(nt_total * 3 * tile_n, n_feat))
    # padded atoms get a sentinel molecule id that can never match an output row
    idxm_p = jnp.pad(idx_m.astype(jnp.int32), (0, pad),
                     constant_values=maxm_pad).reshape(1, n_pad)
    masks = _make_lane_masks(out_lanes)

    data_specs = [
        pl.BlockSpec((tile_n, 3), lambda c, i: (c * npc + i, 0)),            # positions
        pl.BlockSpec((tile_n, n_feat), lambda c, i: (c * npc + i, 0)),       # l0
        pl.BlockSpec((3 * tile_n, n_feat), lambda c, i: (c * npc + i, 0)),   # l1 slab
        pl.BlockSpec((1, tile_n), lambda c, i: (0, c * npc + i)),            # idx_m
        pl.BlockSpec((8, out_lanes), lambda c, i: (0, 0)),                   # lane masks
    ]
    weight_specs = [pl.BlockSpec(w.shape, lambda c, i: (0, 0)) for w in weights]

    flops = 2 * n_pad * (
        3 * n_feat * 2 * n_mid            # wmix1 (fused V|W)
        + (n_feat + n_mid) * n_feat       # w11
        + n_feat * 2 * n_mid              # w21 (fused s|gate)
        + 3 * n_mid * 2                   # wmix2 (fused)
        + (n_mid + 1) * n_mid             # w12
        + n_mid * 2                       # w22 (fused)
        + maxm_pad * out_lanes            # one-hot segment matmul
    )
    transcendentals = n_pad * (2 * n_feat + 4 * n_mid + 4)
    bytes_accessed = (2 * n_pad * 4 * n_feat                 # bf16 l0 + l1 streams
                      + n_pad * 20                           # pos + idx
                      + weight_bytes
                      + num_cores * maxm_pad * out_lanes * 4)

    out = pl.pallas_call(
        polarizability_kernel,
        out_shape=jax.ShapeDtypeStruct((num_cores, maxm_pad, out_lanes), f32),
        grid=(num_cores, npc),
        in_specs=data_specs + weight_specs,
        out_specs=pl.BlockSpec((1, maxm_pad, out_lanes), lambda c, i: (c, 0, 0)),
        compiler_params=pltpu.CompilerParams(
            dimension_semantics=("parallel", "arbitrary"),   # cores || , tiles accumulate
            vmem_limit_bytes=int(vmem_limit)),
        cost_estimate=pl.CostEstimate(flops=int(flops),
                                      transcendentals=int(transcendentals),
                                      bytes_accessed=int(bytes_accessed)),
    )(pos_p, l0_p, l1_flat, idxm_p, masks, *weights)

    # sum the per-core slabs, slice the 9 used lanes, reshape to (maxm, 3, 3)
    return out.sum(axis=0)[:maxm, :9].reshape(maxm, 3, 3)


def reference_forward(positions, l0, l1, idx_m, params, maxm):
    """Pure-JAX f32 reference mirroring the PyTorch module semantics."""
    def block(s, v, wmix, w1, b1, w2, b2, n_sout, n_vout, sact):
        vmix = jnp.einsum("nif,fo->nio", v, wmix)
        V, W = vmix[..., :n_vout], vmix[..., n_vout:]
        vn = jnp.linalg.norm(V, axis=-2)
        ctx = jnp.concatenate([s, vn], axis=-1)
        h = jax.nn.silu(ctx @ w1 + b1[0])
        x = h @ w2 + b2[0]
        s_out, gate = x[:, :n_sout], x[:, n_sout:]
        v_out = gate[:, None, :] * W
        if sact:
            s_out = jax.nn.silu(s_out)
        return s_out, v_out

    n_out1 = params["wmix1"].shape[1] // 2
    s, v = block(l0, l1, params["wmix1"], params["w11"], params["b11"],
                 params["w21"], params["b21"], n_out1, n_out1, True)
    s, v = block(s, v, params["wmix2"], params["w12"], params["b12"],
                 params["w22"], params["b22"], 1, 1, False)
    alpha_iso = jnp.broadcast_to(s[..., 0:1], (l0.shape[0], 3))
    alpha = jax.vmap(jnp.diag)(alpha_iso)                      # diag_embed
    mur = v[..., 0][..., :, None] * positions[..., None, :]    # [N, 3, 3]
    alpha = alpha + mur + jnp.swapaxes(mur, -2, -1)
    return jax.ops.segment_sum(alpha, idx_m, num_segments=maxm)


def make_params(key, n_in):
    """Deterministic weights for build_gated_equivariant_mlp(n_in, n_out=1,
    n_hidden=None, n_layers=2): n_neurons = [n_in, n_in//2, 1]."""
    n_mid = max(1, n_in // 2)
    ks = jax.random.split(key, 6)
    scale = 0.1
    return {
        # block 1: n_sin=n_vin=n_in, n_sout=n_vout=n_mid, n_hidden=n_in
        "wmix1": scale * jax.random.normal(ks[0], (n_in, 2 * n_mid), jnp.float32),
        "w11":   scale * jax.random.normal(ks[1], (n_in + n_mid, n_in), jnp.float32),
        "b11":   jnp.zeros((1, n_in), jnp.float32),
        "w21":   scale * jax.random.normal(ks[2], (n_in, n_mid + n_mid), jnp.float32),
        "b21":   jnp.zeros((1, n_mid + n_mid), jnp.float32),
        # block 2: n_sin=n_vin=n_mid, n_sout=n_vout=1, n_hidden=n_mid
        "wmix2": scale * jax.random.normal(ks[3], (n_mid, 2), jnp.float32),
        "w12":   scale * jax.random.normal(ks[4], (n_mid + 1, n_mid), jnp.float32),
        "b12":   jnp.zeros((1, n_mid), jnp.float32),
        "w22":   scale * jax.random.normal(ks[5], (n_mid, 2), jnp.float32),
        "b22":   jnp.zeros((1, 2), jnp.float32),
    }


if __name__ == "__main__":
    key = jax.random.PRNGKey(0)
    n_atoms, n_in = 16, 32
    k_pos, k_l0, k_l1, k_par = jax.random.split(key, 4)

    positions = jax.random.normal(k_pos, (n_atoms, 3), jnp.float32)
    l0 = jax.random.normal(k_l0, (n_atoms, n_in), jnp.float32)
    l1 = jax.random.normal(k_l1, (n_atoms, 3, n_in), jnp.float32)
    idx_m_np = np.array([0] * 8 + [1] * 8, dtype=np.int32)  # two molecules
    idx_m = jnp.asarray(idx_m_np)
    maxm = int(idx_m_np[-1]) + 1

    params = make_params(k_par, n_in)

    out = polarizability_forward(positions, l0, l1, idx_m, params, maxm)
    out = jax.block_until_ready(out)

    ref = jax.block_until_ready(
        reference_forward(positions, l0, l1, idx_m, params, maxm))
    # bf16 MXU operands => loosened tolerance vs. the all-f32 reference.
    np.testing.assert_allclose(np.asarray(out), np.asarray(ref),
                               rtol=5e-2, atol=5e-3)
    print("KERNEL_OK")
</pallas_src>

<mosaic_0001>
module attributes {stable_mosaic.version = 11 : i64} {
  func.func @polarizability_kernel(%arg0: i32, %arg1: i32, %arg2: memref<128x3xf32, #tpu.memory_space<vmem>>, %arg3: memref<128x32xbf16, #tpu.memory_space<vmem>>, %arg4: memref<384x32xbf16, #tpu.memory_space<vmem>>, %arg5: memref<1x128xi32, #tpu.memory_space<vmem>>, %arg6: memref<8x128xf32, #tpu.memory_space<vmem>>, %arg7: memref<32x32xbf16, #tpu.memory_space<vmem>>, %arg8: memref<32x32xbf16, #tpu.memory_space<vmem>>, %arg9: memref<16x32xbf16, #tpu.memory_space<vmem>>, %arg10: memref<1x32xf32, #tpu.memory_space<vmem>>, %arg11: memref<32x32xbf16, #tpu.memory_space<vmem>>, %arg12: memref<1x32xf32, #tpu.memory_space<vmem>>, %arg13: memref<16x2xbf16, #tpu.memory_space<vmem>>, %arg14: memref<16x16xbf16, #tpu.memory_space<vmem>>, %arg15: memref<1x16xf32, #tpu.memory_space<vmem>>, %arg16: memref<1x16xf32, #tpu.memory_space<vmem>>, %arg17: memref<16x2xbf16, #tpu.memory_space<vmem>>, %arg18: memref<1x2xf32, #tpu.memory_space<vmem>>, %arg19: memref<1x8x128xf32, #tpu.memory_space<vmem>>) attributes {dimension_semantics = [#tpu.dimension_semantics<parallel>, #tpu.dimension_semantics<arbitrary>], iteration_bounds = array<i64: 1, 1>, scalar_prefetch = 0 : i64, scratch_operands = 0 : i64, tpu.core_type = #tpu.core_type<tc>, window_params = [{transform_indices = @transform_0, window_bounds = array<i64: 128, 3>}, {transform_indices = @transform_1, window_bounds = array<i64: 128, 32>}, {transform_indices = @transform_2, window_bounds = array<i64: 384, 32>}, {transform_indices = @transform_3, window_bounds = array<i64: 1, 128>}, {pipeline_mode = #tpu.pipeline_mode<synchronous>, transform_indices = @transform_4, window_bounds = array<i64: 8, 128>}, {pipeline_mode = #tpu.pipeline_mode<synchronous>, transform_indices = @transform_5, window_bounds = array<i64: 32, 32>}, {pipeline_mode = #tpu.pipeline_mode<synchronous>, transform_indices = @transform_6, window_bounds = array<i64: 32, 32>}, {pipeline_mode = #tpu.pipeline_mode<synchronous>, transform_indices = @transform_7, window_bounds = array<i64: 16, 32>}, {pipeline_mode = #tpu.pipeline_mode<synchronous>, transform_indices = @transform_8, window_bounds = array<i64: 1, 32>}, {pipeline_mode = #tpu.pipeline_mode<synchronous>, transform_indices = @transform_9, window_bounds = array<i64: 32, 32>}, {pipeline_mode = #tpu.pipeline_mode<synchronous>, transform_indices = @transform_10, window_bounds = array<i64: 1, 32>}, {pipeline_mode = #tpu.pipeline_mode<synchronous>, transform_indices = @transform_11, window_bounds = array<i64: 16, 2>}, {pipeline_mode = #tpu.pipeline_mode<synchronous>, transform_indices = @transform_12, window_bounds = array<i64: 16, 16>}, {pipeline_mode = #tpu.pipeline_mode<synchronous>, transform_indices = @transform_13, window_bounds = array<i64: 1, 16>}, {pipeline_mode = #tpu.pipeline_mode<synchronous>, transform_indices = @transform_14, window_bounds = array<i64: 1, 16>}, {pipeline_mode = #tpu.pipeline_mode<synchronous>, transform_indices = @transform_15, window_bounds = array<i64: 16, 2>}, {pipeline_mode = #tpu.pipeline_mode<synchronous>, transform_indices = @transform_16, window_bounds = array<i64: 1, 2>}, {transform_indices = @transform_17, window_bounds = array<i64: 1, 8, 128>}]} {
    %c0 = arith.constant 0 : index
    %c0_0 = arith.constant 0 : index
    %0 = vector.load %arg3[%c0, %c0_0] : memref<128x32xbf16, #tpu.memory_space<vmem>>, vector<128x32xbf16>
    %c0_1 = arith.constant 0 : index
    %c0_2 = arith.constant 0 : index
    %1 = vector.load %arg4[%c0_1, %c0_2] : memref<384x32xbf16, #tpu.memory_space<vmem>>, vector<384x32xbf16>
    %c0_3 = arith.constant 0 : index
    %c0_4 = arith.constant 0 : index
    %2 = vector.load %arg7[%c0_3, %c0_4] : memref<32x32xbf16, #tpu.memory_space<vmem>>, vector<32x32xbf16>
    %cst = arith.constant dense<0.000000e+00> : vector<384x32xf32>
    %3 = tpu.matmul %1, %2, %cst {dimension_numbers = #tpu.dot_dimension_numbers<[1], [0], [0], [1], [0, 0, 1, 1], [], []>} : vector<384x32xbf16>, vector<32x32xbf16>, vector<384x32xf32> -> vector<384x32xf32>
    %4 = vector.extract_strided_slice %3 {offsets = [0, 0], sizes = [384, 16], strides = [1, 1]} : vector<384x32xf32> to vector<384x16xf32>
    %5 = vector.extract_strided_slice %3 {offsets = [0, 16], sizes = [384, 16], strides = [1, 1]} : vector<384x32xf32> to vector<384x16xf32>
    %6 = vector.extract_strided_slice %4 {offsets = [0, 0], sizes = [128, 16], strides = [1, 1]} : vector<384x16xf32> to vector<128x16xf32>
    %7 = vector.extract_strided_slice %4 {offsets = [128, 0], sizes = [128, 16], strides = [1, 1]} : vector<384x16xf32> to vector<128x16xf32>
    %8 = vector.extract_strided_slice %4 {offsets = [256, 0], sizes = [128, 16], strides = [1, 1]} : vector<384x16xf32> to vector<128x16xf32>
    %9 = arith.mulf %6, %6 : vector<128x16xf32>
    %10 = arith.mulf %7, %7 : vector<128x16xf32>
    %11 = arith.addf %9, %10 : vector<128x16xf32>
    %12 = arith.mulf %8, %8 : vector<128x16xf32>
    %13 = arith.addf %11, %12 : vector<128x16xf32>
    %14 = math.sqrt %13 : vector<128x16xf32>
    %c0_5 = arith.constant 0 : index
    %c0_6 = arith.constant 0 : index
    %15 = vector.load %arg8[%c0_5, %c0_6] : memref<32x32xbf16, #tpu.memory_space<vmem>>, vector<32x32xbf16>
    %cst_7 = arith.constant dense<0.000000e+00> : vector<128x32xf32>
    %16 = tpu.matmul %0, %15, %cst_7 {dimension_numbers = #tpu.dot_dimension_numbers<[1], [0], [0], [1], [0, 0, 1, 1], [], []>} : vector<128x32xbf16>, vector<32x32xbf16>, vector<128x32xf32> -> vector<128x32xf32>
    %17 = arith.truncf %14 : vector<128x16xf32> to vector<128x16xbf16>
    %c0_8 = arith.constant 0 : index
    %c0_9 = arith.constant 0 : index
    %18 = vector.load %arg9[%c0_8, %c0_9] : memref<16x32xbf16, #tpu.memory_space<vmem>>, vector<16x32xbf16>
    %cst_10 = arith.constant dense<0.000000e+00> : vector<128x32xf32>
    %19 = tpu.matmul %17, %18, %cst_10 {dimension_numbers = #tpu.dot_dimension_numbers<[1], [0], [0], [1], [0, 0, 1, 1], [], []>} : vector<128x16xbf16>, vector<16x32xbf16>, vector<128x32xf32> -> vector<128x32xf32>
    %20 = arith.addf %16, %19 : vector<128x32xf32>
    %c0_11 = arith.constant 0 : index
    %c0_12 = arith.constant 0 : index
    %21 = vector.load %arg10[%c0_11, %c0_12] : memref<1x32xf32, #tpu.memory_space<vmem>>, vector<1x32xf32>
    %22 = vector.broadcast %21 : vector<1x32xf32> to vector<128x32xf32>
    %23 = arith.addf %20, %22 : vector<128x32xf32>
    %24 = arith.negf %23 : vector<128x32xf32>
    %25 = math.exp %24 : vector<128x32xf32>
    %cst_13 = arith.constant 1.000000e+00 : f32
    %26 = vector.broadcast %cst_13 : f32 to vector<128x32xf32>
    %27 = arith.addf %26, %25 : vector<128x32xf32>
    %28 = arith.divf %26, %27 : vector<128x32xf32>
    %29 = arith.mulf %23, %28 : vector<128x32xf32>
    %30 = arith.truncf %29 : vector<128x32xf32> to vector<128x32xbf16>
    %c0_14 = arith.constant 0 : index
    %c0_15 = arith.constant 0 : index
    %31 = vector.load %arg11[%c0_14, %c0_15] : memref<32x32xbf16, #tpu.memory_space<vmem>>, vector<32x32xbf16>
    %cst_16 = arith.constant dense<0.000000e+00> : vector<128x32xf32>
    %32 = tpu.matmul %30, %31, %cst_16 {dimension_numbers = #tpu.dot_dimension_numbers<[1], [0], [0], [1], [0, 0, 1, 1], [], []>} : vector<128x32xbf16>, vector<32x32xbf16>, vector<128x32xf32> -> vector<128x32xf32>
    %c0_17 = arith.constant 0 : index
    %c0_18 = arith.constant 0 : index
    %33 = vector.load %arg12[%c0_17, %c0_18] : memref<1x32xf32, #tpu.memory_space<vmem>>, vector<1x32xf32>
    %34 = vector.broadcast %33 : vector<1x32xf32> to vector<128x32xf32>
    %35 = arith.addf %32, %34 : vector<128x32xf32>
    %36 = vector.extract_strided_slice %35 {offsets = [0, 0], sizes = [128, 16], strides = [1, 1]} : vector<128x32xf32> to vector<128x16xf32>
    %37 = arith.negf %36 : vector<128x16xf32>
    %38 = math.exp %37 : vector<128x16xf32>
    %cst_19 = arith.constant 1.000000e+00 : f32
    %39 = vector.broadcast %cst_19 : f32 to vector<128x16xf32>
    %40 = arith.addf %39, %38 : vector<128x16xf32>
    %41 = arith.divf %39, %40 : vector<128x16xf32>
    %42 = arith.mulf %36, %41 : vector<128x16xf32>
    %43 = vector.extract_strided_slice %35 {offsets = [0, 16], sizes = [128, 16], strides = [1, 1]} : vector<128x32xf32> to vector<128x16xf32>
    %44 = tpu.concatenate %43, %43, %43 in 0 : vector<128x16xf32>, vector<128x16xf32>, vector<128x16xf32> -> vector<384x16xf32>
    %45 = arith.mulf %44, %5 : vector<384x16xf32>
    %46 = arith.truncf %45 : vector<384x16xf32> to vector<384x16xbf16>
    %c0_20 = arith.constant 0 : index
    %c0_21 = arith.constant 0 : index
    %47 = vector.load %arg13[%c0_20, %c0_21] : memref<16x2xbf16, #tpu.memory_space<vmem>>, vector<16x2xbf16>
    %cst_22 = arith.constant dense<0.000000e+00> : vector<384x2xf32>
    %48 = tpu.matmul %46, %47, %cst_22 {dimension_numbers = #tpu.dot_dimension_numbers<[1], [0], [0], [1], [0, 0, 1, 1], [], []>} : vector<384x16xbf16>, vector<16x2xbf16>, vector<384x2xf32> -> vector<384x2xf32>
    %49 = vector.extract_strided_slice %48 {offsets = [0, 0], sizes = [384, 1], strides = [1, 1]} : vector<384x2xf32> to vector<384x1xf32>
    %50 = vector.extract_strided_slice %48 {offsets = [0, 1], sizes = [384, 1], strides = [1, 1]} : vector<384x2xf32> to vector<384x1xf32>
    %51 = vector.extract_strided_slice %49 {offsets = [0, 0], sizes = [128, 1], strides = [1, 1]} : vector<384x1xf32> to vector<128x1xf32>
    %52 = vector.extract_strided_slice %49 {offsets = [128, 0], sizes = [128, 1], strides = [1, 1]} : vector<384x1xf32> to vector<128x1xf32>
    %53 = vector.extract_strided_slice %49 {offsets = [256, 0], sizes = [128, 1], strides = [1, 1]} : vector<384x1xf32> to vector<128x1xf32>
    %54 = arith.mulf %51, %51 : vector<128x1xf32>
    %55 = arith.mulf %52, %52 : vector<128x1xf32>
    %56 = arith.addf %54, %55 : vector<128x1xf32>
    %57 = arith.mulf %53, %53 : vector<128x1xf32>
    %58 = arith.addf %56, %57 : vector<128x1xf32>
    %59 = math.sqrt %58 : vector<128x1xf32>
    %60 = arith.truncf %42 : vector<128x16xf32> to vector<128x16xbf16>
    %c0_23 = arith.constant 0 : index
    %c0_24 = arith.constant 0 : index
    %61 = vector.load %arg14[%c0_23, %c0_24] : memref<16x16xbf16, #tpu.memory_space<vmem>>, vector<16x16xbf16>
    %cst_25 = arith.constant dense<0.000000e+00> : vector<128x16xf32>
    %62 = tpu.matmul %60, %61, %cst_25 {dimension_numbers = #tpu.dot_dimension_numbers<[1], [0], [0], [1], [0, 0, 1, 1], [], []>} : vector<128x16xbf16>, vector<16x16xbf16>, vector<128x16xf32> -> vector<128x16xf32>
    %c0_26 = arith.constant 0 : index
    %c0_27 = arith.constant 0 : index
    %63 = vector.load %arg15[%c0_26, %c0_27] : memref<1x16xf32, #tpu.memory_space<vmem>>, vector<1x16xf32>
    %64 = vector.broadcast %59 : vector<128x1xf32> to vector<128x16xf32>
    %65 = vector.broadcast %63 : vector<1x16xf32> to vector<128x16xf32>
    %66 = arith.mulf %64, %65 : vector<128x16xf32>
    %67 = arith.addf %62, %66 : vector<128x16xf32>
    %c0_28 = arith.constant 0 : index
    %c0_29 = arith.constant 0 : index
    %68 = vector.load %arg16[%c0_28, %c0_29] : memref<1x16xf32, #tpu.memory_space<vmem>>, vector<1x16xf32>
    %69 = vector.broadcast %68 : vector<1x16xf32> to vector<128x16xf32>
    %70 = arith.addf %67, %69 : vector<128x16xf32>
    %71 = arith.negf %70 : vector<128x16xf32>
    %72 = math.exp %71 : vector<128x16xf32>
    %cst_30 = arith.constant 1.000000e+00 : f32
    %73 = vector.broadcast %cst_30 : f32 to vector<128x16xf32>
    %74 = arith.addf %73, %72 : vector<128x16xf32>
    %75 = arith.divf %73, %74 : vector<128x16xf32>
    %76 = arith.mulf %70, %75 : vector<128x16xf32>
    %77 = arith.truncf %76 : vector<128x16xf32> to vector<128x16xbf16>
    %c0_31 = arith.constant 0 : index
    %c0_32 = arith.constant 0 : index
    %78 = vector.load %arg17[%c0_31, %c0_32] : memref<16x2xbf16, #tpu.memory_space<vmem>>, vector<16x2xbf16>
    %cst_33 = arith.constant dense<0.000000e+00> : vector<128x2xf32>
    %79 = tpu.matmul %77, %78, %cst_33 {dimension_numbers = #tpu.dot_dimension_numbers<[1], [0], [0], [1], [0, 0, 1, 1], [], []>} : vector<128x16xbf16>, vector<16x2xbf16>, vector<128x2xf32> -> vector<128x2xf32>
    %c0_34 = arith.constant 0 : index
    %c0_35 = arith.constant 0 : index
    %80 = vector.load %arg18[%c0_34, %c0_35] : memref<1x2xf32, #tpu.memory_space<vmem>>, vector<1x2xf32>
    %81 = vector.broadcast %80 : vector<1x2xf32> to vector<128x2xf32>
    %82 = arith.addf %79, %81 : vector<128x2xf32>
    %83 = vector.extract_strided_slice %82 {offsets = [0, 0], sizes = [128, 1], strides = [1, 1]} : vector<128x2xf32> to vector<128x1xf32>
    %84 = vector.extract_strided_slice %82 {offsets = [0, 1], sizes = [128, 1], strides = [1, 1]} : vector<128x2xf32> to vector<128x1xf32>
    %85 = vector.extract_strided_slice %50 {offsets = [0, 0], sizes = [128, 1], strides = [1, 1]} : vector<384x1xf32> to vector<128x1xf32>
    %86 = arith.mulf %84, %85 : vector<128x1xf32>
    %87 = vector.extract_strided_slice %50 {offsets = [128, 0], sizes = [128, 1], strides = [1, 1]} : vector<384x1xf32> to vector<128x1xf32>
    %88 = arith.mulf %84, %87 : vector<128x1xf32>
    %89 = vector.extract_strided_slice %50 {offsets = [256, 0], sizes = [128, 1], strides = [1, 1]} : vector<384x1xf32> to vector<128x1xf32>
    %90 = arith.mulf %84, %89 : vector<128x1xf32>
    %c0_36 = arith.constant 0 : index
    %c0_37 = arith.constant 0 : index
    %91 = vector.load %arg2[%c0_36, %c0_37] : memref<128x3xf32, #tpu.memory_space<vmem>>, vector<128x3xf32>
    %92 = vector.extract_strided_slice %91 {offsets = [0, 0], sizes = [128, 1], strides = [1, 1]} : vector<128x3xf32> to vector<128x1xf32>
    %93 = vector.extract_strided_slice %91 {offsets = [0, 1], sizes = [128, 1], strides = [1, 1]} : vector<128x3xf32> to vector<128x1xf32>
    %94 = vector.extract_strided_slice %91 {offsets = [0, 2], sizes = [128, 1], strides = [1, 1]} : vector<128x3xf32> to vector<128x1xf32>
    %c0_38 = arith.constant 0 : index
    %c0_39 = arith.constant 0 : index
    %95 = vector.load %arg6[%c0_38, %c0_39] : memref<8x128xf32, #tpu.memory_space<vmem>>, vector<8x128xf32>
    %96 = vector.extract_strided_slice %95 {offsets = [0, 0], sizes = [1, 128], strides = [1, 1]} : vector<8x128xf32> to vector<1x128xf32>
    %97 = vector.extract_strided_slice %95 {offsets = [1, 0], sizes = [1, 128], strides = [1, 1]} : vector<8x128xf32> to vector<1x128xf32>
    %98 = vector.extract_strided_slice %95 {offsets = [2, 0], sizes = [1, 128], strides = [1, 1]} : vector<8x128xf32> to vector<1x128xf32>
    %99 = vector.extract_strided_slice %95 {offsets = [3, 0], sizes = [1, 128], strides = [1, 1]} : vector<8x128xf32> to vector<1x128xf32>
    %100 = vector.extract_strided_slice %95 {offsets = [4, 0], sizes = [1, 128], strides = [1, 1]} : vector<8x128xf32> to vector<1x128xf32>
    %101 = vector.extract_strided_slice %95 {offsets = [5, 0], sizes = [1, 128], strides = [1, 1]} : vector<8x128xf32> to vector<1x128xf32>
    %102 = vector.extract_strided_slice %95 {offsets = [6, 0], sizes = [1, 128], strides = [1, 1]} : vector<8x128xf32> to vector<1x128xf32>
    %103 = vector.broadcast %86 : vector<128x1xf32> to vector<128x128xf32>
    %104 = vector.broadcast %96 : vector<1x128xf32> to vector<128x128xf32>
    %105 = arith.mulf %103, %104 : vector<128x128xf32>
    %106 = vector.broadcast %88 : vector<128x1xf32> to vector<128x128xf32>
    %107 = vector.broadcast %97 : vector<1x128xf32> to vector<128x128xf32>
    %108 = arith.mulf %106, %107 : vector<128x128xf32>
    %109 = arith.addf %105, %108 : vector<128x128xf32>
    %110 = vector.broadcast %90 : vector<128x1xf32> to vector<128x128xf32>
    %111 = vector.broadcast %98 : vector<1x128xf32> to vector<128x128xf32>
    %112 = arith.mulf %110, %111 : vector<128x128xf32>
    %113 = arith.addf %109, %112 : vector<128x128xf32>
    %114 = vector.broadcast %86 : vector<128x1xf32> to vector<128x128xf32>
    %115 = vector.broadcast %99 : vector<1x128xf32> to vector<128x128xf32>
    %116 = arith.mulf %114, %115 : vector<128x128xf32>
    %117 = vector.broadcast %88 : vector<128x1xf32> to vector<128x128xf32>
    %118 = vector.broadcast %100 : vector<1x128xf32> to vector<128x128xf32>
    %119 = arith.mulf %117, %118 : vector<128x128xf32>
    %120 = arith.addf %116, %119 : vector<128x128xf32>
    %121 = vector.broadcast %90 : vector<128x1xf32> to vector<128x128xf32>
    %122 = vector.broadcast %101 : vector<1x128xf32> to vector<128x128xf32>
    %123 = arith.mulf %121, %122 : vector<128x128xf32>
    %124 = arith.addf %120, %123 : vector<128x128xf32>
    %125 = vector.broadcast %92 : vector<128x1xf32> to vector<128x128xf32>
    %126 = vector.broadcast %96 : vector<1x128xf32> to vector<128x128xf32>
    %127 = arith.mulf %125, %126 : vector<128x128xf32>
    %128 = vector.broadcast %93 : vector<128x1xf32> to vector<128x128xf32>
    %129 = vector.broadcast %97 : vector<1x128xf32> to vector<128x128xf32>
    %130 = arith.mulf %128, %129 : vector<128x128xf32>
    %131 = arith.addf %127, %130 : vector<128x128xf32>
    %132 = vector.broadcast %94 : vector<128x1xf32> to vector<128x128xf32>
    %133 = vector.broadcast %98 : vector<1x128xf32> to vector<128x128xf32>
    %134 = arith.mulf %132, %133 : vector<128x128xf32>
    %135 = arith.addf %131, %134 : vector<128x128xf32>
    %136 = vector.broadcast %92 : vector<128x1xf32> to vector<128x128xf32>
    %137 = vector.broadcast %99 : vector<1x128xf32> to vector<128x128xf32>
    %138 = arith.mulf %136, %137 : vector<128x128xf32>
    %139 = vector.broadcast %93 : vector<128x1xf32> to vector<128x128xf32>
    %140 = vector.broadcast %100 : vector<1x128xf32> to vector<128x128xf32>
    %141 = arith.mulf %139, %140 : vector<128x128xf32>
    %142 = arith.addf %138, %141 : vector<128x128xf32>
    %143 = vector.broadcast %94 : vector<128x1xf32> to vector<128x128xf32>
    %144 = vector.broadcast %101 : vector<1x128xf32> to vector<128x128xf32>
    %145 = arith.mulf %143, %144 : vector<128x128xf32>
    %146 = arith.addf %142, %145 : vector<128x128xf32>
    %147 = arith.mulf %113, %146 : vector<128x128xf32>
    %148 = arith.mulf %124, %135 : vector<128x128xf32>
    %149 = arith.addf %147, %148 : vector<128x128xf32>
    %150 = vector.broadcast %83 : vector<128x1xf32> to vector<128x128xf32>
    %151 = vector.broadcast %102 : vector<1x128xf32> to vector<128x128xf32>
    %152 = arith.mulf %150, %151 : vector<128x128xf32>
    %153 = arith.addf %149, %152 : vector<128x128xf32>
    %c0_40 = arith.constant 0 : index
    %c0_41 = arith.constant 0 : index
    %154 = vector.load %arg5[%c0_40, %c0_41] : memref<1x128xi32, #tpu.memory_space<vmem>>, vector<1x128xi32>
    %155 = tpu.iota {dimensions = array<i32: 0>} : vector<8x128xi32>
    %156 = vector.broadcast %154 : vector<1x128xi32> to vector<8x128xi32>
    %157 = arith.cmpi eq, %155, %156 : vector<8x128xi32>
    %158 = arith.extui %157 : vector<8x128xi1> to vector<8x128xi32>
    %159 = arith.sitofp %158 : vector<8x128xi32> to vector<8x128xf32>
    %cst_42 = arith.constant dense<0.000000e+00> : vector<8x128xf32>
    %160 = tpu.matmul %159, %153, %cst_42 {dimension_numbers = #tpu.dot_dimension_numbers<[1], [0], [0], [1], [0, 0, 1, 1], [], []>} : vector<8x128xf32>, vector<128x128xf32>, vector<8x128xf32> -> vector<8x128xf32>
    %c0_i32 = arith.constant 0 : i32
    %161 = arith.cmpi eq, %arg1, %c0_i32 : i32
    %162 = arith.extui %161 : i1 to i32
    %c0_i32_43 = arith.constant 0 : i32
    %163 = arith.cmpi ne, %162, %c0_i32_43 : i32
    scf.if %163 {
      %cst_50 = arith.constant 0.000000e+00 : f32
      %168 = vector.broadcast %cst_50 : f32 to vector<1x8x128xf32>
      %c0_51 = arith.constant 0 : index
      %c0_52 = arith.constant 0 : index
      %c0_53 = arith.constant 0 : index
      %169 = vector.load %arg19[%c0_51, %c0_52, %c0_53] : memref<1x8x128xf32, #tpu.memory_space<vmem>>, vector<1x8x128xf32>
      tpu.vector_store %arg19[%c0_51, %c0_52, %c0_53], %168 {strides = array<i32>} : memref<1x8x128xf32, #tpu.memory_space<vmem>>, vector<1x8x128xf32>,
    } else {
    }
    %c0_44 = arith.constant 0 : index
    %c0_45 = arith.constant 0 : index
    %c0_46 = arith.constant 0 : index
    %164 = vector.load %arg19[%c0_44, %c0_45, %c0_46] : memref<1x8x128xf32, #tpu.memory_space<vmem>>, vector<1x8x128xf32>
    %165 = vector.shape_cast %160 : vector<8x128xf32> to vector<1x8x128xf32>
    %166 = arith.addf %164, %165 : vector<1x8x128xf32>
    %c0_47 = arith.constant 0 : index
    %c0_48 = arith.constant 0 : index
    %c0_49 = arith.constant 0 : index
    %167 = vector.load %arg19[%c0_47, %c0_48, %c0_49] : memref<1x8x128xf32, #tpu.memory_space<vmem>>, vector<1x8x128xf32>
    tpu.vector_store %arg19[%c0_47, %c0_48, %c0_49], %166 {strides = array<i32>} : memref<1x8x128xf32, #tpu.memory_space<vmem>>, vector<1x8x128xf32>,
    return
  }
  func.func @transform_0(%arg0: i32, %arg1: i32) -> (i32, i32) {
    %c1_i32 = arith.constant 1 : i32
    %0 = arith.muli %arg0, %c1_i32 : i32
    %1 = arith.addi %0, %arg1 : i32
    %c0_i32 = arith.constant 0 : i32
    %c0_i32_0 = arith.constant 0 : i32
    return %1, %c0_i32 : i32, i32
  }
  func.func @transform_1(%arg0: i32, %arg1: i32) -> (i32, i32) {
    %c1_i32 = arith.constant 1 : i32
    %0 = arith.muli %arg0, %c1_i32 : i32
    %1 = arith.addi %0, %arg1 : i32
    %c0_i32 = arith.constant 0 : i32
    %c0_i32_0 = arith.constant 0 : i32
    return %1, %c0_i32 : i32, i32
  }
  func.func @transform_2(%arg0: i32, %arg1: i32) -> (i32, i32) {
    %c1_i32 = arith.constant 1 : i32
    %0 = arith.muli %arg0, %c1_i32 : i32
    %1 = arith.addi %0, %arg1 : i32
    %c0_i32 = arith.constant 0 : i32
    %c0_i32_0 = arith.constant 0 : i32
    return %1, %c0_i32 : i32, i32
  }
  func.func @transform_3(%arg0: i32, %arg1: i32) -> (i32, i32) {
    %c1_i32 = arith.constant 1 : i32
    %0 = arith.muli %arg0, %c1_i32 : i32
    %1 = arith.addi %0, %arg1 : i32
    %c0_i32 = arith.constant 0 : i32
    %c0_i32_0 = arith.constant 0 : i32
    return %c0_i32, %1 : i32, i32
  }
  func.func @transform_4(%arg0: i32, %arg1: i32) -> (i32, i32) {
    %c0_i32 = arith.constant 0 : i32
    %c0_i32_0 = arith.constant 0 : i32
    %c0_i32_1 = arith.constant 0 : i32
    return %c0_i32, %c0_i32_0 : i32, i32
  }
  func.func @transform_5(%arg0: i32, %arg1: i32) -> (i32, i32) {
    %c0_i32 = arith.constant 0 : i32
    %c0_i32_0 = arith.constant 0 : i32
    %c0_i32_1 = arith.constant 0 : i32
    return %c0_i32, %c0_i32_0 : i32, i32
  }
  func.func @transform_6(%arg0: i32, %arg1: i32) -> (i32, i32) {
    %c0_i32 = arith.constant 0 : i32
    %c0_i32_0 = arith.constant 0 : i32
    %c0_i32_1 = arith.constant 0 : i32
    return %c0_i32, %c0_i32_0 : i32, i32
  }
  func.func @transform_7(%arg0: i32, %arg1: i32) -> (i32, i32) {
    %c0_i32 = arith.constant 0 : i32
    %c0_i32_0 = arith.constant 0 : i32
    %c0_i32_1 = arith.constant 0 : i32
    return %c0_i32, %c0_i32_0 : i32, i32
  }
  func.func @transform_8(%arg0: i32, %arg1: i32) -> (i32, i32) {
    %c0_i32 = arith.constant 0 : i32
    %c0_i32_0 = arith.constant 0 : i32
    %c0_i32_1 = arith.constant 0 : i32
    return %c0_i32, %c0_i32_0 : i32, i32
  }
  func.func @transform_9(%arg0: i32, %arg1: i32) -> (i32, i32) {
    %c0_i32 = arith.constant 0 : i32
    %c0_i32_0 = arith.constant 0 : i32
    %c0_i32_1 = arith.constant 0 : i32
    return %c0_i32, %c0_i32_0 : i32, i32
  }
  func.func @transform_10(%arg0: i32, %arg1: i32) -> (i32, i32) {
    %c0_i32 = arith.constant 0 : i32
    %c0_i32_0 = arith.constant 0 : i32
    %c0_i32_1 = arith.constant 0 : i32
    return %c0_i32, %c0_i32_0 : i32, i32
  }
  func.func @transform_11(%arg0: i32, %arg1: i32) -> (i32, i32) {
    %c0_i32 = arith.constant 0 : i32
    %c0_i32_0 = arith.constant 0 : i32
    %c0_i32_1 = arith.constant 0 : i32
    return %c0_i32, %c0_i32_0 : i32, i32
  }
  func.func @transform_12(%arg0: i32, %arg1: i32) -> (i32, i32) {
    %c0_i32 = arith.constant 0 : i32
    %c0_i32_0 = arith.constant 0 : i32
    %c0_i32_1 = arith.constant 0 : i32
    return %c0_i32, %c0_i32_0 : i32, i32
  }
  func.func @transform_13(%arg0: i32, %arg1: i32) -> (i32, i32) {
    %c0_i32 = arith.constant 0 : i32
    %c0_i32_0 = arith.constant 0 : i32
    %c0_i32_1 = arith.constant 0 : i32
    return %c0_i32, %c0_i32_0 : i32, i32
  }
  func.func @transform_14(%arg0: i32, %arg1: i32) -> (i32, i32) {
    %c0_i32 = arith.constant 0 : i32
    %c0_i32_0 = arith.constant 0 : i32
    %c0_i32_1 = arith.constant 0 : i32
    return %c0_i32, %c0_i32_0 : i32, i32
  }
  func.func @transform_15(%arg0: i32, %arg1: i32) -> (i32, i32) {
    %c0_i32 = arith.constant 0 : i32
    %c0_i32_0 = arith.constant 0 : i32
    %c0_i32_1 = arith.constant 0 : i32
    return %c0_i32, %c0_i32_0 : i32, i32
  }
  func.func @transform_16(%arg0: i32, %arg1: i32) -> (i32, i32) {
    %c0_i32 = arith.constant 0 : i32
    %c0_i32_0 = arith.constant 0 : i32
    %c0_i32_1 = arith.constant 0 : i32
    return %c0_i32, %c0_i32_0 : i32, i32
  }
  func.func @transform_17(%arg0: i32, %arg1: i32) -> (i32, i32, i32) {
    %c0_i32 = arith.constant 0 : i32
    %c0_i32_0 = arith.constant 0 : i32
    %c0_i32_1 = arith.constant 0 : i32
    return %arg0, %c0_i32, %c0_i32_0 : i32, i32, i32
  }
}

</mosaic_0001>

<llo_original>
// kernel: tpu_custom_call.1
$region0: #{tpu_custom_call.1}
  #allocation0 [shape = 'u32[]', space=smem, size = 0x4, offset = 0x4, fixed_abs, tag = 'smem constant byte address 0x4 - core index']
  #allocation1 [shape = 'u32[72,128]{1,0:T(1,128)}', space=vmem, size = 0x9000, scoped, tag = 'internal scratch']
  %s0 = inlined_call_operand.vmem [shape: f32[128,3], index: 0, kind: input, shape index: {}]
  %s1 = inlined_call_operand.vmem [shape: bf16[128,32], index: 1, kind: input, shape index: {}]
  %s2 = inlined_call_operand.vmem [shape: bf16[384,32], index: 2, kind: input, shape index: {}]
  %s3 = inlined_call_operand.vmem [shape: s32[1,128], index: 3, kind: input, shape index: {}]
  %s4 = inlined_call_operand.vmem [shape: f32[8,128], index: 4, kind: input, shape index: {}]
  %s5 = inlined_call_operand.vmem [shape: bf16[32,32], index: 5, kind: input, shape index: {}]
  %s6 = inlined_call_operand.vmem [shape: bf16[32,32], index: 6, kind: input, shape index: {}]
  %s7 = inlined_call_operand.vmem [shape: bf16[16,32], index: 7, kind: input, shape index: {}]
  %s8 = inlined_call_operand.vmem [shape: f32[1,32], index: 8, kind: input, shape index: {}]
  %s9 = inlined_call_operand.vmem [shape: bf16[32,32], index: 9, kind: input, shape index: {}]
  %s10 = inlined_call_operand.vmem [shape: f32[1,32], index: 10, kind: input, shape index: {}]
  %s11 = inlined_call_operand.vmem [shape: bf16[16,2], index: 11, kind: input, shape index: {}]
  %s12 = inlined_call_operand.vmem [shape: bf16[16,16], index: 12, kind: input, shape index: {}]
  %s13 = inlined_call_operand.vmem [shape: f32[1,16], index: 13, kind: input, shape index: {}]
  %s14 = inlined_call_operand.vmem [shape: f32[1,16], index: 14, kind: input, shape index: {}]
  %s15 = inlined_call_operand.vmem [shape: bf16[16,2], index: 15, kind: input, shape index: {}]
  %s16 = inlined_call_operand.vmem [shape: f32[1,2], index: 16, kind: input, shape index: {}]
  %s17 = inlined_call_operand.hbm [shape: f32[1,8,128], index: 17, kind: output, shape index: {}]
  %s18 = sld [smem:[#allocation0]]
  $region82: #{tpu_custom_call.1} parent=0
    _
  %s20 = ssub.s32 1, %s18
  %s21 = scalar_select 0, %s20, %s18
  $region1: #{tpu_custom_call.1} parent=0
    #allocation2 [shape = 'u8[4096]{0}', space=vmem, size = 0x1000, scoped, tag = 'output window, operand 0, single buffered']
    #allocation3 [shape = 's32[1]{0}', space=sflag, size = 0x4, scoped, tag = 'scoped memory for tpu_custom_call.1']
    %22 = vsyncpa [#allocation3], 0
    // Predicated region
    $region2: #{tpu_custom_call.1} parent=1 // pred_check
      _
    $region3: #{tpu_custom_call.1} parent=1 // pred_check_branch
      %24 = sbr.rel (0) target = $region5
    $region4: #{tpu_custom_call.1} parent=1 // pred_region
      %s25 = sadd.s32 0, 0
      %s26 = smul.u32 16, %s25
      %p27 = scmp.lt.s32.totalorder %s26, 15
      %s28 = scalar_select %p27, %s26, 15
      %s29 = smul.addr %s28, 8
      %s30 = scalar_lea.vmem %s0, %s29
      %s31 = sadd.s32 0, 0
      %s32 = smul.u32 16, %s31
    $region5: #{tpu_custom_call.1} parent=1 // pred_fallthru
      _
    // Predicated region
    $region6: #{tpu_custom_call.1} parent=1 // pred_check
      _
    $region7: #{tpu_custom_call.1} parent=1 // pred_check_branch
      %34 = sbr.rel (0) target = $region9
    $region8: #{tpu_custom_call.1} parent=1 // pred_region
      %s35 = sadd.s32 0, 0
      %s36 = smul.u32 16, %s35
      %p37 = scmp.lt.s32.totalorder %s36, 15
      %s38 = scalar_select %p37, %s36, 15
      %s39 = smul.addr %s38, 4
      %s40 = scalar_lea.vmem %s1, %s39
      %s41 = sadd.s32 0, 0
      %s42 = smul.u32 16, %s41
    $region9: #{tpu_custom_call.1} parent=1 // pred_fallthru
      _
    // Predicated region
    $region10: #{tpu_custom_call.1} parent=1 // pred_check
      _
    $region11: #{tpu_custom_call.1} parent=1 // pred_check_branch
      %44 = sbr.rel (0) target = $region13
    $region12: #{tpu_custom_call.1} parent=1 // pred_region
      %s45 = sadd.s32 0, 0
      %s46 = smul.u32 48, %s45
      %p47 = scmp.lt.s32.totalorder %s46, 47
      %s48 = scalar_select %p47, %s46, 47
      %s49 = smul.addr %s48, 4
      %s50 = scalar_lea.vmem %s2, %s49
      %s51 = sadd.s32 0, 0
      %s52 = smul.u32 48, %s51
    $region13: #{tpu_custom_call.1} parent=1 // pred_fallthru
      _
    // Predicated region
    $region14: #{tpu_custom_call.1} parent=1 // pred_check
      _
    $region15: #{tpu_custom_call.1} parent=1 // pred_check_branch
      %54 = sbr.rel (0) target = $region17
    $region16: #{tpu_custom_call.1} parent=1 // pred_region
      %s55 = sadd.s32 0, 0
      %p56 = scmp.lt.s32.totalorder %s55, 0
      %s57 = scalar_select %p56, %s55, 0
      %s58 = scalar_lea.vmem %s3, %s57
      %s59 = sadd.s32 0, 0
    $region17: #{tpu_custom_call.1} parent=1 // pred_fallthru
      _
    // Predicated region
    $region18: #{tpu_custom_call.1} parent=1 // pred_check
      _
    $region19: #{tpu_custom_call.1} parent=1 // pred_check_branch
      %61 = sbr.rel (0) target = $region21
    $region20: #{tpu_custom_call.1} parent=1 // pred_region
      _
    $region21: #{tpu_custom_call.1} parent=1 // pred_fallthru
      _
    // Predicated region
    $region22: #{tpu_custom_call.1} parent=1 // pred_check
      _
    $region23: #{tpu_custom_call.1} parent=1 // pred_check_branch
      %63 = sbr.rel (0) target = $region25
    $region24: #{tpu_custom_call.1} parent=1 // pred_region
      _
    $region25: #{tpu_custom_call.1} parent=1 // pred_fallthru
      _
    // Predicated region
    $region26: #{tpu_custom_call.1} parent=1 // pred_check
      _
    $region27: #{tpu_custom_call.1} parent=1 // pred_check_branch
      %65 = sbr.rel (0) target = $region29
    $region28: #{tpu_custom_call.1} parent=1 // pred_region
      _
    $region29: #{tpu_custom_call.1} parent=1 // pred_fallthru
      _
    // Predicated region
    $region30: #{tpu_custom_call.1} parent=1 // pred_check
      _
    $region31: #{tpu_custom_call.1} parent=1 // pred_check_branch
      %67 = sbr.rel (0) target = $region33
    $region32: #{tpu_custom_call.1} parent=1 // pred_region
      _
    $region33: #{tpu_custom_call.1} parent=1 // pred_fallthru
      _
    // Predicated region
    $region34: #{tpu_custom_call.1} parent=1 // pred_check
      _
    $region35: #{tpu_custom_call.1} parent=1 // pred_check_branch
      %69 = sbr.rel (0) target = $region37
    $region36: #{tpu_custom_call.1} parent=1 // pred_region
      _
    $region37: #{tpu_custom_call.1} parent=1 // pred_fallthru
      _
    // Predicated region
    $region38: #{tpu_custom_call.1} parent=1 // pred_check
      _
    $region39: #{tpu_custom_call.1} parent=1 // pred_check_branch
      %71 = sbr.rel (0) target = $region41
    $region40: #{tpu_custom_call.1} parent=1 // pred_region
      _
    $region41: #{tpu_custom_call.1} parent=1 // pred_fallthru
      _
    // Predicated region
    $region42: #{tpu_custom_call.1} parent=1 // pred_check
      _
    $region43: #{tpu_custom_call.1} parent=1 // pred_check_branch
      %73 = sbr.rel (0) target = $region45
    $region44: #{tpu_custom_call.1} parent=1 // pred_region
      _
    $region45: #{tpu_custom_call.1} parent=1 // pred_fallthru
      _
    // Predicated region
    $region46: #{tpu_custom_call.1} parent=1 // pred_check
      _
    $region47: #{tpu_custom_call.1} parent=1 // pred_check_branch
      %75 = sbr.rel (0) target = $region49
    $region48: #{tpu_custom_call.1} parent=1 // pred_region
      _
    $region49: #{tpu_custom_call.1} parent=1 // pred_fallthru
      _
    // Predicated region
    $region50: #{tpu_custom_call.1} parent=1 // pred_check
      _
    $region51: #{tpu_custom_call.1} parent=1 // pred_check_branch
      %77 = sbr.rel (0) target = $region53
    $region52: #{tpu_custom_call.1} parent=1 // pred_region
      _
    $region53: #{tpu_custom_call.1} parent=1 // pred_fallthru
      _
    // Predicated region
    $region54: #{tpu_custom_call.1} parent=1 // pred_check
      _
    $region55: #{tpu_custom_call.1} parent=1 // pred_check_branch
      %79 = sbr.rel (0) target = $region57
    $region56: #{tpu_custom_call.1} parent=1 // pred_region
      _
    $region57: #{tpu_custom_call.1} parent=1 // pred_fallthru
      _
    // Predicated region
    $region58: #{tpu_custom_call.1} parent=1 // pred_check
      _
    $region59: #{tpu_custom_call.1} parent=1 // pred_check_branch
      %81 = sbr.rel (0) target = $region61
    $region60: #{tpu_custom_call.1} parent=1 // pred_region
      _
    $region61: #{tpu_custom_call.1} parent=1 // pred_fallthru
      _
    // Predicated region
    $region62: #{tpu_custom_call.1} parent=1 // pred_check
      _
    $region63: #{tpu_custom_call.1} parent=1 // pred_check_branch
      %83 = sbr.rel (0) target = $region65
    $region64: #{tpu_custom_call.1} parent=1 // pred_region
      _
    $region65: #{tpu_custom_call.1} parent=1 // pred_fallthru
      _
    // Predicated region
    $region66: #{tpu_custom_call.1} parent=1 // pred_check
      _
    $region67: #{tpu_custom_call.1} parent=1 // pred_check_branch
      %85 = sbr.rel (0) target = $region69
    $region68: #{tpu_custom_call.1} parent=1 // pred_region
      _
    $region69: #{tpu_custom_call.1} parent=1 // pred_fallthru
      _
    %s86 = sadd.s32 0, 0
    %s87 = smul.u32 16, %s86
    %p88 = scmp.lt.s32.totalorder %s87, 15
    %s89 = scalar_select %p88, %s87, 15
    %s90 = smul.addr %s89, 8
    %s91 = scalar_lea.vmem %s0, %s90
    %s92 = sadd.s32 0, 0
    %s93 = smul.u32 16, %s92
    %p94 = scmp.lt.s32.totalorder %s93, 15
    %s95 = scalar_select %p94, %s93, 15
    %s96 = smul.addr %s95, 4
    %s97 = scalar_lea.vmem %s1, %s96
    %s98 = sadd.s32 0, 0
    %s99 = smul.u32 48, %s98
    %p100 = scmp.lt.s32.totalorder %s99, 47
    %s101 = scalar_select %p100, %s99, 47
    %s102 = smul.addr %s101, 4
    %s103 = scalar_lea.vmem %s2, %s102
    %s104 = sadd.s32 0, 0
    %p105 = scmp.lt.s32.totalorder %s104, 0
    %s106 = scalar_select %p105, %s104, 0
    %s107 = scalar_lea.vmem %s3, %s106
    %s108 = sadd.s32 0, 0
    %s109 = smul.u32 16, %s108
    %p110 = scmp.lt.s32.totalorder %s109, 15
    %s111 = scalar_select %p110, %s109, 15
    %s112 = smul.addr %s111, 8
    %s113 = scalar_lea.vmem %s0, %s112
    %s114 = sadd.s32 0, 0
    %s115 = smul.u32 16, %s114
    %s116 = sadd.s32 0, 0
    %s117 = smul.u32 16, %s116
    %p118 = scmp.lt.s32.totalorder %s117, 15
    %s119 = scalar_select %p118, %s117, 15
    %s120 = smul.addr %s119, 4
    %s121 = scalar_lea.vmem %s1, %s120
    %s122 = sadd.s32 0, 0
    %s123 = smul.u32 16, %s122
    %s124 = sadd.s32 0, 0
    %s125 = smul.u32 48, %s124
    %p126 = scmp.lt.s32.totalorder %s125, 47
    %s127 = scalar_select %p126, %s125, 47
    %s128 = smul.addr %s127, 4
    %s129 = scalar_lea.vmem %s2, %s128
    %s130 = sadd.s32 0, 0
    %s131 = smul.u32 48, %s130
    %s132 = sadd.s32 0, 0
    %p133 = scmp.lt.s32.totalorder %s132, 0
    %s134 = scalar_select %p133, %s132, 0
    %s135 = scalar_lea.vmem %s3, %s134
    %s136 = sadd.s32 0, 0
    %v138 = vld [vmem:[%s121] sm:$0xf]
    %v139 = vld [vmem:[%s121 + $0x4] sm:$0xf]
    %v140 = vld [vmem:[%s121 + $0x8] sm:$0xf]
    %v141 = vld [vmem:[%s121 + $0xc] sm:$0xf]
    %v142 = vld [vmem:[%s121 + $0x10] sm:$0xf]
    %v143 = vld [vmem:[%s121 + $0x14] sm:$0xf]
    %v144 = vld [vmem:[%s121 + $0x18] sm:$0xf]
    %v145 = vld [vmem:[%s121 + $0x1c] sm:$0xf]
    %v146 = vld [vmem:[%s121 + $0x20] sm:$0xf]
    %v147 = vld [vmem:[%s121 + $0x24] sm:$0xf]
    %v148 = vld [vmem:[%s121 + $0x28] sm:$0xf]
    %v149 = vld [vmem:[%s121 + $0x2c] sm:$0xf]
    %v150 = vld [vmem:[%s121 + $0x30] sm:$0xf]
    %v151 = vld [vmem:[%s121 + $0x34] sm:$0xf]
    %v152 = vld [vmem:[%s121 + $0x38] sm:$0xf]
    %v153 = vld [vmem:[%s121 + $0x3c] sm:$0xf]
    %v154 = vld [vmem:[%s129] sm:$0xf]
    %v155 = vld [vmem:[%s129 + $0x4] sm:$0xf]
    %v156 = vld [vmem:[%s129 + $0x8] sm:$0xf]
    %v157 = vld [vmem:[%s129 + $0xc] sm:$0xf]
    %v158 = vld [vmem:[%s129 + $0x10] sm:$0xf]
    %v159 = vld [vmem:[%s129 + $0x14] sm:$0xf]
    %v160 = vld [vmem:[%s129 + $0x18] sm:$0xf]
    %v161 = vld [vmem:[%s129 + $0x1c] sm:$0xf]
    %v162 = vld [vmem:[%s129 + $0x20] sm:$0xf]
    %v163 = vld [vmem:[%s129 + $0x24] sm:$0xf]
    %v164 = vld [vmem:[%s129 + $0x28] sm:$0xf]
    %v165 = vld [vmem:[%s129 + $0x2c] sm:$0xf]
    %v166 = vld [vmem:[%s129 + $0x30] sm:$0xf]
    %v167 = vld [vmem:[%s129 + $0x34] sm:$0xf]
    %v168 = vld [vmem:[%s129 + $0x38] sm:$0xf]
    %v169 = vld [vmem:[%s129 + $0x3c] sm:$0xf]
    %v170 = vld [vmem:[%s129 + $0x40] sm:$0xf]
    %v171 = vld [vmem:[%s129 + $0x44] sm:$0xf]
    %v172 = vld [vmem:[%s129 + $0x48] sm:$0xf]
    %v173 = vld [vmem:[%s129 + $0x4c] sm:$0xf]
    %v174 = vld [vmem:[%s129 + $0x50] sm:$0xf]
    %v175 = vld [vmem:[%s129 + $0x54] sm:$0xf]
    %v176 = vld [vmem:[%s129 + $0x58] sm:$0xf]
    %v177 = vld [vmem:[%s129 + $0x5c] sm:$0xf]
    %v178 = vld [vmem:[%s129 + $0x60] sm:$0xf]
    %v179 = vld [vmem:[%s129 + $0x64] sm:$0xf]
    %v180 = vld [vmem:[%s129 + $0x68] sm:$0xf]
    %v181 = vld [vmem:[%s129 + $0x6c] sm:$0xf]
    %v182 = vld [vmem:[%s129 + $0x70] sm:$0xf]
    %v183 = vld [vmem:[%s129 + $0x74] sm:$0xf]
    %v184 = vld [vmem:[%s129 + $0x78] sm:$0xf]
    %v185 = vld [vmem:[%s129 + $0x7c] sm:$0xf]
    %v186 = vld [vmem:[%s129 + $0x80] sm:$0xf]
    %v187 = vld [vmem:[%s129 + $0x84] sm:$0xf]
    %v188 = vld [vmem:[%s129 + $0x88] sm:$0xf]
    %v189 = vld [vmem:[%s129 + $0x8c] sm:$0xf]
    %v190 = vld [vmem:[%s129 + $0x90] sm:$0xf]
    %v191 = vld [vmem:[%s129 + $0x94] sm:$0xf]
    %v192 = vld [vmem:[%s129 + $0x98] sm:$0xf]
    %v193 = vld [vmem:[%s129 + $0x9c] sm:$0xf]
    %v194 = vld [vmem:[%s129 + $0xa0] sm:$0xf]
    %v195 = vld [vmem:[%s129 + $0xa4] sm:$0xf]
    %v196 = vld [vmem:[%s129 + $0xa8] sm:$0xf]
    %v197 = vld [vmem:[%s129 + $0xac] sm:$0xf]
    %v198 = vld [vmem:[%s129 + $0xb0] sm:$0xf]
    %v199 = vld [vmem:[%s129 + $0xb4] sm:$0xf]
    %v200 = vld [vmem:[%s129 + $0xb8] sm:$0xf]
    %v201 = vld [vmem:[%s129 + $0xbc] sm:$0xf]
    %v202 = vld [vmem:[%s5] sm:$0xf]
    %v203 = vld [vmem:[%s5 + $0x4] sm:$0xf]
    %v204 = vld [vmem:[%s5 + $0x8] sm:$0xf]
    %v205 = vld [vmem:[%s5 + $0xc] sm:$0xf]
    %v254 = vunpack.c.l.b16 %v154
    %v255 = vunpack.c.l.b16 %v155
    %v256 = vunpack.c.l.b16 %v156
    %v257 = vunpack.c.l.b16 %v157
    %v258 = vunpack.c.l.b16 %v158
    %v259 = vunpack.c.l.b16 %v159
    %v260 = vunpack.c.l.b16 %v160
    %v261 = vunpack.c.l.b16 %v161
    %v262 = vunpack.c.l.b16 %v162
    %v263 = vunpack.c.l.b16 %v163
    %v264 = vunpack.c.l.b16 %v164
    %v265 = vunpack.c.l.b16 %v165
    %v266 = vunpack.c.l.b16 %v166
    %v267 = vunpack.c.l.b16 %v167
    %v268 = vunpack.c.l.b16 %v168
    %v269 = vunpack.c.l.b16 %v169
    %v270 = vunpack.c.l.b16 %v170
    %v271 = vunpack.c.l.b16 %v171
    %v272 = vunpack.c.l.b16 %v172
    %v273 = vunpack.c.l.b16 %v173
    %v274 = vunpack.c.l.b16 %v174
    %v275 = vunpack.c.l.b16 %v175
    %v276 = vunpack.c.l.b16 %v176
    %v277 = vunpack.c.l.b16 %v177
    %v278 = vunpack.c.l.b16 %v178
    %v279 = vunpack.c.l.b16 %v179
    %v280 = vunpack.c.l.b16 %v180
    %v281 = vunpack.c.l.b16 %v181
    %v282 = vunpack.c.l.b16 %v182
    %v283 = vunpack.c.l.b16 %v183
    %v284 = vunpack.c.l.b16 %v184
    %v285 = vunpack.c.l.b16 %v185
    %v286 = vunpack.c.l.b16 %v186
    %v287 = vunpack.c.l.b16 %v187
    %v288 = vunpack.c.l.b16 %v188
    %v289 = vunpack.c.l.b16 %v189
    %v290 = vunpack.c.l.b16 %v190
    %v291 = vunpack.c.l.b16 %v191
    %v292 = vunpack.c.l.b16 %v192
    %v293 = vunpack.c.l.b16 %v193
    %v294 = vunpack.c.l.b16 %v194
    %v295 = vunpack.c.l.b16 %v195
    %v296 = vunpack.c.l.b16 %v196
    %v297 = vunpack.c.l.b16 %v197
    %v298 = vunpack.c.l.b16 %v198
    %v299 = vunpack.c.l.b16 %v199
    %v300 = vunpack.c.l.b16 %v200
    %v301 = vunpack.c.l.b16 %v201
    %v302 = vpack.c.b16 %v255, %v254
    %v303 = vpack.c.b16 %v257, %v256
    %v304 = vpack.c.b16 %v259, %v258
    %v305 = vpack.c.b16 %v261, %v260
    %v306 = vpack.c.b16 %v263, %v262
    %v307 = vpack.c.b16 %v265, %v264
    %v308 = vpack.c.b16 %v267, %v266
    %v309 = vpack.c.b16 %v269, %v268
    %v310 = vpack.c.b16 %v271, %v270
    %v311 = vpack.c.b16 %v273, %v272
    %v312 = vpack.c.b16 %v275, %v274
    %v313 = vpack.c.b16 %v277, %v276
    %v314 = vpack.c.b16 %v279, %v278
    %v315 = vpack.c.b16 %v281, %v280
    %v316 = vpack.c.b16 %v283, %v282
    %v317 = vpack.c.b16 %v285, %v284
    %v318 = vpack.c.b16 %v287, %v286
    %v319 = vpack.c.b16 %v289, %v288
    %v320 = vpack.c.b16 %v291, %v290
    %v321 = vpack.c.b16 %v293, %v292
    %v322 = vpack.c.b16 %v295, %v294
    %v323 = vpack.c.b16 %v297, %v296
    %v324 = vpack.c.b16 %v299, %v298
    %v325 = vpack.c.b16 %v301, %v300
    %v330 = vunpack.c.l.b16 %v202
    %v331 = vunpack.c.l.b16 %v203
    %v332 = vunpack.c.l.b16 %v204
    %v333 = vunpack.c.l.b16 %v205
    %v334 = vpack.c.b16 %v331, %v330
    %v335 = vpack.c.b16 %v333, %v332
    %vm338 = vcmask 261120
    %v340 = vsel %vm338, %v302, 0
    %v343 = vsel %vm338, %v303, 0
    %v346 = vsel %vm338, %v304, 0
    %v349 = vsel %vm338, %v305, 0
    %v352 = vsel %vm338, %v306, 0
    %v355 = vsel %vm338, %v307, 0
    %v358 = vsel %vm338, %v308, 0
    %v361 = vsel %vm338, %v309, 0
    %v364 = vsel %vm338, %v310, 0
    %v367 = vsel %vm338, %v311, 0
    %v370 = vsel %vm338, %v312, 0
    %v373 = vsel %vm338, %v313, 0
    %v376 = vsel %vm338, %v314, 0
    %v379 = vsel %vm338, %v315, 0
    %v382 = vsel %vm338, %v316, 0
    %v385 = vsel %vm338, %v317, 0
    %v388 = vsel %vm338, %v318, 0
    %v391 = vsel %vm338, %v319, 0
    %v394 = vsel %vm338, %v320, 0
    %v397 = vsel %vm338, %v321, 0
    %v400 = vsel %vm338, %v322, 0
    %v403 = vsel %vm338, %v323, 0
    %v406 = vsel %vm338, %v324, 0
    %v409 = vsel %vm338, %v325, 0
    %411 = vmatpush.bf16.msra.mxu0 0
    %412 = vmatpush.bf16.msra.mxu0 0
    %413 = vmatpush.bf16.msra.mxu0 0
    %414 = vmatpush.bf16.msra.mxu0 0
    %415 = vmatpush.bf16.msra.mxu0 0
    %416 = vmatpush.bf16.msra.mxu0 0
    %417 = vmatpush.bf16.msra.mxu0 %v335
    %418 = vmatpush.bf16.msra.mxu0 %v334
    %419 = vmatmul.bf16.gmra.mxu0 %v340
    %v420 = vpop.f32.mrf.mxu0
    %v421 = vadd.f32 0.0, %v420
    %v422 = vpop.f32.mrf.mxu0
    %v423 = vadd.f32 0.0, %v422
    %424 = vmatmul.bf16.gmra.mxu0 %v343
    %v425 = vpop.f32.mrf.mxu0
    %v426 = vadd.f32 0.0, %v425
    %v427 = vpop.f32.mrf.mxu0
    %v428 = vadd.f32 0.0, %v427
    %429 = vmatmul.bf16.gmra.mxu0 %v346
    %v430 = vpop.f32.mrf.mxu0
    %v431 = vadd.f32 0.0, %v430
    %v432 = vpop.f32.mrf.mxu0
    %v433 = vadd.f32 0.0, %v432
    %434 = vmatmul.bf16.gmra.mxu0 %v349
    %v435 = vpop.f32.mrf.mxu0
    %v436 = vadd.f32 0.0, %v435
    %v437 = vpop.f32.mrf.mxu0
    %v438 = vadd.f32 0.0, %v437
    %439 = vmatmul.bf16.gmra.mxu0 %v352
    %v440 = vpop.f32.mrf.mxu0
    %v441 = vadd.f32 0.0, %v440
    %v442 = vpop.f32.mrf.mxu0
    %v443 = vadd.f32 0.0, %v442
    %444 = vmatmul.bf16.gmra.mxu0 %v355
    %v445 = vpop.f32.mrf.mxu0
    %v446 = vadd.f32 0.0, %v445
    %v447 = vpop.f32.mrf.mxu0
    %v448 = vadd.f32 0.0, %v447
    %449 = vmatmul.bf16.gmra.mxu0 %v358
    %v450 = vpop.f32.mrf.mxu0
    %v451 = vadd.f32 0.0, %v450
    %v452 = vpop.f32.mrf.mxu0
    %v453 = vadd.f32 0.0, %v452
    %454 = vmatmul.bf16.gmra.mxu0 %v361
    %v455 = vpop.f32.mrf.mxu0
    %v456 = vadd.f32 0.0, %v455
    %v457 = vpop.f32.mrf.mxu0
    %v458 = vadd.f32 0.0, %v457
    %459 = vmatmul.bf16.gmra.mxu0 %v364
    %v460 = vpop.f32.mrf.mxu0
    %v461 = vadd.f32 0.0, %v460
    %v462 = vpop.f32.mrf.mxu0
    %v463 = vadd.f32 0.0, %v462
    %464 = vmatmul.bf16.gmra.mxu0 %v367
    %v465 = vpop.f32.mrf.mxu0
    %v466 = vadd.f32 0.0, %v465
    %v467 = vpop.f32.mrf.mxu0
    %v468 = vadd.f32 0.0, %v467
    %469 = vmatmul.bf16.gmra.mxu0 %v370
    %v470 = vpop.f32.mrf.mxu0
    %v471 = vadd.f32 0.0, %v470
    %v472 = vpop.f32.mrf.mxu0
    %v473 = vadd.f32 0.0, %v472
    %474 = vmatmul.bf16.gmra.mxu0 %v373
    %v475 = vpop.f32.mrf.mxu0
    %v476 = vadd.f32 0.0, %v475
    %v477 = vpop.f32.mrf.mxu0
    %v478 = vadd.f32 0.0, %v477
    %479 = vmatmul.bf16.gmra.mxu0 %v376
    %v480 = vpop.f32.mrf.mxu0
    %v481 = vadd.f32 0.0, %v480
    %v482 = vpop.f32.mrf.mxu0
    %v483 = vadd.f32 0.0, %v482
    %484 = vmatmul.bf16.gmra.mxu0 %v379
    %v485 = vpop.f32.mrf.mxu0
    %v486 = vadd.f32 0.0, %v485
    %v487 = vpop.f32.mrf.mxu0
    %v488 = vadd.f32 0.0, %v487
    %489 = vmatmul.bf16.gmra.mxu0 %v382
    %v490 = vpop.f32.mrf.mxu0
    %v491 = vadd.f32 0.0, %v490
    %v492 = vpop.f32.mrf.mxu0
    %v493 = vadd.f32 0.0, %v492
    %494 = vmatmul.bf16.gmra.mxu0 %v385
    %v495 = vpop.f32.mrf.mxu0
    %v496 = vadd.f32 0.0, %v495
    %v497 = vpop.f32.mrf.mxu0
    %v498 = vadd.f32 0.0, %v497
    %499 = vmatmul.bf16.gmra.mxu0 %v388
    %v500 = vpop.f32.mrf.mxu0
    %v501 = vadd.f32 0.0, %v500
    %v502 = vpop.f32.mrf.mxu0
    %v503 = vadd.f32 0.0, %v502
    %504 = vmatmul.bf16.gmra.mxu0 %v391
    %v505 = vpop.f32.mrf.mxu0
    %v506 = vadd.f32 0.0, %v505
    %v507 = vpop.f32.mrf.mxu0
    %v508 = vadd.f32 0.0, %v507
    %509 = vmatmul.bf16.gmra.mxu0 %v394
    %v510 = vpop.f32.mrf.mxu0
    %v511 = vadd.f32 0.0, %v510
    %v512 = vpop.f32.mrf.mxu0
    %v513 = vadd.f32 0.0, %v512
    %514 = vmatmul.bf16.gmra.mxu0 %v397
    %v515 = vpop.f32.mrf.mxu0
    %v516 = vadd.f32 0.0, %v515
    %v517 = vpop.f32.mrf.mxu0
    %v518 = vadd.f32 0.0, %v517
    %519 = vmatmul.bf16.gmra.mxu0 %v400
    %v520 = vpop.f32.mrf.mxu0
    %v521 = vadd.f32 0.0, %v520
    %v522 = vpop.f32.mrf.mxu0
    %v523 = vadd.f32 0.0, %v522
    %524 = vmatmul.bf16.gmra.mxu0 %v403
    %v525 = vpop.f32.mrf.mxu0
    %v526 = vadd.f32 0.0, %v525
    %v527 = vpop.f32.mrf.mxu0
    %v528 = vadd.f32 0.0, %v527
    %529 = vmatmul.bf16.gmra.mxu0 %v406
    %v530 = vpop.f32.mrf.mxu0
    %v531 = vadd.f32 0.0, %v530
    %v532 = vpop.f32.mrf.mxu0
    %v533 = vadd.f32 0.0, %v532
    %534 = vmatmul.bf16.gmra.mxu0 %v409
    %v535 = vpop.f32.mrf.mxu0
    %v536 = vadd.f32 0.0, %v535
    %v537 = vpop.f32.mrf.mxu0
    %v538 = vadd.f32 0.0, %v537
    %539 = vdwg.mxu0
    %v540 = vmul.f32 %v421, %v421
    %v541 = vmul.f32 %v423, %v423
    %v542 = vmul.f32 %v426, %v426
    %v543 = vmul.f32 %v428, %v428
    %v544 = vmul.f32 %v431, %v431
    %v545 = vmul.f32 %v433, %v433
    %v546 = vmul.f32 %v436, %v436
    %v547 = vmul.f32 %v438, %v438
    %v548 = vmul.f32 %v441, %v441
    %v549 = vmul.f32 %v443, %v443
    %v550 = vmul.f32 %v446, %v446
    %v551 = vmul.f32 %v448, %v448
    %v552 = vmul.f32 %v451, %v451
    %v553 = vmul.f32 %v453, %v453
    %v554 = vmul.f32 %v456, %v456
    %v555 = vmul.f32 %v458, %v458
    %v556 = vmul.f32 %v461, %v461
    %v557 = vmul.f32 %v463, %v463
    %v558 = vmul.f32 %v466, %v466
    %v559 = vmul.f32 %v468, %v468
    %v560 = vmul.f32 %v471, %v471
    %v561 = vmul.f32 %v473, %v473
    %v562 = vmul.f32 %v476, %v476
    %v563 = vmul.f32 %v478, %v478
    %v564 = vmul.f32 %v481, %v481
    %v565 = vmul.f32 %v483, %v483
    %v566 = vmul.f32 %v486, %v486
    %v567 = vmul.f32 %v488, %v488
    %v568 = vmul.f32 %v491, %v491
    %v569 = vmul.f32 %v493, %v493
    %v570 = vmul.f32 %v496, %v496
    %v571 = vmul.f32 %v498, %v498
    %v572 = vadd.f32 %v540, %v556
    %v573 = vadd.f32 %v541, %v557
    %v574 = vadd.f32 %v542, %v558
    %v575 = vadd.f32 %v543, %v559
    %v576 = vadd.f32 %v544, %v560
    %v577 = vadd.f32 %v545, %v561
    %v578 = vadd.f32 %v546, %v562
    %v579 = vadd.f32 %v547, %v563
    %v580 = vadd.f32 %v548, %v564
    %v581 = vadd.f32 %v549, %v565
    %v582 = vadd.f32 %v550, %v566
    %v583 = vadd.f32 %v551, %v567
    %v584 = vadd.f32 %v552, %v568
    %v585 = vadd.f32 %v553, %v569
    %v586 = vadd.f32 %v554, %v570
    %v587 = vadd.f32 %v555, %v571
    %v588 = vmul.f32 %v501, %v501
    %v589 = vmul.f32 %v503, %v503
    %v590 = vmul.f32 %v506, %v506
    %v591 = vmul.f32 %v508, %v508
    %v592 = vmul.f32 %v511, %v511
    %v593 = vmul.f32 %v513, %v513
    %v594 = vmul.f32 %v516, %v516
    %v595 = vmul.f32 %v518, %v518
    %v596 = vmul.f32 %v521, %v521
    %v597 = vmul.f32 %v523, %v523
    %v598 = vmul.f32 %v526, %v526
    %v599 = vmul.f32 %v528, %v528
    %v600 = vmul.f32 %v531, %v531
    %v601 = vmul.f32 %v533, %v533
    %v602 = vmul.f32 %v536, %v536
    %v603 = vmul.f32 %v538, %v538
    %v604 = vadd.f32 %v572, %v588
    %v605 = vadd.f32 %v573, %v589
    %v606 = vadd.f32 %v574, %v590
    %v607 = vadd.f32 %v575, %v591
    %v608 = vadd.f32 %v576, %v592
    %v609 = vadd.f32 %v577, %v593
    %v610 = vadd.f32 %v578, %v594
    %v611 = vadd.f32 %v579, %v595
    %v612 = vadd.f32 %v580, %v596
    %v613 = vadd.f32 %v581, %v597
    %v614 = vadd.f32 %v582, %v598
    %v615 = vadd.f32 %v583, %v599
    %v616 = vadd.f32 %v584, %v600
    %v617 = vadd.f32 %v585, %v601
    %v618 = vadd.f32 %v586, %v602
    %v619 = vadd.f32 %v587, %v603
    %v620 = vrsqrt.pop %v604
    %v621 = vmul.f32 %v620, %v604
    %v622 = vmul.f32 %v621, %v620
    %v623 = vmul.f32 0.5, %v622
    %v624 = vsub.f32 1.5, %v623
    %v625 = vmul.f32 %v620, %v624
    %v626 = vmul.f32 %v604, %v625
    %vm627 = vcmp.eq.f32.partialorder %v604, inf
    %v628 = vsel %vm627, %v604, %v626
    %vm629 = vcmp.eq.f32.partialorder %v604, 0.0
    %v630 = vand.u32 %v604, 2147483648
    %v631 = vsel %vm629, %v630, %v628
    %v632 = vrsqrt.pop %v605
    %v633 = vmul.f32 %v632, %v605
    %v634 = vmul.f32 %v633, %v632
    %v635 = vmul.f32 0.5, %v634
    %v636 = vsub.f32 1.5, %v635
    %v637 = vmul.f32 %v632, %v636
    %v638 = vmul.f32 %v605, %v637
    %vm639 = vcmp.eq.f32.partialorder %v605, inf
    %v640 = vsel %vm639, %v605, %v638
    %vm641 = vcmp.eq.f32.partialorder %v605, 0.0
    %v642 = vand.u32 %v605, 2147483648
    %v643 = vsel %vm641, %v642, %v640
    %v644 = vrsqrt.pop %v606
    %v645 = vmul.f32 %v644, %v606
    %v646 = vmul.f32 %v645, %v644
    %v647 = vmul.f32 0.5, %v646
    %v648 = vsub.f32 1.5, %v647
    %v649 = vmul.f32 %v644, %v648
    %v650 = vmul.f32 %v606, %v649
    %vm651 = vcmp.eq.f32.partialorder %v606, inf
    %v652 = vsel %vm651, %v606, %v650
    %vm653 = vcmp.eq.f32.partialorder %v606, 0.0
    %v654 = vand.u32 %v606, 2147483648
    %v655 = vsel %vm653, %v654, %v652
    %v656 = vrsqrt.pop %v607
    %v657 = vmul.f32 %v656, %v607
    %v658 = vmul.f32 %v657, %v656
    %v659 = vmul.f32 0.5, %v658
    %v660 = vsub.f32 1.5, %v659
    %v661 = vmul.f32 %v656, %v660
    %v662 = vmul.f32 %v607, %v661
    %vm663 = vcmp.eq.f32.partialorder %v607, inf
    %v664 = vsel %vm663, %v607, %v662
    %vm665 = vcmp.eq.f32.partialorder %v607, 0.0
    %v666 = vand.u32 %v607, 2147483648
    %v667 = vsel %vm665, %v666, %v664
    %v668 = vrsqrt.pop %v608
    %v669 = vmul.f32 %v668, %v608
    %v670 = vmul.f32 %v669, %v668
    %v671 = vmul.f32 0.5, %v670
    %v672 = vsub.f32 1.5, %v671
    %v673 = vmul.f32 %v668, %v672
    %v674 = vmul.f32 %v608, %v673
    %vm675 = vcmp.eq.f32.partialorder %v608, inf
    %v676 = vsel %vm675, %v608, %v674
    %vm677 = vcmp.eq.f32.partialorder %v608, 0.0
    %v678 = vand.u32 %v608, 2147483648
    %v679 = vsel %vm677, %v678, %v676
    %v680 = vrsqrt.pop %v609
    %v681 = vmul.f32 %v680, %v609
    %v682 = vmul.f32 %v681, %v680
    %v683 = vmul.f32 0.5, %v682
    %v684 = vsub.f32 1.5, %v683
    %v685 = vmul.f32 %v680, %v684
    %v686 = vmul.f32 %v609, %v685
    %vm687 = vcmp.eq.f32.partialorder %v609, inf
    %v688 = vsel %vm687, %v609, %v686
    %vm689 = vcmp.eq.f32.partialorder %v609, 0.0
    %v690 = vand.u32 %v609, 2147483648
    %v691 = vsel %vm689, %v690, %v688
    %v692 = vrsqrt.pop %v610
    %v693 = vmul.f32 %v692, %v610
    %v694 = vmul.f32 %v693, %v692
    %v695 = vmul.f32 0.5, %v694
    %v696 = vsub.f32 1.5, %v695
    %v697 = vmul.f32 %v692, %v696
    %v698 = vmul.f32 %v610, %v697
    %vm699 = vcmp.eq.f32.partialorder %v610, inf
    %v700 = vsel %vm699, %v610, %v698
    %vm701 = vcmp.eq.f32.partialorder %v610, 0.0
    %v702 = vand.u32 %v610, 2147483648
    %v703 = vsel %vm701, %v702, %v700
    %v704 = vrsqrt.pop %v611
    %v705 = vmul.f32 %v704, %v611
    %v706 = vmul.f32 %v705, %v704
    %v707 = vmul.f32 0.5, %v706
    %v708 = vsub.f32 1.5, %v707
    %v709 = vmul.f32 %v704, %v708
    %v710 = vmul.f32 %v611, %v709
    %vm711 = vcmp.eq.f32.partialorder %v611, inf
    %v712 = vsel %vm711, %v611, %v710
    %vm713 = vcmp.eq.f32.partialorder %v611, 0.0
    %v714 = vand.u32 %v611, 2147483648
    %v715 = vsel %vm713, %v714, %v712
    %v716 = vrsqrt.pop %v612
    %v717 = vmul.f32 %v716, %v612
    %v718 = vmul.f32 %v717, %v716
    %v719 = vmul.f32 0.5, %v718
    %v720 = vsub.f32 1.5, %v719
    %v721 = vmul.f32 %v716, %v720
    %v722 = vmul.f32 %v612, %v721
    %vm723 = vcmp.eq.f32.partialorder %v612, inf
    %v724 = vsel %vm723, %v612, %v722
    %vm725 = vcmp.eq.f32.partialorder %v612, 0.0
    %v726 = vand.u32 %v612, 2147483648
    %v727 = vsel %vm725, %v726, %v724
    %v728 = vrsqrt.pop %v613
    %v729 = vmul.f32 %v728, %v613
    %v730 = vmul.f32 %v729, %v728
    %v731 = vmul.f32 0.5, %v730
    %v732 = vsub.f32 1.5, %v731
    %v733 = vmul.f32 %v728, %v732
    %v734 = vmul.f32 %v613, %v733
    %vm735 = vcmp.eq.f32.partialorder %v613, inf
    %v736 = vsel %vm735, %v613, %v734
    %vm737 = vcmp.eq.f32.partialorder %v613, 0.0
    %v738 = vand.u32 %v613, 2147483648
    %v739 = vsel %vm737, %v738, %v736
    %v740 = vrsqrt.pop %v614
    %v741 = vmul.f32 %v740, %v614
    %v742 = vmul.f32 %v741, %v740
    %v743 = vmul.f32 0.5, %v742
    %v744 = vsub.f32 1.5, %v743
    %v745 = vmul.f32 %v740, %v744
    %v746 = vmul.f32 %v614, %v745
    %vm747 = vcmp.eq.f32.partialorder %v614, inf
    %v748 = vsel %vm747, %v614, %v746
    %vm749 = vcmp.eq.f32.partialorder %v614, 0.0
    %v750 = vand.u32 %v614, 2147483648
    %v751 = vsel %vm749, %v750, %v748
    %v752 = vrsqrt.pop %v615
    %v753 = vmul.f32 %v752, %v615
    %v754 = vmul.f32 %v753, %v752
    %v755 = vmul.f32 0.5, %v754
    %v756 = vsub.f32 1.5, %v755
    %v757 = vmul.f32 %v752, %v756
    %v758 = vmul.f32 %v615, %v757
    %vm759 = vcmp.eq.f32.partialorder %v615, inf
    %v760 = vsel %vm759, %v615, %v758
    %vm761 = vcmp.eq.f32.partialorder %v615, 0.0
    %v762 = vand.u32 %v615, 2147483648
    %v763 = vsel %vm761, %v762, %v760
    %v764 = vrsqrt.pop %v616
    %v765 = vmul.f32 %v764, %v616
    %v766 = vmul.f32 %v765, %v764
    %v767 = vmul.f32 0.5, %v766
    %v768 = vsub.f32 1.5, %v767
    %v769 = vmul.f32 %v764, %v768
    %v770 = vmul.f32 %v616, %v769
    %vm771 = vcmp.eq.f32.partialorder %v616, inf
    %v772 = vsel %vm771, %v616, %v770
    %vm773 = vcmp.eq.f32.partialorder %v616, 0.0
    %v774 = vand.u32 %v616, 2147483648
    %v775 = vsel %vm773, %v774, %v772
    %v776 = vrsqrt.pop %v617
    %v777 = vmul.f32 %v776, %v617
    %v778 = vmul.f32 %v777, %v776
    %v779 = vmul.f32 0.5, %v778
    %v780 = vsub.f32 1.5, %v779
    %v781 = vmul.f32 %v776, %v780
    %v782 = vmul.f32 %v617, %v781
    %vm783 = vcmp.eq.f32.partialorder %v617, inf
    %v784 = vsel %vm783, %v617, %v782
    %vm785 = vcmp.eq.f32.partialorder %v617, 0.0
    %v786 = vand.u32 %v617, 2147483648
    %v787 = vsel %vm785, %v786, %v784
    %v788 = vrsqrt.pop %v618
    %v789 = vmul.f32 %v788, %v618
    %v790 = vmul.f32 %v789, %v788
    %v791 = vmul.f32 0.5, %v790
    %v792 = vsub.f32 1.5, %v791
    %v793 = vmul.f32 %v788, %v792
    %v794 = vmul.f32 %v618, %v793
    %vm795 = vcmp.eq.f32.partialorder %v618, inf
    %v796 = vsel %vm795, %v618, %v794
    %vm797 = vcmp.eq.f32.partialorder %v618, 0.0
    %v798 = vand.u32 %v618, 2147483648
    %v799 = vsel %vm797, %v798, %v796
    %v800 = vrsqrt.pop %v619
    %v801 = vmul.f32 %v800, %v619
    %v802 = vmul.f32 %v801, %v800
    %v803 = vmul.f32 0.5, %v802
    %v804 = vsub.f32 1.5, %v803
    %v805 = vmul.f32 %v800, %v804
    %v806 = vmul.f32 %v619, %v805
    %vm807 = vcmp.eq.f32.partialorder %v619, inf
    %v808 = vsel %vm807, %v619, %v806
    %vm809 = vcmp.eq.f32.partialorder %v619, 0.0
    %v810 = vand.u32 %v619, 2147483648
    %v811 = vsel %vm809, %v810, %v808
    %v812 = vld [vmem:[%s6] sm:$0xf]
    %v813 = vld [vmem:[%s6 + $0x4] sm:$0xf]
    %v814 = vld [vmem:[%s6 + $0x8] sm:$0xf]
    %v815 = vld [vmem:[%s6 + $0xc] sm:$0xf]
    %v816 = vpack.c.bf16 %v643, %v631
    %v817 = vpack.c.bf16 %v667, %v655
    %v818 = vpack.c.bf16 %v691, %v679
    %v819 = vpack.c.bf16 %v715, %v703
    %v820 = vpack.c.bf16 %v739, %v727
    %v821 = vpack.c.bf16 %v763, %v751
    %v822 = vpack.c.bf16 %v787, %v775
    %v823 = vpack.c.bf16 %v811, %v799
    %v824 = vld [vmem:[%s7] sm:$0xf]
    %v825 = vld [vmem:[%s7 + $0x4] sm:$0xf]
    %v828 = vunpack.c.l.b16 %v824
    %v829 = vunpack.c.l.b16 %v825
    %v830 = vpack.c.b16 %v829, %v828
    %vm832 = vcmask 130048
    %v834 = vsel %vm832, %v816, 0
    %v837 = vsel %vm832, %v817, 0
    %v840 = vsel %vm832, %v818, 0
    %v843 = vsel %vm832, %v819, 0
    %v846 = vsel %vm832, %v820, 0
    %v849 = vsel %vm832, %v821, 0
    %v852 = vsel %vm832, %v822, 0
    %v855 = vsel %vm832, %v823, 0
    %857 = vmatpush.bf16.msra.mxu0 0
    %858 = vmatpush.bf16.msra.mxu0 0
    %859 = vmatpush.bf16.msra.mxu0 0
    %860 = vmatpush.bf16.msra.mxu0 0
    %861 = vmatpush.bf16.msra.mxu0 0
    %862 = vmatpush.bf16.msra.mxu0 0
    %863 = vmatpush.bf16.msra.mxu0 0
    %864 = vmatpush.bf16.msra.mxu0 %v830
    %865 = vmatmul.bf16.gmra.mxu0 %v834
    %v866 = vpop.f32.mrf.mxu0
    %v867 = vadd.f32 0.0, %v866
    %v868 = vpop.f32.mrf.mxu0
    %v869 = vadd.f32 0.0, %v868
    %870 = vmatmul.bf16.gmra.mxu0 %v837
    %v871 = vpop.f32.mrf.mxu0
    %v872 = vadd.f32 0.0, %v871
    %v873 = vpop.f32.mrf.mxu0
    %v874 = vadd.f32 0.0, %v873
    %875 = vmatmul.bf16.gmra.mxu0 %v840
    %v876 = vpop.f32.mrf.mxu0
    %v877 = vadd.f32 0.0, %v876
    %v878 = vpop.f32.mrf.mxu0
    %v879 = vadd.f32 0.0, %v878
    %880 = vmatmul.bf16.gmra.mxu0 %v843
    %v881 = vpop.f32.mrf.mxu0
    %v882 = vadd.f32 0.0, %v881
    %v883 = vpop.f32.mrf.mxu0
    %v884 = vadd.f32 0.0, %v883
    %885 = vmatmul.bf16.gmra.mxu0 %v846
    %v886 = vpop.f32.mrf.mxu0
    %v887 = vadd.f32 0.0, %v886
    %v888 = vpop.f32.mrf.mxu0
    %v889 = vadd.f32 0.0, %v888
    %890 = vmatmul.bf16.gmra.mxu0 %v849
    %v891 = vpop.f32.mrf.mxu0
    %v892 = vadd.f32 0.0, %v891
    %v893 = vpop.f32.mrf.mxu0
    %v894 = vadd.f32 0.0, %v893
    %895 = vmatmul.bf16.gmra.mxu0 %v852
    %v896 = vpop.f32.mrf.mxu0
    %v897 = vadd.f32 0.0, %v896
    %v898 = vpop.f32.mrf.mxu0
    %v899 = vadd.f32 0.0, %v898
    %900 = vmatmul.bf16.gmra.mxu0 %v855
    %v901 = vpop.f32.mrf.mxu0
    %v902 = vadd.f32 0.0, %v901
    %v903 = vpop.f32.mrf.mxu0
    %v904 = vadd.f32 0.0, %v903
    %905 = vdwg.mxu0
    %v922 = vunpack.c.l.b16 %v138
    %v923 = vunpack.c.l.b16 %v139
    %v924 = vunpack.c.l.b16 %v140
    %v925 = vunpack.c.l.b16 %v141
    %v926 = vunpack.c.l.b16 %v142
    %v927 = vunpack.c.l.b16 %v143
    %v928 = vunpack.c.l.b16 %v144
    %v929 = vunpack.c.l.b16 %v145
    %v930 = vunpack.c.l.b16 %v146
    %v931 = vunpack.c.l.b16 %v147
    %v932 = vunpack.c.l.b16 %v148
    %v933 = vunpack.c.l.b16 %v149
    %v934 = vunpack.c.l.b16 %v150
    %v935 = vunpack.c.l.b16 %v151
    %v936 = vunpack.c.l.b16 %v152
    %v937 = vunpack.c.l.b16 %v153
    %v938 = vpack.c.b16 %v923, %v922
    %v939 = vpack.c.b16 %v925, %v924
    %v940 = vpack.c.b16 %v927, %v926
    %v941 = vpack.c.b16 %v929, %v928
    %v942 = vpack.c.b16 %v931, %v930
    %v943 = vpack.c.b16 %v933, %v932
    %v944 = vpack.c.b16 %v935, %v934
    %v945 = vpack.c.b16 %v937, %v936
    %v950 = vunpack.c.l.b16 %v812
    %v951 = vunpack.c.l.b16 %v813
    %v952 = vunpack.c.l.b16 %v814
    %v953 = vunpack.c.l.b16 %v815
    %v954 = vpack.c.b16 %v951, %v950
    %v955 = vpack.c.b16 %v953, %v952
    %v959 = vsel %vm338, %v938, 0
    %v962 = vsel %vm338, %v939, 0
    %v965 = vsel %vm338, %v940, 0
    %v968 = vsel %vm338, %v941, 0
    %v971 = vsel %vm338, %v942, 0
    %v974 = vsel %vm338, %v943, 0
    %v977 = vsel %vm338, %v944, 0
    %v980 = vsel %vm338, %v945, 0
    %982 = vmatpush.bf16.msra.mxu0 0
    %983 = vmatpush.bf16.msra.mxu0 0
    %984 = vmatpush.bf16.msra.mxu0 0
    %985 = vmatpush.bf16.msra.mxu0 0
    %986 = vmatpush.bf16.msra.mxu0 0
    %987 = vmatpush.bf16.msra.mxu0 0
    %988 = vmatpush.bf16.msra.mxu0 %v955
    %989 = vmatpush.bf16.msra.mxu0 %v954
    %990 = vmatmul.bf16.gmra.mxu0 %v959
    %v991 = vpop.f32.mrf.mxu0
    %v992 = vadd.f32 %v867, %v991
    %v993 = vpop.f32.mrf.mxu0
    %v994 = vadd.f32 %v869, %v993
    %995 = vmatmul.bf16.gmra.mxu0 %v962
    %v996 = vpop.f32.mrf.mxu0
    %v997 = vadd.f32 %v872, %v996
    %v998 = vpop.f32.mrf.mxu0
    %v999 = vadd.f32 %v874, %v998
    %1000 = vmatmul.bf16.gmra.mxu0 %v965
    %v1001 = vpop.f32.mrf.mxu0
    %v1002 = vadd.f32 %v877, %v1001
    %v1003 = vpop.f32.mrf.mxu0
    %v1004 = vadd.f32 %v879, %v1003
    %1005 = vmatmul.bf16.gmra.mxu0 %v968
    %v1006 = vpop.f32.mrf.mxu0
    %v1007 = vadd.f32 %v882, %v1006
    %v1008 = vpop.f32.mrf.mxu0
    %v1009 = vadd.f32 %v884, %v1008
    %1010 = vmatmul.bf16.gmra.mxu0 %v971
    %v1011 = vpop.f32.mrf.mxu0
    %v1012 = vadd.f32 %v887, %v1011
    %v1013 = vpop.f32.mrf.mxu0
    %v1014 = vadd.f32 %v889, %v1013
    %1015 = vmatmul.bf16.gmra.mxu0 %v974
    %v1016 = vpop.f32.mrf.mxu0
    %v1017 = vadd.f32 %v892, %v1016
    %v1018 = vpop.f32.mrf.mxu0
    %v1019 = vadd.f32 %v894, %v1018
    %1020 = vmatmul.bf16.gmra.mxu0 %v977
    %v1021 = vpop.f32.mrf.mxu0
    %v1022 = vadd.f32 %v897, %v1021
    %v1023 = vpop.f32.mrf.mxu0
    %v1024 = vadd.f32 %v899, %v1023
    %1025 = vmatmul.bf16.gmra.mxu0 %v980
    %v1026 = vpop.f32.mrf.mxu0
    %v1027 = vadd.f32 %v902, %v1026
    %v1028 = vpop.f32.mrf.mxu0
    %v1029 = vadd.f32 %v904, %v1028
    %1030 = vdwg.mxu0
    %v1031 = vld [vmem:[%s8] sm:$0x1]
    %v1033 = vperm.slane %v1031, 0
    %v1035 = vadd.f32 %v992, %v1033
    %v1036 = vadd.f32 %v994, %v1033
    %v1037 = vadd.f32 %v997, %v1033
    %v1038 = vadd.f32 %v999, %v1033
    %v1039 = vadd.f32 %v1002, %v1033
    %v1040 = vadd.f32 %v1004, %v1033
    %v1041 = vadd.f32 %v1007, %v1033
    %v1042 = vadd.f32 %v1009, %v1033
    %v1043 = vadd.f32 %v1012, %v1033
    %v1044 = vadd.f32 %v1014, %v1033
    %v1045 = vadd.f32 %v1017, %v1033
    %v1046 = vadd.f32 %v1019, %v1033
    %v1047 = vadd.f32 %v1022, %v1033
    %v1048 = vadd.f32 %v1024, %v1033
    %v1049 = vadd.f32 %v1027, %v1033
    %v1050 = vadd.f32 %v1029, %v1033
    %v1051 = vxor.u32 %v1035, 2147483648
    %v1052 = vxor.u32 %v1036, 2147483648
    %v1053 = vxor.u32 %v1037, 2147483648
    %v1054 = vxor.u32 %v1038, 2147483648
    %v1055 = vxor.u32 %v1039, 2147483648
    %v1056 = vxor.u32 %v1040, 2147483648
    %v1057 = vxor.u32 %v1041, 2147483648
    %v1058 = vxor.u32 %v1042, 2147483648
    %v1059 = vxor.u32 %v1043, 2147483648
    %v1060 = vxor.u32 %v1044, 2147483648
    %v1061 = vxor.u32 %v1045, 2147483648
    %v1062 = vxor.u32 %v1046, 2147483648
    %v1063 = vxor.u32 %v1047, 2147483648
    %v1064 = vxor.u32 %v1048, 2147483648
    %v1065 = vxor.u32 %v1049, 2147483648
    %v1066 = vxor.u32 %v1050, 2147483648
    %v1067 = vmul.f32 %v1051, 1.442695
    %v1068 = vpow.pop %v1067
    %v1069 = vmul.f32 %v1052, 1.442695
    %v1070 = vpow.pop %v1069
    %v1071 = vmul.f32 %v1053, 1.442695
    %v1072 = vpow.pop %v1071
    %v1073 = vmul.f32 %v1054, 1.442695
    %v1074 = vpow.pop %v1073
    %v1075 = vmul.f32 %v1055, 1.442695
    %v1076 = vpow.pop %v1075
    %v1077 = vmul.f32 %v1056, 1.442695
    %v1078 = vpow.pop %v1077
    %v1079 = vmul.f32 %v1057, 1.442695
    %v1080 = vpow.pop %v1079
    %v1081 = vmul.f32 %v1058, 1.442695
    %v1082 = vpow.pop %v1081
    %v1083 = vmul.f32 %v1059, 1.442695
    %v1084 = vpow.pop %v1083
    %v1085 = vmul.f32 %v1060, 1.442695
    %v1086 = vpow.pop %v1085
    %v1087 = vmul.f32 %v1061, 1.442695
    %v1088 = vpow.pop %v1087
    %v1089 = vmul.f32 %v1062, 1.442695
    %v1090 = vpow.pop %v1089
    %v1091 = vmul.f32 %v1063, 1.442695
    %v1092 = vpow.pop %v1091
    %v1093 = vmul.f32 %v1064, 1.442695
    %v1094 = vpow.pop %v1093
    %v1095 = vmul.f32 %v1065, 1.442695
    %v1096 = vpow.pop %v1095
    %v1097 = vmul.f32 %v1066, 1.442695
    %v1098 = vpow.pop %v1097
    %v1099 = vadd.f32 %v1068, 1.0
    %v1100 = vadd.f32 %v1070, 1.0
    %v1101 = vadd.f32 %v1072, 1.0
    %v1102 = vadd.f32 %v1074, 1.0
    %v1103 = vadd.f32 %v1076, 1.0
    %v1104 = vadd.f32 %v1078, 1.0
    %v1105 = vadd.f32 %v1080, 1.0
    %v1106 = vadd.f32 %v1082, 1.0
    %v1107 = vadd.f32 %v1084, 1.0
    %v1108 = vadd.f32 %v1086, 1.0
    %v1109 = vadd.f32 %v1088, 1.0
    %v1110 = vadd.f32 %v1090, 1.0
    %v1111 = vadd.f32 %v1092, 1.0
    %v1112 = vadd.f32 %v1094, 1.0
    %v1113 = vadd.f32 %v1096, 1.0
    %v1114 = vadd.f32 %v1098, 1.0
    %v1115 = vrcp.pop %v1099
    %v1116 = vmul.f32 %v1099, %v1115
    %v1117 = vsub.f32 1.0, %v1116
    %v1118 = vmul.f32 %v1115, %v1117
    %v1119 = vadd.f32 %v1115, %v1118
    %vm1120 = vweird.f32 %v1099
    %vm1121 = vweird.f32 %v1115
    %vm1122 = vmor %vm1120, %vm1121
    %v1123 = vsel %vm1122, %v1115, %v1119
    %v1124 = vand.u32 2147483647, %v1099
    %vm1125 = vcmp.eq.f32.partialorder %v1124, 8.507059e+37
    %v1126 = vand.u32 %v1099, 2147483648
    %v1127 = vor.u32 1.1754944e-38, %v1126
    %v1128 = vsel %vm1125, %v1127, %v1123
    %v1129 = vmul.f32 1.0, %v1128
    %v1130 = vrcp.pop %v1100
    %v1131 = vmul.f32 %v1100, %v1130
    %v1132 = vsub.f32 1.0, %v1131
    %v1133 = vmul.f32 %v1130, %v1132
    %v1134 = vadd.f32 %v1130, %v1133
    %vm1135 = vweird.f32 %v1100
    %vm1136 = vweird.f32 %v1130
    %vm1137 = vmor %vm1135, %vm1136
    %v1138 = vsel %vm1137, %v1130, %v1134
    %v1139 = vand.u32 2147483647, %v1100
    %vm1140 = vcmp.eq.f32.partialorder %v1139, 8.507059e+37
    %v1141 = vand.u32 %v1100, 2147483648
    %v1142 = vor.u32 1.1754944e-38, %v1141
    %v1143 = vsel %vm1140, %v1142, %v1138
    %v1144 = vmul.f32 1.0, %v1143
    %v1145 = vrcp.pop %v1101
    %v1146 = vmul.f32 %v1101, %v1145
    %v1147 = vsub.f32 1.0, %v1146
    %v1148 = vmul.f32 %v1145, %v1147
    %v1149 = vadd.f32 %v1145, %v1148
    %vm1150 = vweird.f32 %v1101
    %vm1151 = vweird.f32 %v1145
    %vm1152 = vmor %vm1150, %vm1151
    %v1153 = vsel %vm1152, %v1145, %v1149
    %v1154 = vand.u32 2147483647, %v1101
    %vm1155 = vcmp.eq.f32.partialorder %v1154, 8.507059e+37
    %v1156 = vand.u32 %v1101, 2147483648
    %v1157 = vor.u32 1.1754944e-38, %v1156
    %v1158 = vsel %vm1155, %v1157, %v1153
    %v1159 = vmul.f32 1.0, %v1158
    %v1160 = vrcp.pop %v1102
    %v1161 = vmul.f32 %v1102, %v1160
    %v1162 = vsub.f32 1.0, %v1161
    %v1163 = vmul.f32 %v1160, %v1162
    %v1164 = vadd.f32 %v1160, %v1163
    %vm1165 = vweird.f32 %v1102
    %vm1166 = vweird.f32 %v1160
    %vm1167 = vmor %vm1165, %vm1166
    %v1168 = vsel %vm1167, %v1160, %v1164
    %v1169 = vand.u32 2147483647, %v1102
    %vm1170 = vcmp.eq.f32.partialorder %v1169, 8.507059e+37
    %v1171 = vand.u32 %v1102, 2147483648
    %v1172 = vor.u32 1.1754944e-38, %v1171
    %v1173 = vsel %vm1170, %v1172, %v1168
    %v1174 = vmul.f32 1.0, %v1173
    %v1175 = vrcp.pop %v1103
    %v1176 = vmul.f32 %v1103, %v1175
    %v1177 = vsub.f32 1.0, %v1176
    %v1178 = vmul.f32 %v1175, %v1177
    %v1179 = vadd.f32 %v1175, %v1178
    %vm1180 = vweird.f32 %v1103
    %vm1181 = vweird.f32 %v1175
    %vm1182 = vmor %vm1180, %vm1181
    %v1183 = vsel %vm1182, %v1175, %v1179
    %v1184 = vand.u32 2147483647, %v1103
    %vm1185 = vcmp.eq.f32.partialorder %v1184, 8.507059e+37
    %v1186 = vand.u32 %v1103, 2147483648
    %v1187 = vor.u32 1.1754944e-38, %v1186
    %v1188 = vsel %vm1185, %v1187, %v1183
    %v1189 = vmul.f32 1.0, %v1188
    %v1190 = vrcp.pop %v1104
    %v1191 = vmul.f32 %v1104, %v1190
    %v1192 = vsub.f32 1.0, %v1191
    %v1193 = vmul.f32 %v1190, %v1192
    %v1194 = vadd.f32 %v1190, %v1193
    %vm1195 = vweird.f32 %v1104
    %vm1196 = vweird.f32 %v1190
    %vm1197 = vmor %vm1195, %vm1196
    %v1198 = vsel %vm1197, %v1190, %v1194
    %v1199 = vand.u32 2147483647, %v1104
    %vm1200 = vcmp.eq.f32.partialorder %v1199, 8.507059e+37
    %v1201 = vand.u32 %v1104, 2147483648
    %v1202 = vor.u32 1.1754944e-38, %v1201
    %v1203 = vsel %vm1200, %v1202, %v1198
    %v1204 = vmul.f32 1.0, %v1203
    %v1205 = vrcp.pop %v1105
    %v1206 = vmul.f32 %v1105, %v1205
    %v1207 = vsub.f32 1.0, %v1206
    %v1208 = vmul.f32 %v1205, %v1207
    %v1209 = vadd.f32 %v1205, %v1208
    %vm1210 = vweird.f32 %v1105
    %vm1211 = vweird.f32 %v1205
    %vm1212 = vmor %vm1210, %vm1211
    %v1213 = vsel %vm1212, %v1205, %v1209
    %v1214 = vand.u32 2147483647, %v1105
    %vm1215 = vcmp.eq.f32.partialorder %v1214, 8.507059e+37
    %v1216 = vand.u32 %v1105, 2147483648
    %v1217 = vor.u32 1.1754944e-38, %v1216
    %v1218 = vsel %vm1215, %v1217, %v1213
    %v1219 = vmul.f32 1.0, %v1218
    %v1220 = vrcp.pop %v1106
    %v1221 = vmul.f32 %v1106, %v1220
    %v1222 = vsub.f32 1.0, %v1221
    %v1223 = vmul.f32 %v1220, %v1222
    %v1224 = vadd.f32 %v1220, %v1223
    %vm1225 = vweird.f32 %v1106
    %vm1226 = vweird.f32 %v1220
    %vm1227 = vmor %vm1225, %vm1226
    %v1228 = vsel %vm1227, %v1220, %v1224
    %v1229 = vand.u32 2147483647, %v1106
    %vm1230 = vcmp.eq.f32.partialorder %v1229, 8.507059e+37
    %v1231 = vand.u32 %v1106, 2147483648
    %v1232 = vor.u32 1.1754944e-38, %v1231
    %v1233 = vsel %vm1230, %v1232, %v1228
    %v1234 = vmul.f32 1.0, %v1233
    %v1235 = vrcp.pop %v1107
    %v1236 = vmul.f32 %v1107, %v1235
    %v1237 = vsub.f32 1.0, %v1236
    %v1238 = vmul.f32 %v1235, %v1237
    %v1239 = vadd.f32 %v1235, %v1238
    %vm1240 = vweird.f32 %v1107
    %vm1241 = vweird.f32 %v1235
    %vm1242 = vmor %vm1240, %vm1241
    %v1243 = vsel %vm1242, %v1235, %v1239
    %v1244 = vand.u32 2147483647, %v1107
    %vm1245 = vcmp.eq.f32.partialorder %v1244, 8.507059e+37
    %v1246 = vand.u32 %v1107, 2147483648
    %v1247 = vor.u32 1.1754944e-38, %v1246
    %v1248 = vsel %vm1245, %v1247, %v1243
    %v1249 = vmul.f32 1.0, %v1248
    %v1250 = vrcp.pop %v1108
    %v1251 = vmul.f32 %v1108, %v1250
    %v1252 = vsub.f32 1.0, %v1251
    %v1253 = vmul.f32 %v1250, %v1252
    %v1254 = vadd.f32 %v1250, %v1253
    %vm1255 = vweird.f32 %v1108
    %vm1256 = vweird.f32 %v1250
    %vm1257 = vmor %vm1255, %vm1256
    %v1258 = vsel %vm1257, %v1250, %v1254
    %v1259 = vand.u32 2147483647, %v1108
    %vm1260 = vcmp.eq.f32.partialorder %v1259, 8.507059e+37
    %v1261 = vand.u32 %v1108, 2147483648
    %v1262 = vor.u32 1.1754944e-38, %v1261
    %v1263 = vsel %vm1260, %v1262, %v1258
    %v1264 = vmul.f32 1.0, %v1263
    %v1265 = vrcp.pop %v1109
    %v1266 = vmul.f32 %v1109, %v1265
    %v1267 = vsub.f32 1.0, %v1266
    %v1268 = vmul.f32 %v1265, %v1267
    %v1269 = vadd.f32 %v1265, %v1268
    %vm1270 = vweird.f32 %v1109
    %vm1271 = vweird.f32 %v1265
    %vm1272 = vmor %vm1270, %vm1271
    %v1273 = vsel %vm1272, %v1265, %v1269
    %v1274 = vand.u32 2147483647, %v1109
    %vm1275 = vcmp.eq.f32.partialorder %v1274, 8.507059e+37
    %v1276 = vand.u32 %v1109, 2147483648
    %v1277 = vor.u32 1.1754944e-38, %v1276
    %v1278 = vsel %vm1275, %v1277, %v1273
    %v1279 = vmul.f32 1.0, %v1278
    %v1280 = vrcp.pop %v1110
    %v1281 = vmul.f32 %v1110, %v1280
    %v1282 = vsub.f32 1.0, %v1281
    %v1283 = vmul.f32 %v1280, %v1282
    %v1284 = vadd.f32 %v1280, %v1283
    %vm1285 = vweird.f32 %v1110
    %vm1286 = vweird.f32 %v1280
    %vm1287 = vmor %vm1285, %vm1286
    %v1288 = vsel %vm1287, %v1280, %v1284
    %v1289 = vand.u32 2147483647, %v1110
    %vm1290 = vcmp.eq.f32.partialorder %v1289, 8.507059e+37
    %v1291 = vand.u32 %v1110, 2147483648
    %v1292 = vor.u32 1.1754944e-38, %v1291
    %v1293 = vsel %vm1290, %v1292, %v1288
    %v1294 = vmul.f32 1.0, %v1293
    %v1295 = vrcp.pop %v1111
    %v1296 = vmul.f32 %v1111, %v1295
    %v1297 = vsub.f32 1.0, %v1296
    %v1298 = vmul.f32 %v1295, %v1297
    %v1299 = vadd.f32 %v1295, %v1298
    %vm1300 = vweird.f32 %v1111
    %vm1301 = vweird.f32 %v1295
    %vm1302 = vmor %vm1300, %vm1301
    %v1303 = vsel %vm1302, %v1295, %v1299
    %v1304 = vand.u32 2147483647, %v1111
    %vm1305 = vcmp.eq.f32.partialorder %v1304, 8.507059e+37
    %v1306 = vand.u32 %v1111, 2147483648
    %v1307 = vor.u32 1.1754944e-38, %v1306
    %v1308 = vsel %vm1305, %v1307, %v1303
    %v1309 = vmul.f32 1.0, %v1308
    %v1310 = vrcp.pop %v1112
    %v1311 = vmul.f32 %v1112, %v1310
    %v1312 = vsub.f32 1.0, %v1311
    %v1313 = vmul.f32 %v1310, %v1312
    %v1314 = vadd.f32 %v1310, %v1313
    %vm1315 = vweird.f32 %v1112
    %vm1316 = vweird.f32 %v1310
    %vm1317 = vmor %vm1315, %vm1316
    %v1318 = vsel %vm1317, %v1310, %v1314
    %v1319 = vand.u32 2147483647, %v1112
    %vm1320 = vcmp.eq.f32.partialorder %v1319, 8.507059e+37
    %v1321 = vand.u32 %v1112, 2147483648
    %v1322 = vor.u32 1.1754944e-38, %v1321
    %v1323 = vsel %vm1320, %v1322, %v1318
    %v1324 = vmul.f32 1.0, %v1323
    %v1325 = vrcp.pop %v1113
    %v1326 = vmul.f32 %v1113, %v1325
    %v1327 = vsub.f32 1.0, %v1326
    %v1328 = vmul.f32 %v1325, %v1327
    %v1329 = vadd.f32 %v1325, %v1328
    %vm1330 = vweird.f32 %v1113
    %vm1331 = vweird.f32 %v1325
    %vm1332 = vmor %vm1330, %vm1331
    %v1333 = vsel %vm1332, %v1325, %v1329
    %v1334 = vand.u32 2147483647, %v1113
    %vm1335 = vcmp.eq.f32.partialorder %v1334, 8.507059e+37
    %v1336 = vand.u32 %v1113, 2147483648
    %v1337 = vor.u32 1.1754944e-38, %v1336
    %v1338 = vsel %vm1335, %v1337, %v1333
    %v1339 = vmul.f32 1.0, %v1338
    %v1340 = vrcp.pop %v1114
    %v1341 = vmul.f32 %v1114, %v1340
    %v1342 = vsub.f32 1.0, %v1341
    %v1343 = vmul.f32 %v1340, %v1342
    %v1344 = vadd.f32 %v1340, %v1343
    %vm1345 = vweird.f32 %v1114
    %vm1346 = vweird.f32 %v1340
    %vm1347 = vmor %vm1345, %vm1346
    %v1348 = vsel %vm1347, %v1340, %v1344
    %v1349 = vand.u32 2147483647, %v1114
    %vm1350 = vcmp.eq.f32.partialorder %v1349, 8.507059e+37
    %v1351 = vand.u32 %v1114, 2147483648
    %v1352 = vor.u32 1.1754944e-38, %v1351
    %v1353 = vsel %vm1350, %v1352, %v1348
    %v1354 = vmul.f32 1.0, %v1353
    %v1355 = vmul.f32 %v1035, %v1129
    %v1356 = vmul.f32 %v1036, %v1144
    %v1357 = vmul.f32 %v1037, %v1159
    %v1358 = vmul.f32 %v1038, %v1174
    %v1359 = vmul.f32 %v1039, %v1189
    %v1360 = vmul.f32 %v1040, %v1204
    %v1361 = vmul.f32 %v1041, %v1219
    %v1362 = vmul.f32 %v1042, %v1234
    %v1363 = vmul.f32 %v1043, %v1249
    %v1364 = vmul.f32 %v1044, %v1264
    %v1365 = vmul.f32 %v1045, %v1279
    %v1366 = vmul.f32 %v1046, %v1294
    %v1367 = vmul.f32 %v1047, %v1309
    %v1368 = vmul.f32 %v1048, %v1324
    %v1369 = vmul.f32 %v1049, %v1339
    %v1370 = vmul.f32 %v1050, %v1354
    %v1371 = vpack.c.bf16 %v1356, %v1355
    %v1372 = vpack.c.bf16 %v1358, %v1357
    %v1373 = vpack.c.bf16 %v1360, %v1359
    %v1374 = vpack.c.bf16 %v1362, %v1361
    %v1375 = vpack.c.bf16 %v1364, %v1363
    %v1376 = vpack.c.bf16 %v1366, %v1365
    %v1377 = vpack.c.bf16 %v1368, %v1367
    %v1378 = vpack.c.bf16 %v1370, %v1369
    %v1379 = vld [vmem:[%s9] sm:$0xf]
    %v1380 = vld [vmem:[%s9 + $0x4] sm:$0xf]
    %v1381 = vld [vmem:[%s9 + $0x8] sm:$0xf]
    %v1382 = vld [vmem:[%s9 + $0xc] sm:$0xf]
    %v1383 = vld [vmem:[%s10] sm:$0x1]
    %v1385 = vperm.slane %v1383, 0
    %v1391 = vunpack.c.l.b16 %v1379
    %v1392 = vunpack.c.l.b16 %v1380
    %v1393 = vunpack.c.l.b16 %v1381
    %v1394 = vunpack.c.l.b16 %v1382
    %v1395 = vpack.c.b16 %v1392, %v1391
    %v1396 = vpack.c.b16 %v1394, %v1393
    %v1400 = vsel %vm338, %v1371, 0
    %v1403 = vsel %vm338, %v1372, 0
    %v1406 = vsel %vm338, %v1373, 0
    %v1409 = vsel %vm338, %v1374, 0
    %v1412 = vsel %vm338, %v1375, 0
    %v1415 = vsel %vm338, %v1376, 0
    %v1418 = vsel %vm338, %v1377, 0
    %v1421 = vsel %vm338, %v1378, 0
    %1423 = vmatpush.bf16.msra.mxu0 0
    %1424 = vmatpush.bf16.msra.mxu0 0
    %1425 = vmatpush.bf16.msra.mxu0 0
    %1426 = vmatpush.bf16.msra.mxu0 0
    %1427 = vmatpush.bf16.msra.mxu0 0
    %1428 = vmatpush.bf16.msra.mxu0 0
    %1429 = vmatpush.bf16.msra.mxu0 %v1396
    %1430 = vmatpush.bf16.msra.mxu0 %v1395
    %1431 = vmatmul.bf16.gmra.mxu0 %v1400
    %v1432 = vpop.f32.mrf.mxu0
    %v1433 = vadd.f32 %v1385, %v1432
    %v1434 = vpop.f32.mrf.mxu0
    %v1435 = vadd.f32 %v1385, %v1434
    %1436 = vmatmul.bf16.gmra.mxu0 %v1403
    %v1437 = vpop.f32.mrf.mxu0
    %v1438 = vadd.f32 %v1385, %v1437
    %v1439 = vpop.f32.mrf.mxu0
    %v1440 = vadd.f32 %v1385, %v1439
    %1441 = vmatmul.bf16.gmra.mxu0 %v1406
    %v1442 = vpop.f32.mrf.mxu0
    %v1443 = vadd.f32 %v1385, %v1442
    %v1444 = vpop.f32.mrf.mxu0
    %v1445 = vadd.f32 %v1385, %v1444
    %1446 = vmatmul.bf16.gmra.mxu0 %v1409
    %v1447 = vpop.f32.mrf.mxu0
    %v1448 = vadd.f32 %v1385, %v1447
    %v1449 = vpop.f32.mrf.mxu0
    %v1450 = vadd.f32 %v1385, %v1449
    %1451 = vmatmul.bf16.gmra.mxu0 %v1412
    %v1452 = vpop.f32.mrf.mxu0
    %v1453 = vadd.f32 %v1385, %v1452
    %v1454 = vpop.f32.mrf.mxu0
    %v1455 = vadd.f32 %v1385, %v1454
    %1456 = vmatmul.bf16.gmra.mxu0 %v1415
    %v1457 = vpop.f32.mrf.mxu0
    %v1458 = vadd.f32 %v1385, %v1457
    %v1459 = vpop.f32.mrf.mxu0
    %v1460 = vadd.f32 %v1385, %v1459
    %1461 = vmatmul.bf16.gmra.mxu0 %v1418
    %v1462 = vpop.f32.mrf.mxu0
    %v1463 = vadd.f32 %v1385, %v1462
    %v1464 = vpop.f32.mrf.mxu0
    %v1465 = vadd.f32 %v1385, %v1464
    %1466 = vmatmul.bf16.gmra.mxu0 %v1421
    %v1467 = vpop.f32.mrf.mxu0
    %v1468 = vadd.f32 %v1385, %v1467
    %v1469 = vpop.f32.mrf.mxu0
    %v1470 = vadd.f32 %v1385, %v1469
    %1471 = vdwg.mxu0
    %v1472 = vxor.u32 %v1433, 2147483648
    %v1473 = vxor.u32 %v1435, 2147483648
    %v1474 = vxor.u32 %v1438, 2147483648
    %v1475 = vxor.u32 %v1440, 2147483648
    %v1476 = vxor.u32 %v1443, 2147483648
    %v1477 = vxor.u32 %v1445, 2147483648
    %v1478 = vxor.u32 %v1448, 2147483648
    %v1479 = vxor.u32 %v1450, 2147483648
    %v1480 = vxor.u32 %v1453, 2147483648
    %v1481 = vxor.u32 %v1455, 2147483648
    %v1482 = vxor.u32 %v1458, 2147483648
    %v1483 = vxor.u32 %v1460, 2147483648
    %v1484 = vxor.u32 %v1463, 2147483648
    %v1485 = vxor.u32 %v1465, 2147483648
    %v1486 = vxor.u32 %v1468, 2147483648
    %v1487 = vxor.u32 %v1470, 2147483648
    %v1488 = vmul.f32 %v1472, 1.442695
    %v1489 = vpow.pop %v1488
    %v1490 = vmul.f32 %v1473, 1.442695
    %v1491 = vpow.pop %v1490
    %v1492 = vmul.f32 %v1474, 1.442695
    %v1493 = vpow.pop %v1492
    %v1494 = vmul.f32 %v1475, 1.442695
    %v1495 = vpow.pop %v1494
    %v1496 = vmul.f32 %v1476, 1.442695
    %v1497 = vpow.pop %v1496
    %v1498 = vmul.f32 %v1477, 1.442695
    %v1499 = vpow.pop %v1498
    %v1500 = vmul.f32 %v1478, 1.442695
    %v1501 = vpow.pop %v1500
    %v1502 = vmul.f32 %v1479, 1.442695
    %v1503 = vpow.pop %v1502
    %v1504 = vmul.f32 %v1480, 1.442695
    %v1505 = vpow.pop %v1504
    %v1506 = vmul.f32 %v1481, 1.442695
    %v1507 = vpow.pop %v1506
    %v1508 = vmul.f32 %v1482, 1.442695
    %v1509 = vpow.pop %v1508
    %v1510 = vmul.f32 %v1483, 1.442695
    %v1511 = vpow.pop %v1510
    %v1512 = vmul.f32 %v1484, 1.442695
    %v1513 = vpow.pop %v1512
    %v1514 = vmul.f32 %v1485, 1.442695
    %v1515 = vpow.pop %v1514
    %v1516 = vmul.f32 %v1486, 1.442695
    %v1517 = vpow.pop %v1516
    %v1518 = vmul.f32 %v1487, 1.442695
    %v1519 = vpow.pop %v1518
    %v1520 = vadd.f32 %v1489, 1.0
    %v1521 = vadd.f32 %v1491, 1.0
    %v1522 = vadd.f32 %v1493, 1.0
    %v1523 = vadd.f32 %v1495, 1.0
    %v1524 = vadd.f32 %v1497, 1.0
    %v1525 = vadd.f32 %v1499, 1.0
    %v1526 = vadd.f32 %v1501, 1.0
    %v1527 = vadd.f32 %v1503, 1.0
    %v1528 = vadd.f32 %v1505, 1.0
    %v1529 = vadd.f32 %v1507, 1.0
    %v1530 = vadd.f32 %v1509, 1.0
    %v1531 = vadd.f32 %v1511, 1.0
    %v1532 = vadd.f32 %v1513, 1.0
    %v1533 = vadd.f32 %v1515, 1.0
    %v1534 = vadd.f32 %v1517, 1.0
    %v1535 = vadd.f32 %v1519, 1.0
    %v1536 = vrcp.pop %v1520
    %v1537 = vmul.f32 %v1520, %v1536
    %v1538 = vsub.f32 1.0, %v1537
    %v1539 = vmul.f32 %v1536, %v1538
    %v1540 = vadd.f32 %v1536, %v1539
    %vm1541 = vweird.f32 %v1520
    %vm1542 = vweird.f32 %v1536
    %vm1543 = vmor %vm1541, %vm1542
    %v1544 = vsel %vm1543, %v1536, %v1540
    %v1545 = vand.u32 2147483647, %v1520
    %vm1546 = vcmp.eq.f32.partialorder %v1545, 8.507059e+37
    %v1547 = vand.u32 %v1520, 2147483648
    %v1548 = vor.u32 1.1754944e-38, %v1547
    %v1549 = vsel %vm1546, %v1548, %v1544
    %v1550 = vmul.f32 1.0, %v1549
    %v1551 = vrcp.pop %v1521
    %v1552 = vmul.f32 %v1521, %v1551
    %v1553 = vsub.f32 1.0, %v1552
    %v1554 = vmul.f32 %v1551, %v1553
    %v1555 = vadd.f32 %v1551, %v1554
    %vm1556 = vweird.f32 %v1521
    %vm1557 = vweird.f32 %v1551
    %vm1558 = vmor %vm1556, %vm1557
    %v1559 = vsel %vm1558, %v1551, %v1555
    %v1560 = vand.u32 2147483647, %v1521
    %vm1561 = vcmp.eq.f32.partialorder %v1560, 8.507059e+37
    %v1562 = vand.u32 %v1521, 2147483648
    %v1563 = vor.u32 1.1754944e-38, %v1562
    %v1564 = vsel %vm1561, %v1563, %v1559
    %v1565 = vmul.f32 1.0, %v1564
    %v1566 = vrcp.pop %v1522
    %v1567 = vmul.f32 %v1522, %v1566
    %v1568 = vsub.f32 1.0, %v1567
    %v1569 = vmul.f32 %v1566, %v1568
    %v1570 = vadd.f32 %v1566, %v1569
    %vm1571 = vweird.f32 %v1522
    %vm1572 = vweird.f32 %v1566
    %vm1573 = vmor %vm1571, %vm1572
    %v1574 = vsel %vm1573, %v1566, %v1570
    %v1575 = vand.u32 2147483647, %v1522
    %vm1576 = vcmp.eq.f32.partialorder %v1575, 8.507059e+37
    %v1577 = vand.u32 %v1522, 2147483648
    %v1578 = vor.u32 1.1754944e-38, %v1577
    %v1579 = vsel %vm1576, %v1578, %v1574
    %v1580 = vmul.f32 1.0, %v1579
    %v1581 = vrcp.pop %v1523
    %v1582 = vmul.f32 %v1523, %v1581
    %v1583 = vsub.f32 1.0, %v1582
    %v1584 = vmul.f32 %v1581, %v1583
    %v1585 = vadd.f32 %v1581, %v1584
    %vm1586 = vweird.f32 %v1523
    %vm1587 = vweird.f32 %v1581
    %vm1588 = vmor %vm1586, %vm1587
    %v1589 = vsel %vm1588, %v1581, %v1585
    %v1590 = vand.u32 2147483647, %v1523
    %vm1591 = vcmp.eq.f32.partialorder %v1590, 8.507059e+37
    %v1592 = vand.u32 %v1523, 2147483648
    %v1593 = vor.u32 1.1754944e-38, %v1592
    %v1594 = vsel %vm1591, %v1593, %v1589
    %v1595 = vmul.f32 1.0, %v1594
    %v1596 = vrcp.pop %v1524
    %v1597 = vmul.f32 %v1524, %v1596
    %v1598 = vsub.f32 1.0, %v1597
    %v1599 = vmul.f32 %v1596, %v1598
    %v1600 = vadd.f32 %v1596, %v1599
    %vm1601 = vweird.f32 %v1524
    %vm1602 = vweird.f32 %v1596
    %vm1603 = vmor %vm1601, %vm1602
    %v1604 = vsel %vm1603, %v1596, %v1600
    %v1605 = vand.u32 2147483647, %v1524
    %vm1606 = vcmp.eq.f32.partialorder %v1605, 8.507059e+37
    %v1607 = vand.u32 %v1524, 2147483648
    %v1608 = vor.u32 1.1754944e-38, %v1607
    %v1609 = vsel %vm1606, %v1608, %v1604
    %v1610 = vmul.f32 1.0, %v1609
    %v1611 = vrcp.pop %v1525
    %v1612 = vmul.f32 %v1525, %v1611
    %v1613 = vsub.f32 1.0, %v1612
    %v1614 = vmul.f32 %v1611, %v1613
    %v1615 = vadd.f32 %v1611, %v1614
    %vm1616 = vweird.f32 %v1525
    %vm1617 = vweird.f32 %v1611
    %vm1618 = vmor %vm1616, %vm1617
    %v1619 = vsel %vm1618, %v1611, %v1615
    %v1620 = vand.u32 2147483647, %v1525
    %vm1621 = vcmp.eq.f32.partialorder %v1620, 8.507059e+37
    %v1622 = vand.u32 %v1525, 2147483648
    %v1623 = vor.u32 1.1754944e-38, %v1622
    %v1624 = vsel %vm1621, %v1623, %v1619
    %v1625 = vmul.f32 1.0, %v1624
    %v1626 = vrcp.pop %v1526
    %v1627 = vmul.f32 %v1526, %v1626
    %v1628 = vsub.f32 1.0, %v1627
    %v1629 = vmul.f32 %v1626, %v1628
    %v1630 = vadd.f32 %v1626, %v1629
    %vm1631 = vweird.f32 %v1526
    %vm1632 = vweird.f32 %v1626
    %vm1633 = vmor %vm1631, %vm1632
    %v1634 = vsel %vm1633, %v1626, %v1630
    %v1635 = vand.u32 2147483647, %v1526
    %vm1636 = vcmp.eq.f32.partialorder %v1635, 8.507059e+37
    %v1637 = vand.u32 %v1526, 2147483648
    %v1638 = vor.u32 1.1754944e-38, %v1637
    %v1639 = vsel %vm1636, %v1638, %v1634
    %v1640 = vmul.f32 1.0, %v1639
    %v1641 = vrcp.pop %v1527
    %v1642 = vmul.f32 %v1527, %v1641
    %v1643 = vsub.f32 1.0, %v1642
    %v1644 = vmul.f32 %v1641, %v1643
    %v1645 = vadd.f32 %v1641, %v1644
    %vm1646 = vweird.f32 %v1527
    %vm1647 = vweird.f32 %v1641
    %vm1648 = vmor %vm1646, %vm1647
    %v1649 = vsel %vm1648, %v1641, %v1645
    %v1650 = vand.u32 2147483647, %v1527
    %vm1651 = vcmp.eq.f32.partialorder %v1650, 8.507059e+37
    %v1652 = vand.u32 %v1527, 2147483648
    %v1653 = vor.u32 1.1754944e-38, %v1652
    %v1654 = vsel %vm1651, %v1653, %v1649
    %v1655 = vmul.f32 1.0, %v1654
    %v1656 = vrcp.pop %v1528
    %v1657 = vmul.f32 %v1528, %v1656
    %v1658 = vsub.f32 1.0, %v1657
    %v1659 = vmul.f32 %v1656, %v1658
    %v1660 = vadd.f32 %v1656, %v1659
    %vm1661 = vweird.f32 %v1528
    %vm1662 = vweird.f32 %v1656
    %vm1663 = vmor %vm1661, %vm1662
    %v1664 = vsel %vm1663, %v1656, %v1660
    %v1665 = vand.u32 2147483647, %v1528
    %vm1666 = vcmp.eq.f32.partialorder %v1665, 8.507059e+37
    %v1667 = vand.u32 %v1528, 2147483648
    %v1668 = vor.u32 1.1754944e-38, %v1667
    %v1669 = vsel %vm1666, %v1668, %v1664
    %v1670 = vmul.f32 1.0, %v1669
    %v1671 = vrcp.pop %v1529
    %v1672 = vmul.f32 %v1529, %v1671
    %v1673 = vsub.f32 1.0, %v1672
    %v1674 = vmul.f32 %v1671, %v1673
    %v1675 = vadd.f32 %v1671, %v1674
    %vm1676 = vweird.f32 %v1529
    %vm1677 = vweird.f32 %v1671
    %vm1678 = vmor %vm1676, %vm1677
    %v1679 = vsel %vm1678, %v1671, %v1675
    %v1680 = vand.u32 2147483647, %v1529
    %vm1681 = vcmp.eq.f32.partialorder %v1680, 8.507059e+37
    %v1682 = vand.u32 %v1529, 2147483648
    %v1683 = vor.u32 1.1754944e-38, %v1682
    %v1684 = vsel %vm1681, %v1683, %v1679
    %v1685 = vmul.f32 1.0, %v1684
    %v1686 = vrcp.pop %v1530
    %v1687 = vmul.f32 %v1530, %v1686
    %v1688 = vsub.f32 1.0, %v1687
    %v1689 = vmul.f32 %v1686, %v1688
    %v1690 = vadd.f32 %v1686, %v1689
    %vm1691 = vweird.f32 %v1530
    %vm1692 = vweird.f32 %v1686
    %vm1693 = vmor %vm1691, %vm1692
    %v1694 = vsel %vm1693, %v1686, %v1690
    %v1695 = vand.u32 2147483647, %v1530
    %vm1696 = vcmp.eq.f32.partialorder %v1695, 8.507059e+37
    %v1697 = vand.u32 %v1530, 2147483648
    %v1698 = vor.u32 1.1754944e-38, %v1697
    %v1699 = vsel %vm1696, %v1698, %v1694
    %v1700 = vmul.f32 1.0, %v1699
    %v1701 = vrcp.pop %v1531
    %v1702 = vmul.f32 %v1531, %v1701
    %v1703 = vsub.f32 1.0, %v1702
    %v1704 = vmul.f32 %v1701, %v1703
    %v1705 = vadd.f32 %v1701, %v1704
    %vm1706 = vweird.f32 %v1531
    %vm1707 = vweird.f32 %v1701
    %vm1708 = vmor %vm1706, %vm1707
    %v1709 = vsel %vm1708, %v1701, %v1705
    %v1710 = vand.u32 2147483647, %v1531
    %vm1711 = vcmp.eq.f32.partialorder %v1710, 8.507059e+37
    %v1712 = vand.u32 %v1531, 2147483648
    %v1713 = vor.u32 1.1754944e-38, %v1712
    %v1714 = vsel %vm1711, %v1713, %v1709
    %v1715 = vmul.f32 1.0, %v1714
    %v1716 = vrcp.pop %v1532
    %v1717 = vmul.f32 %v1532, %v1716
    %v1718 = vsub.f32 1.0, %v1717
    %v1719 = vmul.f32 %v1716, %v1718
    %v1720 = vadd.f32 %v1716, %v1719
    %vm1721 = vweird.f32 %v1532
    %vm1722 = vweird.f32 %v1716
    %vm1723 = vmor %vm1721, %vm1722
    %v1724 = vsel %vm1723, %v1716, %v1720
    %v1725 = vand.u32 2147483647, %v1532
    %vm1726 = vcmp.eq.f32.partialorder %v1725, 8.507059e+37
    %v1727 = vand.u32 %v1532, 2147483648
    %v1728 = vor.u32 1.1754944e-38, %v1727
    %v1729 = vsel %vm1726, %v1728, %v1724
    %v1730 = vmul.f32 1.0, %v1729
    %v1731 = vrcp.pop %v1533
    %v1732 = vmul.f32 %v1533, %v1731
    %v1733 = vsub.f32 1.0, %v1732
    %v1734 = vmul.f32 %v1731, %v1733
    %v1735 = vadd.f32 %v1731, %v1734
    %vm1736 = vweird.f32 %v1533
    %vm1737 = vweird.f32 %v1731
    %vm1738 = vmor %vm1736, %vm1737
    %v1739 = vsel %vm1738, %v1731, %v1735
    %v1740 = vand.u32 2147483647, %v1533
    %vm1741 = vcmp.eq.f32.partialorder %v1740, 8.507059e+37
    %v1742 = vand.u32 %v1533, 2147483648
    %v1743 = vor.u32 1.1754944e-38, %v1742
    %v1744 = vsel %vm1741, %v1743, %v1739
    %v1745 = vmul.f32 1.0, %v1744
    %v1746 = vrcp.pop %v1534
    %v1747 = vmul.f32 %v1534, %v1746
    %v1748 = vsub.f32 1.0, %v1747
    %v1749 = vmul.f32 %v1746, %v1748
    %v1750 = vadd.f32 %v1746, %v1749
    %vm1751 = vweird.f32 %v1534
    %vm1752 = vweird.f32 %v1746
    %vm1753 = vmor %vm1751, %vm1752
    %v1754 = vsel %vm1753, %v1746, %v1750
    %v1755 = vand.u32 2147483647, %v1534
    %vm1756 = vcmp.eq.f32.partialorder %v1755, 8.507059e+37
    %v1757 = vand.u32 %v1534, 2147483648
    %v1758 = vor.u32 1.1754944e-38, %v1757
    %v1759 = vsel %vm1756, %v1758, %v1754
    %v1760 = vmul.f32 1.0, %v1759
    %v1761 = vrcp.pop %v1535
    %v1762 = vmul.f32 %v1535, %v1761
    %v1763 = vsub.f32 1.0, %v1762
    %v1764 = vmul.f32 %v1761, %v1763
    %v1765 = vadd.f32 %v1761, %v1764
    %vm1766 = vweird.f32 %v1535
    %vm1767 = vweird.f32 %v1761
    %vm1768 = vmor %vm1766, %vm1767
    %v1769 = vsel %vm1768, %v1761, %v1765
    %v1770 = vand.u32 2147483647, %v1535
    %vm1771 = vcmp.eq.f32.partialorder %v1770, 8.507059e+37
    %v1772 = vand.u32 %v1535, 2147483648
    %v1773 = vor.u32 1.1754944e-38, %v1772
    %v1774 = vsel %vm1771, %v1773, %v1769
    %v1775 = vmul.f32 1.0, %v1774
    %v1776 = vmul.f32 %v1433, %v1550
    %v1777 = vmul.f32 %v1435, %v1565
    %v1778 = vmul.f32 %v1438, %v1580
    %v1779 = vmul.f32 %v1440, %v1595
    %v1780 = vmul.f32 %v1443, %v1610
    %v1781 = vmul.f32 %v1445, %v1625
    %v1782 = vmul.f32 %v1448, %v1640
    %v1783 = vmul.f32 %v1450, %v1655
    %v1784 = vmul.f32 %v1453, %v1670
    %v1785 = vmul.f32 %v1455, %v1685
    %v1786 = vmul.f32 %v1458, %v1700
    %v1787 = vmul.f32 %v1460, %v1715
    %v1788 = vmul.f32 %v1463, %v1730
    %v1789 = vmul.f32 %v1465, %v1745
    %v1790 = vmul.f32 %v1468, %v1760
    %v1791 = vmul.f32 %v1470, %v1775
    %v1792 = vmul.f32 %v1433, %v421
    %v1793 = vmul.f32 %v1435, %v423
    %v1794 = vmul.f32 %v1438, %v426
    %v1795 = vmul.f32 %v1440, %v428
    %v1796 = vmul.f32 %v1443, %v431
    %v1797 = vmul.f32 %v1445, %v433
    %v1798 = vmul.f32 %v1448, %v436
    %v1799 = vmul.f32 %v1450, %v438
    %v1800 = vmul.f32 %v1453, %v441
    %v1801 = vmul.f32 %v1455, %v443
    %v1802 = vmul.f32 %v1458, %v446
    %v1803 = vmul.f32 %v1460, %v448
    %v1804 = vmul.f32 %v1463, %v451
    %v1805 = vmul.f32 %v1465, %v453
    %v1806 = vmul.f32 %v1468, %v456
    %v1807 = vmul.f32 %v1470, %v458
    %v1808 = vmul.f32 %v1433, %v461
    %v1809 = vmul.f32 %v1435, %v463
    %v1810 = vmul.f32 %v1438, %v466
    %v1811 = vmul.f32 %v1440, %v468
    %v1812 = vmul.f32 %v1443, %v471
    %v1813 = vmul.f32 %v1445, %v473
    %v1814 = vmul.f32 %v1448, %v476
    %v1815 = vmul.f32 %v1450, %v478
    %v1816 = vmul.f32 %v1453, %v481
    %v1817 = vmul.f32 %v1455, %v483
    %v1818 = vmul.f32 %v1458, %v486
    %v1819 = vmul.f32 %v1460, %v488
    %v1820 = vmul.f32 %v1463, %v491
    %v1821 = vmul.f32 %v1465, %v493
    %v1822 = vmul.f32 %v1468, %v496
    %v1823 = vmul.f32 %v1470, %v498
    %v1824 = vmul.f32 %v1433, %v501
    %v1825 = vmul.f32 %v1435, %v503
    %v1826 = vmul.f32 %v1438, %v506
    %v1827 = vmul.f32 %v1440, %v508
    %v1828 = vmul.f32 %v1443, %v511
    %v1829 = vmul.f32 %v1445, %v513
    %v1830 = vmul.f32 %v1448, %v516
    %v1831 = vmul.f32 %v1450, %v518
    %v1832 = vmul.f32 %v1453, %v521
    %v1833 = vmul.f32 %v1455, %v523
    %v1834 = vmul.f32 %v1458, %v526
    %v1835 = vmul.f32 %v1460, %v528
    %v1836 = vmul.f32 %v1463, %v531
    %v1837 = vmul.f32 %v1465, %v533
    %v1838 = vmul.f32 %v1468, %v536
    %v1839 = vmul.f32 %v1470, %v538
    %v1840 = vpack.c.bf16 %v1793, %v1792
    %v1841 = vpack.c.bf16 %v1795, %v1794
    %v1842 = vpack.c.bf16 %v1797, %v1796
    %v1843 = vpack.c.bf16 %v1799, %v1798
    %v1844 = vpack.c.bf16 %v1801, %v1800
    %v1845 = vpack.c.bf16 %v1803, %v1802
    %v1846 = vpack.c.bf16 %v1805, %v1804
    %v1847 = vpack.c.bf16 %v1807, %v1806
    %v1848 = vpack.c.bf16 %v1809, %v1808
    %v1849 = vpack.c.bf16 %v1811, %v1810
    %v1850 = vpack.c.bf16 %v1813, %v1812
    %v1851 = vpack.c.bf16 %v1815, %v1814
    %v1852 = vpack.c.bf16 %v1817, %v1816
    %v1853 = vpack.c.bf16 %v1819, %v1818
    %v1854 = vpack.c.bf16 %v1821, %v1820
    %v1855 = vpack.c.bf16 %v1823, %v1822
    %v1856 = vpack.c.bf16 %v1825, %v1824
    %v1857 = vpack.c.bf16 %v1827, %v1826
    %v1858 = vpack.c.bf16 %v1829, %v1828
    %v1859 = vpack.c.bf16 %v1831, %v1830
    %v1860 = vpack.c.bf16 %v1833, %v1832
    %v1861 = vpack.c.bf16 %v1835, %v1834
    %v1862 = vpack.c.bf16 %v1837, %v1836
    %v1863 = vpack.c.bf16 %v1839, %v1838
    %v1864 = vld [vmem:[%s11] sm:$0xf]
    %v1865 = vld [vmem:[%s11 + $0x4] sm:$0xf]
    %1890 = vrot.lane.b32.xlu0 %v1840, 112
    %v1891 = vpop.permute.xlu0 %1890
    %1892 = vrot.lane.b32.xlu0 %v1841, 112
    %v1893 = vpop.permute.xlu0 %1892
    %1894 = vrot.lane.b32.xlu0 %v1842, 112
    %v1895 = vpop.permute.xlu0 %1894
    %1896 = vrot.lane.b32.xlu0 %v1843, 112
    %v1897 = vpop.permute.xlu0 %1896
    %1898 = vrot.lane.b32.xlu0 %v1844, 112
    %v1899 = vpop.permute.xlu0 %1898
    %1900 = vrot.lane.b32.xlu0 %v1845, 112
    %v1901 = vpop.permute.xlu0 %1900
    %1902 = vrot.lane.b32.xlu0 %v1846, 112
    %v1903 = vpop.permute.xlu0 %1902
    %1904 = vrot.lane.b32.xlu0 %v1847, 112
    %v1905 = vpop.permute.xlu0 %1904
    %1906 = vrot.lane.b32.xlu0 %v1848, 112
    %v1907 = vpop.permute.xlu0 %1906
    %1908 = vrot.lane.b32.xlu0 %v1849, 112
    %v1909 = vpop.permute.xlu0 %1908
    %1910 = vrot.lane.b32.xlu0 %v1850, 112
    %v1911 = vpop.permute.xlu0 %1910
    %1912 = vrot.lane.b32.xlu0 %v1851, 112
    %v1913 = vpop.permute.xlu0 %1912
    %1914 = vrot.lane.b32.xlu0 %v1852, 112
    %v1915 = vpop.permute.xlu0 %1914
    %1916 = vrot.lane.b32.xlu0 %v1853, 112
    %v1917 = vpop.permute.xlu0 %1916
    %1918 = vrot.lane.b32.xlu0 %v1854, 112
    %v1919 = vpop.permute.xlu0 %1918
    %1920 = vrot.lane.b32.xlu0 %v1855, 112
    %v1921 = vpop.permute.xlu0 %1920
    %1922 = vrot.lane.b32.xlu0 %v1856, 112
    %v1923 = vpop.permute.xlu0 %1922
    %1924 = vrot.lane.b32.xlu0 %v1857, 112
    %v1925 = vpop.permute.xlu0 %1924
    %1926 = vrot.lane.b32.xlu0 %v1858, 112
    %v1927 = vpop.permute.xlu0 %1926
    %1928 = vrot.lane.b32.xlu0 %v1859, 112
    %v1929 = vpop.permute.xlu0 %1928
    %1930 = vrot.lane.b32.xlu0 %v1860, 112
    %v1931 = vpop.permute.xlu0 %1930
    %1932 = vrot.lane.b32.xlu0 %v1861, 112
    %v1933 = vpop.permute.xlu0 %1932
    %1934 = vrot.lane.b32.xlu0 %v1862, 112
    %v1935 = vpop.permute.xlu0 %1934
    %1936 = vrot.lane.b32.xlu0 %v1863, 112
    %v1937 = vpop.permute.xlu0 %1936
    %v1940 = vunpack.c.l.b16 %v1864
    %v1941 = vunpack.c.l.b16 %v1865
    %v1942 = vpack.c.b16 %v1941, %v1940
    %v1945 = vsel %vm832, %v1891, 0
    %v1948 = vsel %vm832, %v1893, 0
    %v1951 = vsel %vm832, %v1895, 0
    %v1954 = vsel %vm832, %v1897, 0
    %v1957 = vsel %vm832, %v1899, 0
    %v1960 = vsel %vm832, %v1901, 0
    %v1963 = vsel %vm832, %v1903, 0
    %v1966 = vsel %vm832, %v1905, 0
    %v1969 = vsel %vm832, %v1907, 0
    %v1972 = vsel %vm832, %v1909, 0
    %v1975 = vsel %vm832, %v1911, 0
    %v1978 = vsel %vm832, %v1913, 0
    %v1981 = vsel %vm832, %v1915, 0
    %v1984 = vsel %vm832, %v1917, 0
    %v1987 = vsel %vm832, %v1919, 0
    %v1990 = vsel %vm832, %v1921, 0
    %v1993 = vsel %vm832, %v1923, 0
    %v1996 = vsel %vm832, %v1925, 0
    %v1999 = vsel %vm832, %v1927, 0
    %v2002 = vsel %vm832, %v1929, 0
    %v2005 = vsel %vm832, %v1931, 0
    %v2008 = vsel %vm832, %v1933, 0
    %v2011 = vsel %vm832, %v1935, 0
    %v2014 = vsel %vm832, %v1937, 0
    %2016 = vmatpush.bf16.msra.mxu0 0
    %2017 = vmatpush.bf16.msra.mxu0 0
    %2018 = vmatpush.bf16.msra.mxu0 0
    %2019 = vmatpush.bf16.msra.mxu0 0
    %2020 = vmatpush.bf16.msra.mxu0 0
    %2021 = vmatpush.bf16.msra.mxu0 0
    %2022 = vmatpush.bf16.msra.mxu0 0
    %2023 = vmatpush.bf16.msra.mxu0 %v1942
    %2024 = vmatmul.bf16.gmra.mxu0 %v1945
    %v2025 = vpop.f32.mrf.mxu0
    %v2026 = vadd.f32 0.0, %v2025
    %v2027 = vpop.f32.mrf.mxu0
    %v2028 = vadd.f32 0.0, %v2027
    %2029 = vmatmul.bf16.gmra.mxu0 %v1948
    %v2030 = vpop.f32.mrf.mxu0
    %v2031 = vadd.f32 0.0, %v2030
    %v2032 = vpop.f32.mrf.mxu0
    %v2033 = vadd.f32 0.0, %v2032
    %2034 = vmatmul.bf16.gmra.mxu0 %v1951
    %v2035 = vpop.f32.mrf.mxu0
    %v2036 = vadd.f32 0.0, %v2035
    %v2037 = vpop.f32.mrf.mxu0
    %v2038 = vadd.f32 0.0, %v2037
    %2039 = vmatmul.bf16.gmra.mxu0 %v1954
    %v2040 = vpop.f32.mrf.mxu0
    %v2041 = vadd.f32 0.0, %v2040
    %v2042 = vpop.f32.mrf.mxu0
    %v2043 = vadd.f32 0.0, %v2042
    %2044 = vmatmul.bf16.gmra.mxu0 %v1957
    %v2045 = vpop.f32.mrf.mxu0
    %v2046 = vadd.f32 0.0, %v2045
    %v2047 = vpop.f32.mrf.mxu0
    %v2048 = vadd.f32 0.0, %v2047
    %2049 = vmatmul.bf16.gmra.mxu0 %v1960
    %v2050 = vpop.f32.mrf.mxu0
    %v2051 = vadd.f32 0.0, %v2050
    %v2052 = vpop.f32.mrf.mxu0
    %v2053 = vadd.f32 0.0, %v2052
    %2054 = vmatmul.bf16.gmra.mxu0 %v1963
    %v2055 = vpop.f32.mrf.mxu0
    %v2056 = vadd.f32 0.0, %v2055
    %v2057 = vpop.f32.mrf.mxu0
    %v2058 = vadd.f32 0.0, %v2057
    %2059 = vmatmul.bf16.gmra.mxu0 %v1966
    %v2060 = vpop.f32.mrf.mxu0
    %v2061 = vadd.f32 0.0, %v2060
    %v2062 = vpop.f32.mrf.mxu0
    %v2063 = vadd.f32 0.0, %v2062
    %2064 = vmatmul.bf16.gmra.mxu0 %v1969
    %v2065 = vpop.f32.mrf.mxu0
    %v2066 = vadd.f32 0.0, %v2065
    %v2067 = vpop.f32.mrf.mxu0
    %v2068 = vadd.f32 0.0, %v2067
    %2069 = vmatmul.bf16.gmra.mxu0 %v1972
    %v2070 = vpop.f32.mrf.mxu0
    %v2071 = vadd.f32 0.0, %v2070
    %v2072 = vpop.f32.mrf.mxu0
    %v2073 = vadd.f32 0.0, %v2072
    %2074 = vmatmul.bf16.gmra.mxu0 %v1975
    %v2075 = vpop.f32.mrf.mxu0
    %v2076 = vadd.f32 0.0, %v2075
    %v2077 = vpop.f32.mrf.mxu0
    %v2078 = vadd.f32 0.0, %v2077
    %2079 = vmatmul.bf16.gmra.mxu0 %v1978
    %v2080 = vpop.f32.mrf.mxu0
    %v2081 = vadd.f32 0.0, %v2080
    %v2082 = vpop.f32.mrf.mxu0
    %v2083 = vadd.f32 0.0, %v2082
    %2084 = vmatmul.bf16.gmra.mxu0 %v1981
    %v2085 = vpop.f32.mrf.mxu0
    %v2086 = vadd.f32 0.0, %v2085
    %v2087 = vpop.f32.mrf.mxu0
    %v2088 = vadd.f32 0.0, %v2087
    %2089 = vmatmul.bf16.gmra.mxu0 %v1984
    %v2090 = vpop.f32.mrf.mxu0
    %v2091 = vadd.f32 0.0, %v2090
    %v2092 = vpop.f32.mrf.mxu0
    %v2093 = vadd.f32 0.0, %v2092
    %2094 = vmatmul.bf16.gmra.mxu0 %v1987
    %v2095 = vpop.f32.mrf.mxu0
    %v2096 = vadd.f32 0.0, %v2095
    %v2097 = vpop.f32.mrf.mxu0
    %v2098 = vadd.f32 0.0, %v2097
    %2099 = vmatmul.bf16.gmra.mxu0 %v1990
    %v2100 = vpop.f32.mrf.mxu0
    %v2101 = vadd.f32 0.0, %v2100
    %v2102 = vpop.f32.mrf.mxu0
    %v2103 = vadd.f32 0.0, %v2102
    %2104 = vmatmul.bf16.gmra.mxu0 %v1993
    %v2105 = vpop.f32.mrf.mxu0
    %v2106 = vadd.f32 0.0, %v2105
    %v2107 = vpop.f32.mrf.mxu0
    %v2108 = vadd.f32 0.0, %v2107
    %2109 = vmatmul.bf16.gmra.mxu0 %v1996
    %v2110 = vpop.f32.mrf.mxu0
    %v2111 = vadd.f32 0.0, %v2110
    %v2112 = vpop.f32.mrf.mxu0
    %v2113 = vadd.f32 0.0, %v2112
    %2114 = vmatmul.bf16.gmra.mxu0 %v1999
    %v2115 = vpop.f32.mrf.mxu0
    %v2116 = vadd.f32 0.0, %v2115
    %v2117 = vpop.f32.mrf.mxu0
    %v2118 = vadd.f32 0.0, %v2117
    %2119 = vmatmul.bf16.gmra.mxu0 %v2002
    %v2120 = vpop.f32.mrf.mxu0
    %v2121 = vadd.f32 0.0, %v2120
    %v2122 = vpop.f32.mrf.mxu0
    %v2123 = vadd.f32 0.0, %v2122
    %2124 = vmatmul.bf16.gmra.mxu0 %v2005
    %v2125 = vpop.f32.mrf.mxu0
    %v2126 = vadd.f32 0.0, %v2125
    %v2127 = vpop.f32.mrf.mxu0
    %v2128 = vadd.f32 0.0, %v2127
    %2129 = vmatmul.bf16.gmra.mxu0 %v2008
    %v2130 = vpop.f32.mrf.mxu0
    %v2131 = vadd.f32 0.0, %v2130
    %v2132 = vpop.f32.mrf.mxu0
    %v2133 = vadd.f32 0.0, %v2132
    %2134 = vmatmul.bf16.gmra.mxu0 %v2011
    %v2135 = vpop.f32.mrf.mxu0
    %v2136 = vadd.f32 0.0, %v2135
    %v2137 = vpop.f32.mrf.mxu0
    %v2138 = vadd.f32 0.0, %v2137
    %2139 = vmatmul.bf16.gmra.mxu0 %v2014
    %v2140 = vpop.f32.mrf.mxu0
    %v2141 = vadd.f32 0.0, %v2140
    %v2142 = vpop.f32.mrf.mxu0
    %v2143 = vadd.f32 0.0, %v2142
    %2144 = vdwg.mxu0
    %v2145 = vmul.f32 %v2026, %v2026
    %v2146 = vmul.f32 %v2028, %v2028
    %v2147 = vmul.f32 %v2031, %v2031
    %v2148 = vmul.f32 %v2033, %v2033
    %v2149 = vmul.f32 %v2036, %v2036
    %v2150 = vmul.f32 %v2038, %v2038
    %v2151 = vmul.f32 %v2041, %v2041
    %v2152 = vmul.f32 %v2043, %v2043
    %v2153 = vmul.f32 %v2046, %v2046
    %v2154 = vmul.f32 %v2048, %v2048
    %v2155 = vmul.f32 %v2051, %v2051
    %v2156 = vmul.f32 %v2053, %v2053
    %v2157 = vmul.f32 %v2056, %v2056
    %v2158 = vmul.f32 %v2058, %v2058
    %v2159 = vmul.f32 %v2061, %v2061
    %v2160 = vmul.f32 %v2063, %v2063
    %v2161 = vmul.f32 %v2066, %v2066
    %v2162 = vmul.f32 %v2068, %v2068
    %v2163 = vmul.f32 %v2071, %v2071
    %v2164 = vmul.f32 %v2073, %v2073
    %v2165 = vmul.f32 %v2076, %v2076
    %v2166 = vmul.f32 %v2078, %v2078
    %v2167 = vmul.f32 %v2081, %v2081
    %v2168 = vmul.f32 %v2083, %v2083
    %v2169 = vmul.f32 %v2086, %v2086
    %v2170 = vmul.f32 %v2088, %v2088
    %v2171 = vmul.f32 %v2091, %v2091
    %v2172 = vmul.f32 %v2093, %v2093
    %v2173 = vmul.f32 %v2096, %v2096
    %v2174 = vmul.f32 %v2098, %v2098
    %v2175 = vmul.f32 %v2101, %v2101
    %v2176 = vmul.f32 %v2103, %v2103
    %v2177 = vadd.f32 %v2145, %v2161
    %v2178 = vadd.f32 %v2146, %v2162
    %v2179 = vadd.f32 %v2147, %v2163
    %v2180 = vadd.f32 %v2148, %v2164
    %v2181 = vadd.f32 %v2149, %v2165
    %v2182 = vadd.f32 %v2150, %v2166
    %v2183 = vadd.f32 %v2151, %v2167
    %v2184 = vadd.f32 %v2152, %v2168
    %v2185 = vadd.f32 %v2153, %v2169
    %v2186 = vadd.f32 %v2154, %v2170
    %v2187 = vadd.f32 %v2155, %v2171
    %v2188 = vadd.f32 %v2156, %v2172
    %v2189 = vadd.f32 %v2157, %v2173
    %v2190 = vadd.f32 %v2158, %v2174
    %v2191 = vadd.f32 %v2159, %v2175
    %v2192 = vadd.f32 %v2160, %v2176
    %v2193 = vmul.f32 %v2106, %v2106
    %v2194 = vmul.f32 %v2108, %v2108
    %v2195 = vmul.f32 %v2111, %v2111
    %v2196 = vmul.f32 %v2113, %v2113
    %v2197 = vmul.f32 %v2116, %v2116
    %v2198 = vmul.f32 %v2118, %v2118
    %v2199 = vmul.f32 %v2121, %v2121
    %v2200 = vmul.f32 %v2123, %v2123
    %v2201 = vmul.f32 %v2126, %v2126
    %v2202 = vmul.f32 %v2128, %v2128
    %v2203 = vmul.f32 %v2131, %v2131
    %v2204 = vmul.f32 %v2133, %v2133
    %v2205 = vmul.f32 %v2136, %v2136
    %v2206 = vmul.f32 %v2138, %v2138
    %v2207 = vmul.f32 %v2141, %v2141
    %v2208 = vmul.f32 %v2143, %v2143
    %v2209 = vadd.f32 %v2177, %v2193
    %v2210 = vadd.f32 %v2178, %v2194
    %v2211 = vadd.f32 %v2179, %v2195
    %v2212 = vadd.f32 %v2180, %v2196
    %v2213 = vadd.f32 %v2181, %v2197
    %v2214 = vadd.f32 %v2182, %v2198
    %v2215 = vadd.f32 %v2183, %v2199
    %v2216 = vadd.f32 %v2184, %v2200
    %v2217 = vadd.f32 %v2185, %v2201
    %v2218 = vadd.f32 %v2186, %v2202
    %v2219 = vadd.f32 %v2187, %v2203
    %v2220 = vadd.f32 %v2188, %v2204
    %v2221 = vadd.f32 %v2189, %v2205
    %v2222 = vadd.f32 %v2190, %v2206
    %v2223 = vadd.f32 %v2191, %v2207
    %v2224 = vadd.f32 %v2192, %v2208
    %v2225 = vrsqrt.pop %v2209
    %v2226 = vmul.f32 %v2225, %v2209
    %v2227 = vmul.f32 %v2226, %v2225
    %v2228 = vmul.f32 0.5, %v2227
    %v2229 = vsub.f32 1.5, %v2228
    %v2230 = vmul.f32 %v2225, %v2229
    %v2231 = vmul.f32 %v2209, %v2230
    %vm2232 = vcmp.eq.f32.partialorder %v2209, inf
    %v2233 = vsel %vm2232, %v2209, %v2231
    %vm2234 = vcmp.eq.f32.partialorder %v2209, 0.0
    %v2235 = vand.u32 %v2209, 2147483648
    %v2236 = vsel %vm2234, %v2235, %v2233
    %v2237 = vrsqrt.pop %v2210
    %v2238 = vmul.f32 %v2237, %v2210
    %v2239 = vmul.f32 %v2238, %v2237
    %v2240 = vmul.f32 0.5, %v2239
    %v2241 = vsub.f32 1.5, %v2240
    %v2242 = vmul.f32 %v2237, %v2241
    %v2243 = vmul.f32 %v2210, %v2242
    %vm2244 = vcmp.eq.f32.partialorder %v2210, inf
    %v2245 = vsel %vm2244, %v2210, %v2243
    %vm2246 = vcmp.eq.f32.partialorder %v2210, 0.0
    %v2247 = vand.u32 %v2210, 2147483648
    %v2248 = vsel %vm2246, %v2247, %v2245
    %v2249 = vrsqrt.pop %v2211
    %v2250 = vmul.f32 %v2249, %v2211
    %v2251 = vmul.f32 %v2250, %v2249
    %v2252 = vmul.f32 0.5, %v2251
    %v2253 = vsub.f32 1.5, %v2252
    %v2254 = vmul.f32 %v2249, %v2253
    %v2255 = vmul.f32 %v2211, %v2254
    %vm2256 = vcmp.eq.f32.partialorder %v2211, inf
    %v2257 = vsel %vm2256, %v2211, %v2255
    %vm2258 = vcmp.eq.f32.partialorder %v2211, 0.0
    %v2259 = vand.u32 %v2211, 2147483648
    %v2260 = vsel %vm2258, %v2259, %v2257
    %v2261 = vrsqrt.pop %v2212
    %v2262 = vmul.f32 %v2261, %v2212
    %v2263 = vmul.f32 %v2262, %v2261
    %v2264 = vmul.f32 0.5, %v2263
    %v2265 = vsub.f32 1.5, %v2264
    %v2266 = vmul.f32 %v2261, %v2265
    %v2267 = vmul.f32 %v2212, %v2266
    %vm2268 = vcmp.eq.f32.partialorder %v2212, inf
    %v2269 = vsel %vm2268, %v2212, %v2267
    %vm2270 = vcmp.eq.f32.partialorder %v2212, 0.0
    %v2271 = vand.u32 %v2212, 2147483648
    %v2272 = vsel %vm2270, %v2271, %v2269
    %v2273 = vrsqrt.pop %v2213
    %v2274 = vmul.f32 %v2273, %v2213
    %v2275 = vmul.f32 %v2274, %v2273
    %v2276 = vmul.f32 0.5, %v2275
    %v2277 = vsub.f32 1.5, %v2276
    %v2278 = vmul.f32 %v2273, %v2277
    %v2279 = vmul.f32 %v2213, %v2278
    %vm2280 = vcmp.eq.f32.partialorder %v2213, inf
    %v2281 = vsel %vm2280, %v2213, %v2279
    %vm2282 = vcmp.eq.f32.partialorder %v2213, 0.0
    %v2283 = vand.u32 %v2213, 2147483648
    %v2284 = vsel %vm2282, %v2283, %v2281
    %v2285 = vrsqrt.pop %v2214
    %v2286 = vmul.f32 %v2285, %v2214
    %v2287 = vmul.f32 %v2286, %v2285
    %v2288 = vmul.f32 0.5, %v2287
    %v2289 = vsub.f32 1.5, %v2288
    %v2290 = vmul.f32 %v2285, %v2289
    %v2291 = vmul.f32 %v2214, %v2290
    %vm2292 = vcmp.eq.f32.partialorder %v2214, inf
    %v2293 = vsel %vm2292, %v2214, %v2291
    %vm2294 = vcmp.eq.f32.partialorder %v2214, 0.0
    %v2295 = vand.u32 %v2214, 2147483648
    %v2296 = vsel %vm2294, %v2295, %v2293
    %v2297 = vrsqrt.pop %v2215
    %v2298 = vmul.f32 %v2297, %v2215
    %v2299 = vmul.f32 %v2298, %v2297
    %v2300 = vmul.f32 0.5, %v2299
    %v2301 = vsub.f32 1.5, %v2300
    %v2302 = vmul.f32 %v2297, %v2301
    %v2303 = vmul.f32 %v2215, %v2302
    %vm2304 = vcmp.eq.f32.partialorder %v2215, inf
    %v2305 = vsel %vm2304, %v2215, %v2303
    %vm2306 = vcmp.eq.f32.partialorder %v2215, 0.0
    %v2307 = vand.u32 %v2215, 2147483648
    %v2308 = vsel %vm2306, %v2307, %v2305
    %v2309 = vrsqrt.pop %v2216
    %v2310 = vmul.f32 %v2309, %v2216
    %v2311 = vmul.f32 %v2310, %v2309
    %v2312 = vmul.f32 0.5, %v2311
    %v2313 = vsub.f32 1.5, %v2312
    %v2314 = vmul.f32 %v2309, %v2313
    %v2315 = vmul.f32 %v2216, %v2314
    %vm2316 = vcmp.eq.f32.partialorder %v2216, inf
    %v2317 = vsel %vm2316, %v2216, %v2315
    %vm2318 = vcmp.eq.f32.partialorder %v2216, 0.0
    %v2319 = vand.u32 %v2216, 2147483648
    %v2320 = vsel %vm2318, %v2319, %v2317
    %v2321 = vrsqrt.pop %v2217
    %v2322 = vmul.f32 %v2321, %v2217
    %v2323 = vmul.f32 %v2322, %v2321
    %v2324 = vmul.f32 0.5, %v2323
    %v2325 = vsub.f32 1.5, %v2324
    %v2326 = vmul.f32 %v2321, %v2325
    %v2327 = vmul.f32 %v2217, %v2326
    %vm2328 = vcmp.eq.f32.partialorder %v2217, inf
    %v2329 = vsel %vm2328, %v2217, %v2327
    %vm2330 = vcmp.eq.f32.partialorder %v2217, 0.0
    %v2331 = vand.u32 %v2217, 2147483648
    %v2332 = vsel %vm2330, %v2331, %v2329
    %v2333 = vrsqrt.pop %v2218
    %v2334 = vmul.f32 %v2333, %v2218
    %v2335 = vmul.f32 %v2334, %v2333
    %v2336 = vmul.f32 0.5, %v2335
    %v2337 = vsub.f32 1.5, %v2336
    %v2338 = vmul.f32 %v2333, %v2337
    %v2339 = vmul.f32 %v2218, %v2338
    %vm2340 = vcmp.eq.f32.partialorder %v2218, inf
    %v2341 = vsel %vm2340, %v2218, %v2339
    %vm2342 = vcmp.eq.f32.partialorder %v2218, 0.0
    %v2343 = vand.u32 %v2218, 2147483648
    %v2344 = vsel %vm2342, %v2343, %v2341
    %v2345 = vrsqrt.pop %v2219
    %v2346 = vmul.f32 %v2345, %v2219
    %v2347 = vmul.f32 %v2346, %v2345
    %v2348 = vmul.f32 0.5, %v2347
    %v2349 = vsub.f32 1.5, %v2348
    %v2350 = vmul.f32 %v2345, %v2349
    %v2351 = vmul.f32 %v2219, %v2350
    %vm2352 = vcmp.eq.f32.partialorder %v2219, inf
    %v2353 = vsel %vm2352, %v2219, %v2351
    %vm2354 = vcmp.eq.f32.partialorder %v2219, 0.0
    %v2355 = vand.u32 %v2219, 2147483648
    %v2356 = vsel %vm2354, %v2355, %v2353
    %v2357 = vrsqrt.pop %v2220
    %v2358 = vmul.f32 %v2357, %v2220
    %v2359 = vmul.f32 %v2358, %v2357
    %v2360 = vmul.f32 0.5, %v2359
    %v2361 = vsub.f32 1.5, %v2360
    %v2362 = vmul.f32 %v2357, %v2361
    %v2363 = vmul.f32 %v2220, %v2362
    %vm2364 = vcmp.eq.f32.partialorder %v2220, inf
    %v2365 = vsel %vm2364, %v2220, %v2363
    %vm2366 = vcmp.eq.f32.partialorder %v2220, 0.0
    %v2367 = vand.u32 %v2220, 2147483648
    %v2368 = vsel %vm2366, %v2367, %v2365
    %v2369 = vrsqrt.pop %v2221
    %v2370 = vmul.f32 %v2369, %v2221
    %v2371 = vmul.f32 %v2370, %v2369
    %v2372 = vmul.f32 0.5, %v2371
    %v2373 = vsub.f32 1.5, %v2372
    %v2374 = vmul.f32 %v2369, %v2373
    %v2375 = vmul.f32 %v2221, %v2374
    %vm2376 = vcmp.eq.f32.partialorder %v2221, inf
    %v2377 = vsel %vm2376, %v2221, %v2375
    %vm2378 = vcmp.eq.f32.partialorder %v2221, 0.0
    %v2379 = vand.u32 %v2221, 2147483648
    %v2380 = vsel %vm2378, %v2379, %v2377
    %v2381 = vrsqrt.pop %v2222
    %v2382 = vmul.f32 %v2381, %v2222
    %v2383 = vmul.f32 %v2382, %v2381
    %v2384 = vmul.f32 0.5, %v2383
    %v2385 = vsub.f32 1.5, %v2384
    %v2386 = vmul.f32 %v2381, %v2385
    %v2387 = vmul.f32 %v2222, %v2386
    %vm2388 = vcmp.eq.f32.partialorder %v2222, inf
    %v2389 = vsel %vm2388, %v2222, %v2387
    %vm2390 = vcmp.eq.f32.partialorder %v2222, 0.0
    %v2391 = vand.u32 %v2222, 2147483648
    %v2392 = vsel %vm2390, %v2391, %v2389
    %v2393 = vrsqrt.pop %v2223
    %v2394 = vmul.f32 %v2393, %v2223
    %v2395 = vmul.f32 %v2394, %v2393
    %v2396 = vmul.f32 0.5, %v2395
    %v2397 = vsub.f32 1.5, %v2396
    %v2398 = vmul.f32 %v2393, %v2397
    %v2399 = vmul.f32 %v2223, %v2398
    %vm2400 = vcmp.eq.f32.partialorder %v2223, inf
    %v2401 = vsel %vm2400, %v2223, %v2399
    %vm2402 = vcmp.eq.f32.partialorder %v2223, 0.0
    %v2403 = vand.u32 %v2223, 2147483648
    %v2404 = vsel %vm2402, %v2403, %v2401
    %v2405 = vrsqrt.pop %v2224
    %v2406 = vmul.f32 %v2405, %v2224
    %v2407 = vmul.f32 %v2406, %v2405
    %v2408 = vmul.f32 0.5, %v2407
    %v2409 = vsub.f32 1.5, %v2408
    %v2410 = vmul.f32 %v2405, %v2409
    %v2411 = vmul.f32 %v2224, %v2410
    %vm2412 = vcmp.eq.f32.partialorder %v2224, inf
    %v2413 = vsel %vm2412, %v2224, %v2411
    %vm2414 = vcmp.eq.f32.partialorder %v2224, 0.0
    %v2415 = vand.u32 %v2224, 2147483648
    %v2416 = vsel %vm2414, %v2415, %v2413
    %v2417 = vpack.c.bf16 %v1777, %v1776
    %v2418 = vpack.c.bf16 %v1779, %v1778
    %v2419 = vpack.c.bf16 %v1781, %v1780
    %v2420 = vpack.c.bf16 %v1783, %v1782
    %v2421 = vpack.c.bf16 %v1785, %v1784
    %v2422 = vpack.c.bf16 %v1787, %v1786
    %v2423 = vpack.c.bf16 %v1789, %v1788
    %v2424 = vpack.c.bf16 %v1791, %v1790
    %v2425 = vld [vmem:[%s12] sm:$0xf]
    %v2426 = vld [vmem:[%s12 + $0x4] sm:$0xf]
    %v2427 = vld [vmem:[%s13] sm:$0x1]
    %2429 = vset.pattern.permute.xlu0 0
    %2430 = vperm.xlu0 %2429, %v2236
    %v2431 = vpop.permute.xlu0 %2430
    %2434 = vset.pattern.permute.xlu0 0
    %2435 = vperm.xlu0 %2434, %v2248
    %v2436 = vpop.permute.xlu0 %2435
    %2439 = vset.pattern.permute.xlu0 0
    %2440 = vperm.xlu0 %2439, %v2260
    %v2441 = vpop.permute.xlu0 %2440
    %2444 = vset.pattern.permute.xlu0 0
    %2445 = vperm.xlu0 %2444, %v2272
    %v2446 = vpop.permute.xlu0 %2445
    %2449 = vset.pattern.permute.xlu0 0
    %2450 = vperm.xlu0 %2449, %v2284
    %v2451 = vpop.permute.xlu0 %2450
    %2454 = vset.pattern.permute.xlu0 0
    %2455 = vperm.xlu0 %2454, %v2296
    %v2456 = vpop.permute.xlu0 %2455
    %2459 = vset.pattern.permute.xlu0 0
    %2460 = vperm.xlu0 %2459, %v2308
    %v2461 = vpop.permute.xlu0 %2460
    %2464 = vset.pattern.permute.xlu0 0
    %2465 = vperm.xlu0 %2464, %v2320
    %v2466 = vpop.permute.xlu0 %2465
    %2469 = vset.pattern.permute.xlu0 0
    %2470 = vperm.xlu0 %2469, %v2332
    %v2471 = vpop.permute.xlu0 %2470
    %2474 = vset.pattern.permute.xlu0 0
    %2475 = vperm.xlu0 %2474, %v2344
    %v2476 = vpop.permute.xlu0 %2475
    %2479 = vset.pattern.permute.xlu0 0
    %2480 = vperm.xlu0 %2479, %v2356
    %v2481 = vpop.permute.xlu0 %2480
    %2484 = vset.pattern.permute.xlu0 0
    %2485 = vperm.xlu0 %2484, %v2368
    %v2486 = vpop.permute.xlu0 %2485
    %2489 = vset.pattern.permute.xlu0 0
    %2490 = vperm.xlu0 %2489, %v2380
    %v2491 = vpop.permute.xlu0 %2490
    %2494 = vset.pattern.permute.xlu0 0
    %2495 = vperm.xlu0 %2494, %v2392
    %v2496 = vpop.permute.xlu0 %2495
    %2499 = vset.pattern.permute.xlu0 0
    %2500 = vperm.xlu0 %2499, %v2404
    %v2501 = vpop.permute.xlu0 %2500
    %2504 = vset.pattern.permute.xlu0 0
    %2505 = vperm.xlu0 %2504, %v2416
    %v2506 = vpop.permute.xlu0 %2505
    %v2509 = vperm.slane %v2427, 0
    %v2511 = vmul.f32 %v2431, %v2509
    %v2512 = vmul.f32 %v2436, %v2509
    %v2513 = vmul.f32 %v2441, %v2509
    %v2514 = vmul.f32 %v2446, %v2509
    %v2515 = vmul.f32 %v2451, %v2509
    %v2516 = vmul.f32 %v2456, %v2509
    %v2517 = vmul.f32 %v2461, %v2509
    %v2518 = vmul.f32 %v2466, %v2509
    %v2519 = vmul.f32 %v2471, %v2509
    %v2520 = vmul.f32 %v2476, %v2509
    %v2521 = vmul.f32 %v2481, %v2509
    %v2522 = vmul.f32 %v2486, %v2509
    %v2523 = vmul.f32 %v2491, %v2509
    %v2524 = vmul.f32 %v2496, %v2509
    %v2525 = vmul.f32 %v2501, %v2509
    %v2526 = vmul.f32 %v2506, %v2509
    %v2529 = vunpack.c.l.b16 %v2425
    %v2530 = vunpack.c.l.b16 %v2426
    %v2531 = vpack.c.b16 %v2530, %v2529
    %v2534 = vsel %vm832, %v2417, 0
    %v2537 = vsel %vm832, %v2418, 0
    %v2540 = vsel %vm832, %v2419, 0
    %v2543 = vsel %vm832, %v2420, 0
    %v2546 = vsel %vm832, %v2421, 0
    %v2549 = vsel %vm832, %v2422, 0
    %v2552 = vsel %vm832, %v2423, 0
    %v2555 = vsel %vm832, %v2424, 0
    %2557 = vmatpush.bf16.msra.mxu0 0
    %2558 = vmatpush.bf16.msra.mxu0 0
    %2559 = vmatpush.bf16.msra.mxu0 0
    %2560 = vmatpush.bf16.msra.mxu0 0
    %2561 = vmatpush.bf16.msra.mxu0 0
    %2562 = vmatpush.bf16.msra.mxu0 0
    %2563 = vmatpush.bf16.msra.mxu0 0
    %2564 = vmatpush.bf16.msra.mxu0 %v2531
    %2565 = vmatmul.bf16.gmra.mxu0 %v2534
    %v2566 = vpop.f32.mrf.mxu0
    %v2567 = vadd.f32 %v2511, %v2566
    %v2568 = vpop.f32.mrf.mxu0
    %v2569 = vadd.f32 %v2512, %v2568
    %2570 = vmatmul.bf16.gmra.mxu0 %v2537
    %v2571 = vpop.f32.mrf.mxu0
    %v2572 = vadd.f32 %v2513, %v2571
    %v2573 = vpop.f32.mrf.mxu0
    %v2574 = vadd.f32 %v2514, %v2573
    %2575 = vmatmul.bf16.gmra.mxu0 %v2540
    %v2576 = vpop.f32.mrf.mxu0
    %v2577 = vadd.f32 %v2515, %v2576
    %v2578 = vpop.f32.mrf.mxu0
    %v2579 = vadd.f32 %v2516, %v2578
    %2580 = vmatmul.bf16.gmra.mxu0 %v2543
    %v2581 = vpop.f32.mrf.mxu0
    %v2582 = vadd.f32 %v2517, %v2581
    %v2583 = vpop.f32.mrf.mxu0
    %v2584 = vadd.f32 %v2518, %v2583
    %2585 = vmatmul.bf16.gmra.mxu0 %v2546
    %v2586 = vpop.f32.mrf.mxu0
    %v2587 = vadd.f32 %v2519, %v2586
    %v2588 = vpop.f32.mrf.mxu0
    %v2589 = vadd.f32 %v2520, %v2588
    %2590 = vmatmul.bf16.gmra.mxu0 %v2549
    %v2591 = vpop.f32.mrf.mxu0
    %v2592 = vadd.f32 %v2521, %v2591
    %v2593 = vpop.f32.mrf.mxu0
    %v2594 = vadd.f32 %v2522, %v2593
    %2595 = vmatmul.bf16.gmra.mxu0 %v2552
    %v2596 = vpop.f32.mrf.mxu0
    %v2597 = vadd.f32 %v2523, %v2596
    %v2598 = vpop.f32.mrf.mxu0
    %v2599 = vadd.f32 %v2524, %v2598
    %2600 = vmatmul.bf16.gmra.mxu0 %v2555
    %v2601 = vpop.f32.mrf.mxu0
    %v2602 = vadd.f32 %v2525, %v2601
    %v2603 = vpop.f32.mrf.mxu0
    %v2604 = vadd.f32 %v2526, %v2603
    %2605 = vdwg.mxu0
    %v2606 = vld [vmem:[%s14] sm:$0x1]
    %v2608 = vperm.slane %v2606, 0
    %v2610 = vadd.f32 %v2567, %v2608
    %v2611 = vadd.f32 %v2569, %v2608
    %v2612 = vadd.f32 %v2572, %v2608
    %v2613 = vadd.f32 %v2574, %v2608
    %v2614 = vadd.f32 %v2577, %v2608
    %v2615 = vadd.f32 %v2579, %v2608
    %v2616 = vadd.f32 %v2582, %v2608
    %v2617 = vadd.f32 %v2584, %v2608
    %v2618 = vadd.f32 %v2587, %v2608
    %v2619 = vadd.f32 %v2589, %v2608
    %v2620 = vadd.f32 %v2592, %v2608
    %v2621 = vadd.f32 %v2594, %v2608
    %v2622 = vadd.f32 %v2597, %v2608
    %v2623 = vadd.f32 %v2599, %v2608
    %v2624 = vadd.f32 %v2602, %v2608
    %v2625 = vadd.f32 %v2604, %v2608
    %v2626 = vxor.u32 %v2610, 2147483648
    %v2627 = vxor.u32 %v2611, 2147483648
    %v2628 = vxor.u32 %v2612, 2147483648
    %v2629 = vxor.u32 %v2613, 2147483648
    %v2630 = vxor.u32 %v2614, 2147483648
    %v2631 = vxor.u32 %v2615, 2147483648
    %v2632 = vxor.u32 %v2616, 2147483648
    %v2633 = vxor.u32 %v2617, 2147483648
    %v2634 = vxor.u32 %v2618, 2147483648
    %v2635 = vxor.u32 %v2619, 2147483648
    %v2636 = vxor.u32 %v2620, 2147483648
    %v2637 = vxor.u32 %v2621, 2147483648
    %v2638 = vxor.u32 %v2622, 2147483648
    %v2639 = vxor.u32 %v2623, 2147483648
    %v2640 = vxor.u32 %v2624, 2147483648
    %v2641 = vxor.u32 %v2625, 2147483648
    %v2642 = vmul.f32 %v2626, 1.442695
    %v2643 = vpow.pop %v2642
    %v2644 = vmul.f32 %v2627, 1.442695
    %v2645 = vpow.pop %v2644
    %v2646 = vmul.f32 %v2628, 1.442695
    %v2647 = vpow.pop %v2646
    %v2648 = vmul.f32 %v2629, 1.442695
    %v2649 = vpow.pop %v2648
    %v2650 = vmul.f32 %v2630, 1.442695
    %v2651 = vpow.pop %v2650
    %v2652 = vmul.f32 %v2631, 1.442695
    %v2653 = vpow.pop %v2652
    %v2654 = vmul.f32 %v2632, 1.442695
    %v2655 = vpow.pop %v2654
    %v2656 = vmul.f32 %v2633, 1.442695
    %v2657 = vpow.pop %v2656
    %v2658 = vmul.f32 %v2634, 1.442695
    %v2659 = vpow.pop %v2658
    %v2660 = vmul.f32 %v2635, 1.442695
    %v2661 = vpow.pop %v2660
    %v2662 = vmul.f32 %v2636, 1.442695
    %v2663 = vpow.pop %v2662
    %v2664 = vmul.f32 %v2637, 1.442695
    %v2665 = vpow.pop %v2664
    %v2666 = vmul.f32 %v2638, 1.442695
    %v2667 = vpow.pop %v2666
    %v2668 = vmul.f32 %v2639, 1.442695
    %v2669 = vpow.pop %v2668
    %v2670 = vmul.f32 %v2640, 1.442695
    %v2671 = vpow.pop %v2670
    %v2672 = vmul.f32 %v2641, 1.442695
    %v2673 = vpow.pop %v2672
    %v2674 = vadd.f32 %v2643, 1.0
    %v2675 = vadd.f32 %v2645, 1.0
    %v2676 = vadd.f32 %v2647, 1.0
    %v2677 = vadd.f32 %v2649, 1.0
    %v2678 = vadd.f32 %v2651, 1.0
    %v2679 = vadd.f32 %v2653, 1.0
    %v2680 = vadd.f32 %v2655, 1.0
    %v2681 = vadd.f32 %v2657, 1.0
    %v2682 = vadd.f32 %v2659, 1.0
    %v2683 = vadd.f32 %v2661, 1.0
    %v2684 = vadd.f32 %v2663, 1.0
    %v2685 = vadd.f32 %v2665, 1.0
    %v2686 = vadd.f32 %v2667, 1.0
    %v2687 = vadd.f32 %v2669, 1.0
    %v2688 = vadd.f32 %v2671, 1.0
    %v2689 = vadd.f32 %v2673, 1.0
    %v2690 = vrcp.pop %v2674
    %v2691 = vmul.f32 %v2674, %v2690
    %v2692 = vsub.f32 1.0, %v2691
    %v2693 = vmul.f32 %v2690, %v2692
    %v2694 = vadd.f32 %v2690, %v2693
    %vm2695 = vweird.f32 %v2674
    %vm2696 = vweird.f32 %v2690
    %vm2697 = vmor %vm2695, %vm2696
    %v2698 = vsel %vm2697, %v2690, %v2694
    %v2699 = vand.u32 2147483647, %v2674
    %vm2700 = vcmp.eq.f32.partialorder %v2699, 8.507059e+37
    %v2701 = vand.u32 %v2674, 2147483648
    %v2702 = vor.u32 1.1754944e-38, %v2701
    %v2703 = vsel %vm2700, %v2702, %v2698
    %v2704 = vmul.f32 1.0, %v2703
    %v2705 = vrcp.pop %v2675
    %v2706 = vmul.f32 %v2675, %v2705
    %v2707 = vsub.f32 1.0, %v2706
    %v2708 = vmul.f32 %v2705, %v2707
    %v2709 = vadd.f32 %v2705, %v2708
    %vm2710 = vweird.f32 %v2675
    %vm2711 = vweird.f32 %v2705
    %vm2712 = vmor %vm2710, %vm2711
    %v2713 = vsel %vm2712, %v2705, %v2709
    %v2714 = vand.u32 2147483647, %v2675
    %vm2715 = vcmp.eq.f32.partialorder %v2714, 8.507059e+37
    %v2716 = vand.u32 %v2675, 2147483648
    %v2717 = vor.u32 1.1754944e-38, %v2716
    %v2718 = vsel %vm2715, %v2717, %v2713
    %v2719 = vmul.f32 1.0, %v2718
    %v2720 = vrcp.pop %v2676
    %v2721 = vmul.f32 %v2676, %v2720
    %v2722 = vsub.f32 1.0, %v2721
    %v2723 = vmul.f32 %v2720, %v2722
    %v2724 = vadd.f32 %v2720, %v2723
    %vm2725 = vweird.f32 %v2676
    %vm2726 = vweird.f32 %v2720
    %vm2727 = vmor %vm2725, %vm2726
    %v2728 = vsel %vm2727, %v2720, %v2724
    %v2729 = vand.u32 2147483647, %v2676
    %vm2730 = vcmp.eq.f32.partialorder %v2729, 8.507059e+37
    %v2731 = vand.u32 %v2676, 2147483648
    %v2732 = vor.u32 1.1754944e-38, %v2731
    %v2733 = vsel %vm2730, %v2732, %v2728
    %v2734 = vmul.f32 1.0, %v2733
    %v2735 = vrcp.pop %v2677
    %v2736 = vmul.f32 %v2677, %v2735
    %v2737 = vsub.f32 1.0, %v2736
    %v2738 = vmul.f32 %v2735, %v2737
    %v2739 = vadd.f32 %v2735, %v2738
    %vm2740 = vweird.f32 %v2677
    %vm2741 = vweird.f32 %v2735
    %vm2742 = vmor %vm2740, %vm2741
    %v2743 = vsel %vm2742, %v2735, %v2739
    %v2744 = vand.u32 2147483647, %v2677
    %vm2745 = vcmp.eq.f32.partialorder %v2744, 8.507059e+37
    %v2746 = vand.u32 %v2677, 2147483648
    %v2747 = vor.u32 1.1754944e-38, %v2746
    %v2748 = vsel %vm2745, %v2747, %v2743
    %v2749 = vmul.f32 1.0, %v2748
    %v2750 = vrcp.pop %v2678
    %v2751 = vmul.f32 %v2678, %v2750
    %v2752 = vsub.f32 1.0, %v2751
    %v2753 = vmul.f32 %v2750, %v2752
    %v2754 = vadd.f32 %v2750, %v2753
    %vm2755 = vweird.f32 %v2678
    %vm2756 = vweird.f32 %v2750
    %vm2757 = vmor %vm2755, %vm2756
    %v2758 = vsel %vm2757, %v2750, %v2754
    %v2759 = vand.u32 2147483647, %v2678
    %vm2760 = vcmp.eq.f32.partialorder %v2759, 8.507059e+37
    %v2761 = vand.u32 %v2678, 2147483648
    %v2762 = vor.u32 1.1754944e-38, %v2761
    %v2763 = vsel %vm2760, %v2762, %v2758
    %v2764 = vmul.f32 1.0, %v2763
    %v2765 = vrcp.pop %v2679
    %v2766 = vmul.f32 %v2679, %v2765
    %v2767 = vsub.f32 1.0, %v2766
    %v2768 = vmul.f32 %v2765, %v2767
    %v2769 = vadd.f32 %v2765, %v2768
    %vm2770 = vweird.f32 %v2679
    %vm2771 = vweird.f32 %v2765
    %vm2772 = vmor %vm2770, %vm2771
    %v2773 = vsel %vm2772, %v2765, %v2769
    %v2774 = vand.u32 2147483647, %v2679
    %vm2775 = vcmp.eq.f32.partialorder %v2774, 8.507059e+37
    %v2776 = vand.u32 %v2679, 2147483648
    %v2777 = vor.u32 1.1754944e-38, %v2776
    %v2778 = vsel %vm2775, %v2777, %v2773
    %v2779 = vmul.f32 1.0, %v2778
    %v2780 = vrcp.pop %v2680
    %v2781 = vmul.f32 %v2680, %v2780
    %v2782 = vsub.f32 1.0, %v2781
    %v2783 = vmul.f32 %v2780, %v2782
    %v2784 = vadd.f32 %v2780, %v2783
    %vm2785 = vweird.f32 %v2680
    %vm2786 = vweird.f32 %v2780
    %vm2787 = vmor %vm2785, %vm2786
    %v2788 = vsel %vm2787, %v2780, %v2784
    %v2789 = vand.u32 2147483647, %v2680
    %vm2790 = vcmp.eq.f32.partialorder %v2789, 8.507059e+37
    %v2791 = vand.u32 %v2680, 2147483648
    %v2792 = vor.u32 1.1754944e-38, %v2791
    %v2793 = vsel %vm2790, %v2792, %v2788
    %v2794 = vmul.f32 1.0, %v2793
    %v2795 = vrcp.pop %v2681
    %v2796 = vmul.f32 %v2681, %v2795
    %v2797 = vsub.f32 1.0, %v2796
    %v2798 = vmul.f32 %v2795, %v2797
    %v2799 = vadd.f32 %v2795, %v2798
    %vm2800 = vweird.f32 %v2681
    %vm2801 = vweird.f32 %v2795
    %vm2802 = vmor %vm2800, %vm2801
    %v2803 = vsel %vm2802, %v2795, %v2799
    %v2804 = vand.u32 2147483647, %v2681
    %vm2805 = vcmp.eq.f32.partialorder %v2804, 8.507059e+37
    %v2806 = vand.u32 %v2681, 2147483648
    %v2807 = vor.u32 1.1754944e-38, %v2806
    %v2808 = vsel %vm2805, %v2807, %v2803
    %v2809 = vmul.f32 1.0, %v2808
    %v2810 = vrcp.pop %v2682
    %v2811 = vmul.f32 %v2682, %v2810
    %v2812 = vsub.f32 1.0, %v2811
    %v2813 = vmul.f32 %v2810, %v2812
    %v2814 = vadd.f32 %v2810, %v2813
    %vm2815 = vweird.f32 %v2682
    %vm2816 = vweird.f32 %v2810
    %vm2817 = vmor %vm2815, %vm2816
    %v2818 = vsel %vm2817, %v2810, %v2814
    %v2819 = vand.u32 2147483647, %v2682
    %vm2820 = vcmp.eq.f32.partialorder %v2819, 8.507059e+37
    %v2821 = vand.u32 %v2682, 2147483648
    %v2822 = vor.u32 1.1754944e-38, %v2821
    %v2823 = vsel %vm2820, %v2822, %v2818
    %v2824 = vmul.f32 1.0, %v2823
    %v2825 = vrcp.pop %v2683
    %v2826 = vmul.f32 %v2683, %v2825
    %v2827 = vsub.f32 1.0, %v2826
    %v2828 = vmul.f32 %v2825, %v2827
    %v2829 = vadd.f32 %v2825, %v2828
    %vm2830 = vweird.f32 %v2683
    %vm2831 = vweird.f32 %v2825
    %vm2832 = vmor %vm2830, %vm2831
    %v2833 = vsel %vm2832, %v2825, %v2829
    %v2834 = vand.u32 2147483647, %v2683
    %vm2835 = vcmp.eq.f32.partialorder %v2834, 8.507059e+37
    %v2836 = vand.u32 %v2683, 2147483648
    %v2837 = vor.u32 1.1754944e-38, %v2836
    %v2838 = vsel %vm2835, %v2837, %v2833
    %v2839 = vmul.f32 1.0, %v2838
    %v2840 = vrcp.pop %v2684
    %v2841 = vmul.f32 %v2684, %v2840
    %v2842 = vsub.f32 1.0, %v2841
    %v2843 = vmul.f32 %v2840, %v2842
    %v2844 = vadd.f32 %v2840, %v2843
    %vm2845 = vweird.f32 %v2684
    %vm2846 = vweird.f32 %v2840
    %vm2847 = vmor %vm2845, %vm2846
    %v2848 = vsel %vm2847, %v2840, %v2844
    %v2849 = vand.u32 2147483647, %v2684
    %vm2850 = vcmp.eq.f32.partialorder %v2849, 8.507059e+37
    %v2851 = vand.u32 %v2684, 2147483648
    %v2852 = vor.u32 1.1754944e-38, %v2851
    %v2853 = vsel %vm2850, %v2852, %v2848
    %v2854 = vmul.f32 1.0, %v2853
    %v2855 = vrcp.pop %v2685
    %v2856 = vmul.f32 %v2685, %v2855
    %v2857 = vsub.f32 1.0, %v2856
    %v2858 = vmul.f32 %v2855, %v2857
    %v2859 = vadd.f32 %v2855, %v2858
    %vm2860 = vweird.f32 %v2685
    %vm2861 = vweird.f32 %v2855
    %vm2862 = vmor %vm2860, %vm2861
    %v2863 = vsel %vm2862, %v2855, %v2859
    %v2864 = vand.u32 2147483647, %v2685
    %vm2865 = vcmp.eq.f32.partialorder %v2864, 8.507059e+37
    %v2866 = vand.u32 %v2685, 2147483648
    %v2867 = vor.u32 1.1754944e-38, %v2866
    %v2868 = vsel %vm2865, %v2867, %v2863
    %v2869 = vmul.f32 1.0, %v2868
    %v2870 = vrcp.pop %v2686
    %v2871 = vmul.f32 %v2686, %v2870
    %v2872 = vsub.f32 1.0, %v2871
    %v2873 = vmul.f32 %v2870, %v2872
    %v2874 = vadd.f32 %v2870, %v2873
    %vm2875 = vweird.f32 %v2686
    %vm2876 = vweird.f32 %v2870
    %vm2877 = vmor %vm2875, %vm2876
    %v2878 = vsel %vm2877, %v2870, %v2874
    %v2879 = vand.u32 2147483647, %v2686
    %vm2880 = vcmp.eq.f32.partialorder %v2879, 8.507059e+37
    %v2881 = vand.u32 %v2686, 2147483648
    %v2882 = vor.u32 1.1754944e-38, %v2881
    %v2883 = vsel %vm2880, %v2882, %v2878
    %v2884 = vmul.f32 1.0, %v2883
    %v2885 = vrcp.pop %v2687
    %v2886 = vmul.f32 %v2687, %v2885
    %v2887 = vsub.f32 1.0, %v2886
    %v2888 = vmul.f32 %v2885, %v2887
    %v2889 = vadd.f32 %v2885, %v2888
    %vm2890 = vweird.f32 %v2687
    %vm2891 = vweird.f32 %v2885
    %vm2892 = vmor %vm2890, %vm2891
    %v2893 = vsel %vm2892, %v2885, %v2889
    %v2894 = vand.u32 2147483647, %v2687
    %vm2895 = vcmp.eq.f32.partialorder %v2894, 8.507059e+37
    %v2896 = vand.u32 %v2687, 2147483648
    %v2897 = vor.u32 1.1754944e-38, %v2896
    %v2898 = vsel %vm2895, %v2897, %v2893
    %v2899 = vmul.f32 1.0, %v2898
    %v2900 = vrcp.pop %v2688
    %v2901 = vmul.f32 %v2688, %v2900
    %v2902 = vsub.f32 1.0, %v2901
    %v2903 = vmul.f32 %v2900, %v2902
    %v2904 = vadd.f32 %v2900, %v2903
    %vm2905 = vweird.f32 %v2688
    %vm2906 = vweird.f32 %v2900
    %vm2907 = vmor %vm2905, %vm2906
    %v2908 = vsel %vm2907, %v2900, %v2904
    %v2909 = vand.u32 2147483647, %v2688
    %vm2910 = vcmp.eq.f32.partialorder %v2909, 8.507059e+37
    %v2911 = vand.u32 %v2688, 2147483648
    %v2912 = vor.u32 1.1754944e-38, %v2911
    %v2913 = vsel %vm2910, %v2912, %v2908
    %v2914 = vmul.f32 1.0, %v2913
    %v2915 = vrcp.pop %v2689
    %v2916 = vmul.f32 %v2689, %v2915
    %v2917 = vsub.f32 1.0, %v2916
    %v2918 = vmul.f32 %v2915, %v2917
    %v2919 = vadd.f32 %v2915, %v2918
    %vm2920 = vweird.f32 %v2689
    %vm2921 = vweird.f32 %v2915
    %vm2922 = vmor %vm2920, %vm2921
    %v2923 = vsel %vm2922, %v2915, %v2919
    %v2924 = vand.u32 2147483647, %v2689
    %vm2925 = vcmp.eq.f32.partialorder %v2924, 8.507059e+37
    %v2926 = vand.u32 %v2689, 2147483648
    %v2927 = vor.u32 1.1754944e-38, %v2926
    %v2928 = vsel %vm2925, %v2927, %v2923
    %v2929 = vmul.f32 1.0, %v2928
    %v2930 = vmul.f32 %v2610, %v2704
    %v2931 = vmul.f32 %v2611, %v2719
    %v2932 = vmul.f32 %v2612, %v2734
    %v2933 = vmul.f32 %v2613, %v2749
    %v2934 = vmul.f32 %v2614, %v2764
    %v2935 = vmul.f32 %v2615, %v2779
    %v2936 = vmul.f32 %v2616, %v2794
    %v2937 = vmul.f32 %v2617, %v2809
    %v2938 = vmul.f32 %v2618, %v2824
    %v2939 = vmul.f32 %v2619, %v2839
    %v2940 = vmul.f32 %v2620, %v2854
    %v2941 = vmul.f32 %v2621, %v2869
    %v2942 = vmul.f32 %v2622, %v2884
    %v2943 = vmul.f32 %v2623, %v2899
    %v2944 = vmul.f32 %v2624, %v2914
    %v2945 = vmul.f32 %v2625, %v2929
    %v2946 = vpack.c.bf16 %v2931, %v2930
    %v2947 = vpack.c.bf16 %v2933, %v2932
    %v2948 = vpack.c.bf16 %v2935, %v2934
    %v2949 = vpack.c.bf16 %v2937, %v2936
    %v2950 = vpack.c.bf16 %v2939, %v2938
    %v2951 = vpack.c.bf16 %v2941, %v2940
    %v2952 = vpack.c.bf16 %v2943, %v2942
    %v2953 = vpack.c.bf16 %v2945, %v2944
    %v2954 = vld [vmem:[%s15] sm:$0xf]
    %v2955 = vld [vmem:[%s15 + $0x4] sm:$0xf]
    %v2956 = vld [vmem:[%s16] sm:$0x1]
    %v2958 = vperm.slane %v2956, 0
    %v2962 = vunpack.c.l.b16 %v2954
    %v2963 = vunpack.c.l.b16 %v2955
    %v2964 = vpack.c.b16 %v2963, %v2962
    %v2967 = vsel %vm832, %v2946, 0
    %v2970 = vsel %vm832, %v2947, 0
    %v2973 = vsel %vm832, %v2948, 0
    %v2976 = vsel %vm832, %v2949, 0
    %v2979 = vsel %vm832, %v2950, 0
    %v2982 = vsel %vm832, %v2951, 0
    %v2985 = vsel %vm832, %v2952, 0
    %v2988 = vsel %vm832, %v2953, 0
    %2990 = vmatpush.bf16.msra.mxu0 0
    %2991 = vmatpush.bf16.msra.mxu0 0
    %2992 = vmatpush.bf16.msra.mxu0 0
    %2993 = vmatpush.bf16.msra.mxu0 0
    %2994 = vmatpush.bf16.msra.mxu0 0
    %2995 = vmatpush.bf16.msra.mxu0 0
    %2996 = vmatpush.bf16.msra.mxu0 0
    %2997 = vmatpush.bf16.msra.mxu0 %v2964
    %2998 = vmatmul.bf16.gmra.mxu0 %v2967
    %v2999 = vpop.f32.mrf.mxu0
    %v3000 = vadd.f32 %v2958, %v2999
    %v3001 = vpop.f32.mrf.mxu0
    %v3002 = vadd.f32 %v2958, %v3001
    %3003 = vmatmul.bf16.gmra.mxu0 %v2970
    %v3004 = vpop.f32.mrf.mxu0
    %v3005 = vadd.f32 %v2958, %v3004
    %v3006 = vpop.f32.mrf.mxu0
    %v3007 = vadd.f32 %v2958, %v3006
    %3008 = vmatmul.bf16.gmra.mxu0 %v2973
    %v3009 = vpop.f32.mrf.mxu0
    %v3010 = vadd.f32 %v2958, %v3009
    %v3011 = vpop.f32.mrf.mxu0
    %v3012 = vadd.f32 %v2958, %v3011
    %3013 = vmatmul.bf16.gmra.mxu0 %v2976
    %v3014 = vpop.f32.mrf.mxu0
    %v3015 = vadd.f32 %v2958, %v3014
    %v3016 = vpop.f32.mrf.mxu0
    %v3017 = vadd.f32 %v2958, %v3016
    %3018 = vmatmul.bf16.gmra.mxu0 %v2979
    %v3019 = vpop.f32.mrf.mxu0
    %v3020 = vadd.f32 %v2958, %v3019
    %v3021 = vpop.f32.mrf.mxu0
    %v3022 = vadd.f32 %v2958, %v3021
    %3023 = vmatmul.bf16.gmra.mxu0 %v2982
    %v3024 = vpop.f32.mrf.mxu0
    %v3025 = vadd.f32 %v2958, %v3024
    %v3026 = vpop.f32.mrf.mxu0
    %v3027 = vadd.f32 %v2958, %v3026
    %3028 = vmatmul.bf16.gmra.mxu0 %v2985
    %v3029 = vpop.f32.mrf.mxu0
    %v3030 = vadd.f32 %v2958, %v3029
    %v3031 = vpop.f32.mrf.mxu0
    %v3032 = vadd.f32 %v2958, %v3031
    %3033 = vmatmul.bf16.gmra.mxu0 %v2988
    %v3034 = vpop.f32.mrf.mxu0
    %v3035 = vadd.f32 %v2958, %v3034
    %v3036 = vpop.f32.mrf.mxu0
    %v3037 = vadd.f32 %v2958, %v3036
    %3038 = vdwg.mxu0
    %v3039 = vmul.f32 %v3000, %v2026
    %v3040 = vmul.f32 %v3002, %v2028
    %v3041 = vmul.f32 %v3005, %v2031
    %v3042 = vmul.f32 %v3007, %v2033
    %v3043 = vmul.f32 %v3010, %v2036
    %v3044 = vmul.f32 %v3012, %v2038
    %v3045 = vmul.f32 %v3015, %v2041
    %v3046 = vmul.f32 %v3017, %v2043
    %v3047 = vmul.f32 %v3020, %v2046
    %v3048 = vmul.f32 %v3022, %v2048
    %v3049 = vmul.f32 %v3025, %v2051
    %v3050 = vmul.f32 %v3027, %v2053
    %v3051 = vmul.f32 %v3030, %v2056
    %v3052 = vmul.f32 %v3032, %v2058
    %v3053 = vmul.f32 %v3035, %v2061
    %v3054 = vmul.f32 %v3037, %v2063
    %v3055 = vmul.f32 %v3000, %v2066
    %v3056 = vmul.f32 %v3002, %v2068
    %v3057 = vmul.f32 %v3005, %v2071
    %v3058 = vmul.f32 %v3007, %v2073
    %v3059 = vmul.f32 %v3010, %v2076
    %v3060 = vmul.f32 %v3012, %v2078
    %v3061 = vmul.f32 %v3015, %v2081
    %v3062 = vmul.f32 %v3017, %v2083
    %v3063 = vmul.f32 %v3020, %v2086
    %v3064 = vmul.f32 %v3022, %v2088
    %v3065 = vmul.f32 %v3025, %v2091
    %v3066 = vmul.f32 %v3027, %v2093
    %v3067 = vmul.f32 %v3030, %v2096
    %v3068 = vmul.f32 %v3032, %v2098
    %v3069 = vmul.f32 %v3035, %v2101
    %v3070 = vmul.f32 %v3037, %v2103
    %v3071 = vmul.f32 %v3000, %v2106
    %v3072 = vmul.f32 %v3002, %v2108
    %v3073 = vmul.f32 %v3005, %v2111
    %v3074 = vmul.f32 %v3007, %v2113
    %v3075 = vmul.f32 %v3010, %v2116
    %v3076 = vmul.f32 %v3012, %v2118
    %v3077 = vmul.f32 %v3015, %v2121
    %v3078 = vmul.f32 %v3017, %v2123
    %v3079 = vmul.f32 %v3020, %v2126
    %v3080 = vmul.f32 %v3022, %v2128
    %v3081 = vmul.f32 %v3025, %v2131
    %v3082 = vmul.f32 %v3027, %v2133
    %v3083 = vmul.f32 %v3030, %v2136
    %v3084 = vmul.f32 %v3032, %v2138
    %v3085 = vmul.f32 %v3035, %v2141
    %v3086 = vmul.f32 %v3037, %v2143
    %v3087 = vld [vmem:[%s113] sm:$0xff]
    %v3088 = vld [vmem:[%s113 + $0x8] sm:$0xff]
    %v3089 = vld [vmem:[%s113 + $0x10] sm:$0xff]
    %v3090 = vld [vmem:[%s113 + $0x18] sm:$0xff]
    %v3091 = vld [vmem:[%s113 + $0x20] sm:$0xff]
    %v3092 = vld [vmem:[%s113 + $0x28] sm:$0xff]
    %v3093 = vld [vmem:[%s113 + $0x30] sm:$0xff]
    %v3094 = vld [vmem:[%s113 + $0x38] sm:$0xff]
    %v3095 = vld [vmem:[%s113 + $0x40] sm:$0xff]
    %v3096 = vld [vmem:[%s113 + $0x48] sm:$0xff]
    %v3097 = vld [vmem:[%s113 + $0x50] sm:$0xff]
    %v3098 = vld [vmem:[%s113 + $0x58] sm:$0xff]
    %v3099 = vld [vmem:[%s113 + $0x60] sm:$0xff]
    %v3100 = vld [vmem:[%s113 + $0x68] sm:$0xff]
    %v3101 = vld [vmem:[%s113 + $0x70] sm:$0xff]
    %v3102 = vld [vmem:[%s113 + $0x78] sm:$0xff]
    %v3103 = vld [vmem:[%s4] sm:$0xff]
    %3105 = vset.pattern.permute.xlu0 1
    %3106 = vperm.xlu0 %3105, %v3039
    %v3107 = vpop.permute.xlu0 %3106
    %3110 = vset.pattern.permute.xlu0 1
    %3111 = vperm.xlu0 %3110, %v3040
    %v3112 = vpop.permute.xlu0 %3111
    %3115 = vset.pattern.permute.xlu0 1
    %3116 = vperm.xlu0 %3115, %v3041
    %v3117 = vpop.permute.xlu0 %3116
    %3120 = vset.pattern.permute.xlu0 1
    %3121 = vperm.xlu0 %3120, %v3042
    %v3122 = vpop.permute.xlu0 %3121
    %3125 = vset.pattern.permute.xlu0 1
    %3126 = vperm.xlu0 %3125, %v3043
    %v3127 = vpop.permute.xlu0 %3126
    %3130 = vset.pattern.permute.xlu0 1
    %3131 = vperm.xlu0 %3130, %v3044
    %v3132 = vpop.permute.xlu0 %3131
    %3135 = vset.pattern.permute.xlu0 1
    %3136 = vperm.xlu0 %3135, %v3045
    %v3137 = vpop.permute.xlu0 %3136
    %3140 = vset.pattern.permute.xlu0 1
    %3141 = vperm.xlu0 %3140, %v3046
    %v3142 = vpop.permute.xlu0 %3141
    %3145 = vset.pattern.permute.xlu0 1
    %3146 = vperm.xlu0 %3145, %v3047
    %v3147 = vpop.permute.xlu0 %3146
    %3150 = vset.pattern.permute.xlu0 1
    %3151 = vperm.xlu0 %3150, %v3048
    %v3152 = vpop.permute.xlu0 %3151
    %3155 = vset.pattern.permute.xlu0 1
    %3156 = vperm.xlu0 %3155, %v3049
    %v3157 = vpop.permute.xlu0 %3156
    %3160 = vset.pattern.permute.xlu0 1
    %3161 = vperm.xlu0 %3160, %v3050
    %v3162 = vpop.permute.xlu0 %3161
    %3165 = vset.pattern.permute.xlu0 1
    %3166 = vperm.xlu0 %3165, %v3051
    %v3167 = vpop.permute.xlu0 %3166
    %3170 = vset.pattern.permute.xlu0 1
    %3171 = vperm.xlu0 %3170, %v3052
    %v3172 = vpop.permute.xlu0 %3171
    %3175 = vset.pattern.permute.xlu0 1
    %3176 = vperm.xlu0 %3175, %v3053
    %v3177 = vpop.permute.xlu0 %3176
    %3180 = vset.pattern.permute.xlu0 1
    %3181 = vperm.xlu0 %3180, %v3054
    %v3182 = vpop.permute.xlu0 %3181
    %v3184 = vperm.slane %v3103, 0
    %v3185 = vmul.f32 %v3107, %v3184
    %v3186 = vmul.f32 %v3112, %v3184
    %v3187 = vmul.f32 %v3117, %v3184
    %v3188 = vmul.f32 %v3122, %v3184
    %v3189 = vmul.f32 %v3127, %v3184
    %v3190 = vmul.f32 %v3132, %v3184
    %v3191 = vmul.f32 %v3137, %v3184
    %v3192 = vmul.f32 %v3142, %v3184
    %v3193 = vmul.f32 %v3147, %v3184
    %v3194 = vmul.f32 %v3152, %v3184
    %v3195 = vmul.f32 %v3157, %v3184
    %v3196 = vmul.f32 %v3162, %v3184
    %v3197 = vmul.f32 %v3167, %v3184
    %v3198 = vmul.f32 %v3172, %v3184
    %v3199 = vmul.f32 %v3177, %v3184
    %v3200 = vmul.f32 %v3182, %v3184
    %3202 = vset.pattern.permute.xlu0 1
    %3203 = vperm.xlu0 %3202, %v3055
    %v3204 = vpop.permute.xlu0 %3203
    %3207 = vset.pattern.permute.xlu0 1
    %3208 = vperm.xlu0 %3207, %v3056
    %v3209 = vpop.permute.xlu0 %3208
    %3212 = vset.pattern.permute.xlu0 1
    %3213 = vperm.xlu0 %3212, %v3057
    %v3214 = vpop.permute.xlu0 %3213
    %3217 = vset.pattern.permute.xlu0 1
    %3218 = vperm.xlu0 %3217, %v3058
    %v3219 = vpop.permute.xlu0 %3218
    %3222 = vset.pattern.permute.xlu0 1
    %3223 = vperm.xlu0 %3222, %v3059
    %v3224 = vpop.permute.xlu0 %3223
    %3227 = vset.pattern.permute.xlu0 1
    %3228 = vperm.xlu0 %3227, %v3060
    %v3229 = vpop.permute.xlu0 %3228
    %3232 = vset.pattern.permute.xlu0 1
    %3233 = vperm.xlu0 %3232, %v3061
    %v3234 = vpop.permute.xlu0 %3233
    %3237 = vset.pattern.permute.xlu0 1
    %3238 = vperm.xlu0 %3237, %v3062
    %v3239 = vpop.permute.xlu0 %3238
    %3242 = vset.pattern.permute.xlu0 1
    %3243 = vperm.xlu0 %3242, %v3063
    %v3244 = vpop.permute.xlu0 %3243
    %3247 = vset.pattern.permute.xlu0 1
    %3248 = vperm.xlu0 %3247, %v3064
    %v3249 = vpop.permute.xlu0 %3248
    %3252 = vset.pattern.permute.xlu0 1
    %3253 = vperm.xlu0 %3252, %v3065
    %v3254 = vpop.permute.xlu0 %3253
    %3257 = vset.pattern.permute.xlu0 1
    %3258 = vperm.xlu0 %3257, %v3066
    %v3259 = vpop.permute.xlu0 %3258
    %3262 = vset.pattern.permute.xlu0 1
    %3263 = vperm.xlu0 %3262, %v3067
    %v3264 = vpop.permute.xlu0 %3263
    %3267 = vset.pattern.permute.xlu0 1
    %3268 = vperm.xlu0 %3267, %v3068
    %v3269 = vpop.permute.xlu0 %3268
    %3272 = vset.pattern.permute.xlu0 1
    %3273 = vperm.xlu0 %3272, %v3069
    %v3274 = vpop.permute.xlu0 %3273
    %3277 = vset.pattern.permute.xlu0 1
    %3278 = vperm.xlu0 %3277, %v3070
    %v3279 = vpop.permute.xlu0 %3278
    %v3281 = vperm.slane %v3103, 1
    %v3282 = vmul.f32 %v3204, %v3281
    %v3283 = vmul.f32 %v3209, %v3281
    %v3284 = vmul.f32 %v3214, %v3281
    %v3285 = vmul.f32 %v3219, %v3281
    %v3286 = vmul.f32 %v3224, %v3281
    %v3287 = vmul.f32 %v3229, %v3281
    %v3288 = vmul.f32 %v3234, %v3281
    %v3289 = vmul.f32 %v3239, %v3281
    %v3290 = vmul.f32 %v3244, %v3281
    %v3291 = vmul.f32 %v3249, %v3281
    %v3292 = vmul.f32 %v3254, %v3281
    %v3293 = vmul.f32 %v3259, %v3281
    %v3294 = vmul.f32 %v3264, %v3281
    %v3295 = vmul.f32 %v3269, %v3281
    %v3296 = vmul.f32 %v3274, %v3281
    %v3297 = vmul.f32 %v3279, %v3281
    %v3298 = vadd.f32 %v3185, %v3282
    %v3299 = vadd.f32 %v3186, %v3283
    %v3300 = vadd.f32 %v3187, %v3284
    %v3301 = vadd.f32 %v3188, %v3285
    %v3302 = vadd.f32 %v3189, %v3286
    %v3303 = vadd.f32 %v3190, %v3287
    %v3304 = vadd.f32 %v3191, %v3288
    %v3305 = vadd.f32 %v3192, %v3289
    %v3306 = vadd.f32 %v3193, %v3290
    %v3307 = vadd.f32 %v3194, %v3291
    %v3308 = vadd.f32 %v3195, %v3292
    %v3309 = vadd.f32 %v3196, %v3293
    %v3310 = vadd.f32 %v3197, %v3294
    %v3311 = vadd.f32 %v3198, %v3295
    %v3312 = vadd.f32 %v3199, %v3296
    %v3313 = vadd.f32 %v3200, %v3297
    %3315 = vset.pattern.permute.xlu0 1
    %3316 = vperm.xlu0 %3315, %v3071
    %v3317 = vpop.permute.xlu0 %3316
    %3320 = vset.pattern.permute.xlu0 1
    %3321 = vperm.xlu0 %3320, %v3072
    %v3322 = vpop.permute.xlu0 %3321
    %3325 = vset.pattern.permute.xlu0 1
    %3326 = vperm.xlu0 %3325, %v3073
    %v3327 = vpop.permute.xlu0 %3326
    %3330 = vset.pattern.permute.xlu0 1
    %3331 = vperm.xlu0 %3330, %v3074
    %v3332 = vpop.permute.xlu0 %3331
    %3335 = vset.pattern.permute.xlu0 1
    %3336 = vperm.xlu0 %3335, %v3075
    %v3337 = vpop.permute.xlu0 %3336
    %3340 = vset.pattern.permute.xlu0 1
    %3341 = vperm.xlu0 %3340, %v3076
    %v3342 = vpop.permute.xlu0 %3341
    %3345 = vset.pattern.permute.xlu0 1
    %3346 = vperm.xlu0 %3345, %v3077
    %v3347 = vpop.permute.xlu0 %3346
    %3350 = vset.pattern.permute.xlu0 1
    %3351 = vperm.xlu0 %3350, %v3078
    %v3352 = vpop.permute.xlu0 %3351
    %3355 = vset.pattern.permute.xlu0 1
    %3356 = vperm.xlu0 %3355, %v3079
    %v3357 = vpop.permute.xlu0 %3356
    %3360 = vset.pattern.permute.xlu0 1
    %3361 = vperm.xlu0 %3360, %v3080
    %v3362 = vpop.permute.xlu0 %3361
    %3365 = vset.pattern.permute.xlu0 1
    %3366 = vperm.xlu0 %3365, %v3081
    %v3367 = vpop.permute.xlu0 %3366
    %3370 = vset.pattern.permute.xlu0 1
    %3371 = vperm.xlu0 %3370, %v3082
    %v3372 = vpop.permute.xlu0 %3371
    %3375 = vset.pattern.permute.xlu0 1
    %3376 = vperm.xlu0 %3375, %v3083
    %v3377 = vpop.permute.xlu0 %3376
    %3380 = vset.pattern.permute.xlu0 1
    %3381 = vperm.xlu0 %3380, %v3084
    %v3382 = vpop.permute.xlu0 %3381
    %3385 = vset.pattern.permute.xlu0 1
    %3386 = vperm.xlu0 %3385, %v3085
    %v3387 = vpop.permute.xlu0 %3386
    %3390 = vset.pattern.permute.xlu0 1
    %3391 = vperm.xlu0 %3390, %v3086
    %v3392 = vpop.permute.xlu0 %3391
    %v3394 = vperm.slane %v3103, 2
    %v3395 = vmul.f32 %v3317, %v3394
    %v3396 = vmul.f32 %v3322, %v3394
    %v3397 = vmul.f32 %v3327, %v3394
    %v3398 = vmul.f32 %v3332, %v3394
    %v3399 = vmul.f32 %v3337, %v3394
    %v3400 = vmul.f32 %v3342, %v3394
    %v3401 = vmul.f32 %v3347, %v3394
    %v3402 = vmul.f32 %v3352, %v3394
    %v3403 = vmul.f32 %v3357, %v3394
    %v3404 = vmul.f32 %v3362, %v3394
    %v3405 = vmul.f32 %v3367, %v3394
    %v3406 = vmul.f32 %v3372, %v3394
    %v3407 = vmul.f32 %v3377, %v3394
    %v3408 = vmul.f32 %v3382, %v3394
    %v3409 = vmul.f32 %v3387, %v3394
    %v3410 = vmul.f32 %v3392, %v3394
    %v3411 = vadd.f32 %v3298, %v3395
    %v3412 = vadd.f32 %v3299, %v3396
    %v3413 = vadd.f32 %v3300, %v3397
    %v3414 = vadd.f32 %v3301, %v3398
    %v3415 = vadd.f32 %v3302, %v3399
    %v3416 = vadd.f32 %v3303, %v3400
    %v3417 = vadd.f32 %v3304, %v3401
    %v3418 = vadd.f32 %v3305, %v3402
    %v3419 = vadd.f32 %v3306, %v3403
    %v3420 = vadd.f32 %v3307, %v3404
    %v3421 = vadd.f32 %v3308, %v3405
    %v3422 = vadd.f32 %v3309, %v3406
    %v3423 = vadd.f32 %v3310, %v3407
    %v3424 = vadd.f32 %v3311, %v3408
    %v3425 = vadd.f32 %v3312, %v3409
    %v3426 = vadd.f32 %v3313, %v3410
    %v3427 = vperm.slane %v3103, 3
    %v3428 = vmul.f32 %v3107, %v3427
    %v3429 = vmul.f32 %v3112, %v3427
    %v3430 = vmul.f32 %v3117, %v3427
    %v3431 = vmul.f32 %v3122, %v3427
    %v3432 = vmul.f32 %v3127, %v3427
    %v3433 = vmul.f32 %v3132, %v3427
    %v3434 = vmul.f32 %v3137, %v3427
    %v3435 = vmul.f32 %v3142, %v3427
    %v3436 = vmul.f32 %v3147, %v3427
    %v3437 = vmul.f32 %v3152, %v3427
    %v3438 = vmul.f32 %v3157, %v3427
    %v3439 = vmul.f32 %v3162, %v3427
    %v3440 = vmul.f32 %v3167, %v3427
    %v3441 = vmul.f32 %v3172, %v3427
    %v3442 = vmul.f32 %v3177, %v3427
    %v3443 = vmul.f32 %v3182, %v3427
    %v3444 = vperm.slane %v3103, 4
    %v3445 = vmul.f32 %v3204, %v3444
    %v3446 = vmul.f32 %v3209, %v3444
    %v3447 = vmul.f32 %v3214, %v3444
    %v3448 = vmul.f32 %v3219, %v3444
    %v3449 = vmul.f32 %v3224, %v3444
    %v3450 = vmul.f32 %v3229, %v3444
    %v3451 = vmul.f32 %v3234, %v3444
    %v3452 = vmul.f32 %v3239, %v3444
    %v3453 = vmul.f32 %v3244, %v3444
    %v3454 = vmul.f32 %v3249, %v3444
    %v3455 = vmul.f32 %v3254, %v3444
    %v3456 = vmul.f32 %v3259, %v3444
    %v3457 = vmul.f32 %v3264, %v3444
    %v3458 = vmul.f32 %v3269, %v3444
    %v3459 = vmul.f32 %v3274, %v3444
    %v3460 = vmul.f32 %v3279, %v3444
    %v3461 = vadd.f32 %v3428, %v3445
    %v3462 = vadd.f32 %v3429, %v3446
    %v3463 = vadd.f32 %v3430, %v3447
    %v3464 = vadd.f32 %v3431, %v3448
    %v3465 = vadd.f32 %v3432, %v3449
    %v3466 = vadd.f32 %v3433, %v3450
    %v3467 = vadd.f32 %v3434, %v3451
    %v3468 = vadd.f32 %v3435, %v3452
    %v3469 = vadd.f32 %v3436, %v3453
    %v3470 = vadd.f32 %v3437, %v3454
    %v3471 = vadd.f32 %v3438, %v3455
    %v3472 = vadd.f32 %v3439, %v3456
    %v3473 = vadd.f32 %v3440, %v3457
    %v3474 = vadd.f32 %v3441, %v3458
    %v3475 = vadd.f32 %v3442, %v3459
    %v3476 = vadd.f32 %v3443, %v3460
    %v3477 = vperm.slane %v3103, 5
    %v3478 = vmul.f32 %v3317, %v3477
    %v3479 = vmul.f32 %v3322, %v3477
    %v3480 = vmul.f32 %v3327, %v3477
    %v3481 = vmul.f32 %v3332, %v3477
    %v3482 = vmul.f32 %v3337, %v3477
    %v3483 = vmul.f32 %v3342, %v3477
    %v3484 = vmul.f32 %v3347, %v3477
    %v3485 = vmul.f32 %v3352, %v3477
    %v3486 = vmul.f32 %v3357, %v3477
    %v3487 = vmul.f32 %v3362, %v3477
    %v3488 = vmul.f32 %v3367, %v3477
    %v3489 = vmul.f32 %v3372, %v3477
    %v3490 = vmul.f32 %v3377, %v3477
    %v3491 = vmul.f32 %v3382, %v3477
    %v3492 = vmul.f32 %v3387, %v3477
    %v3493 = vmul.f32 %v3392, %v3477
    %v3494 = vadd.f32 %v3461, %v3478
    %v3495 = vadd.f32 %v3462, %v3479
    %v3496 = vadd.f32 %v3463, %v3480
    %v3497 = vadd.f32 %v3464, %v3481
    %v3498 = vadd.f32 %v3465, %v3482
    %v3499 = vadd.f32 %v3466, %v3483
    %v3500 = vadd.f32 %v3467, %v3484
    %v3501 = vadd.f32 %v3468, %v3485
    %v3502 = vadd.f32 %v3469, %v3486
    %v3503 = vadd.f32 %v3470, %v3487
    %v3504 = vadd.f32 %v3471, %v3488
    %v3505 = vadd.f32 %v3472, %v3489
    %v3506 = vadd.f32 %v3473, %v3490
    %v3507 = vadd.f32 %v3474, %v3491
    %v3508 = vadd.f32 %v3475, %v3492
    %v3509 = vadd.f32 %v3476, %v3493
    %3511 = vset.pattern.permute.xlu0 0
    %3512 = vperm.xlu0 %3511, %v3087
    %v3513 = vpop.permute.xlu0 %3512
    %3516 = vset.pattern.permute.xlu0 0
    %3517 = vperm.xlu0 %3516, %v3088
    %v3518 = vpop.permute.xlu0 %3517
    %3521 = vset.pattern.permute.xlu0 0
    %3522 = vperm.xlu0 %3521, %v3089
    %v3523 = vpop.permute.xlu0 %3522
    %3526 = vset.pattern.permute.xlu0 0
    %3527 = vperm.xlu0 %3526, %v3090
    %v3528 = vpop.permute.xlu0 %3527
    %3531 = vset.pattern.permute.xlu0 0
    %3532 = vperm.xlu0 %3531, %v3091
    %v3533 = vpop.permute.xlu0 %3532
    %3536 = vset.pattern.permute.xlu0 0
    %3537 = vperm.xlu0 %3536, %v3092
    %v3538 = vpop.permute.xlu0 %3537
    %3541 = vset.pattern.permute.xlu0 0
    %3542 = vperm.xlu0 %3541, %v3093
    %v3543 = vpop.permute.xlu0 %3542
    %3546 = vset.pattern.permute.xlu0 0
    %3547 = vperm.xlu0 %3546, %v3094
    %v3548 = vpop.permute.xlu0 %3547
    %3551 = vset.pattern.permute.xlu0 0
    %3552 = vperm.xlu0 %3551, %v3095
    %v3553 = vpop.permute.xlu0 %3552
    %3556 = vset.pattern.permute.xlu0 0
    %3557 = vperm.xlu0 %3556, %v3096
    %v3558 = vpop.permute.xlu0 %3557
    %3561 = vset.pattern.permute.xlu0 0
    %3562 = vperm.xlu0 %3561, %v3097
    %v3563 = vpop.permute.xlu0 %3562
    %3566 = vset.pattern.permute.xlu0 0
    %3567 = vperm.xlu0 %3566, %v3098
    %v3568 = vpop.permute.xlu0 %3567
    %3571 = vset.pattern.permute.xlu0 0
    %3572 = vperm.xlu0 %3571, %v3099
    %v3573 = vpop.permute.xlu0 %3572
    %3576 = vset.pattern.permute.xlu0 0
    %3577 = vperm.xlu0 %3576, %v3100
    %v3578 = vpop.permute.xlu0 %3577
    %3581 = vset.pattern.permute.xlu0 0
    %3582 = vperm.xlu0 %3581, %v3101
    %v3583 = vpop.permute.xlu0 %3582
    %3586 = vset.pattern.permute.xlu0 0
    %3587 = vperm.xlu0 %3586, %v3102
    %v3588 = vpop.permute.xlu0 %3587
    %v3590 = vmul.f32 %v3513, %v3184
    %v3591 = vmul.f32 %v3518, %v3184
    %v3592 = vmul.f32 %v3523, %v3184
    %v3593 = vmul.f32 %v3528, %v3184
    %v3594 = vmul.f32 %v3533, %v3184
    %v3595 = vmul.f32 %v3538, %v3184
    %v3596 = vmul.f32 %v3543, %v3184
    %v3597 = vmul.f32 %v3548, %v3184
    %v3598 = vmul.f32 %v3553, %v3184
    %v3599 = vmul.f32 %v3558, %v3184
    %v3600 = vmul.f32 %v3563, %v3184
    %v3601 = vmul.f32 %v3568, %v3184
    %v3602 = vmul.f32 %v3573, %v3184
    %v3603 = vmul.f32 %v3578, %v3184
    %v3604 = vmul.f32 %v3583, %v3184
    %v3605 = vmul.f32 %v3588, %v3184
    %3606 = vset.pattern.permute.xlu0 1
    %3607 = vperm.xlu0 %3606, %v3087
    %v3608 = vpop.permute.xlu0 %3607
    %3610 = vset.pattern.permute.xlu0 1
    %3611 = vperm.xlu0 %3610, %v3088
    %v3612 = vpop.permute.xlu0 %3611
    %3614 = vset.pattern.permute.xlu0 1
    %3615 = vperm.xlu0 %3614, %v3089
    %v3616 = vpop.permute.xlu0 %3615
    %3618 = vset.pattern.permute.xlu0 1
    %3619 = vperm.xlu0 %3618, %v3090
    %v3620 = vpop.permute.xlu0 %3619
    %3622 = vset.pattern.permute.xlu0 1
    %3623 = vperm.xlu0 %3622, %v3091
    %v3624 = vpop.permute.xlu0 %3623
    %3626 = vset.pattern.permute.xlu0 1
    %3627 = vperm.xlu0 %3626, %v3092
    %v3628 = vpop.permute.xlu0 %3627
    %3630 = vset.pattern.permute.xlu0 1
    %3631 = vperm.xlu0 %3630, %v3093
    %v3632 = vpop.permute.xlu0 %3631
    %3634 = vset.pattern.permute.xlu0 1
    %3635 = vperm.xlu0 %3634, %v3094
    %v3636 = vpop.permute.xlu0 %3635
    %3638 = vset.pattern.permute.xlu0 1
    %3639 = vperm.xlu0 %3638, %v3095
    %v3640 = vpop.permute.xlu0 %3639
    %3642 = vset.pattern.permute.xlu0 1
    %3643 = vperm.xlu0 %3642, %v3096
    %v3644 = vpop.permute.xlu0 %3643
    %3646 = vset.pattern.permute.xlu0 1
    %3647 = vperm.xlu0 %3646, %v3097
    %v3648 = vpop.permute.xlu0 %3647
    %3650 = vset.pattern.permute.xlu0 1
    %3651 = vperm.xlu0 %3650, %v3098
    %v3652 = vpop.permute.xlu0 %3651
    %3654 = vset.pattern.permute.xlu0 1
    %3655 = vperm.xlu0 %3654, %v3099
    %v3656 = vpop.permute.xlu0 %3655
    %3658 = vset.pattern.permute.xlu0 1
    %3659 = vperm.xlu0 %3658, %v3100
    %v3660 = vpop.permute.xlu0 %3659
    %3662 = vset.pattern.permute.xlu0 1
    %3663 = vperm.xlu0 %3662, %v3101
    %v3664 = vpop.permute.xlu0 %3663
    %3666 = vset.pattern.permute.xlu0 1
    %3667 = vperm.xlu0 %3666, %v3102
    %v3668 = vpop.permute.xlu0 %3667
    %v3670 = vmul.f32 %v3608, %v3281
    %v3671 = vmul.f32 %v3612, %v3281
    %v3672 = vmul.f32 %v3616, %v3281
    %v3673 = vmul.f32 %v3620, %v3281
    %v3674 = vmul.f32 %v3624, %v3281
    %v3675 = vmul.f32 %v3628, %v3281
    %v3676 = vmul.f32 %v3632, %v3281
    %v3677 = vmul.f32 %v3636, %v3281
    %v3678 = vmul.f32 %v3640, %v3281
    %v3679 = vmul.f32 %v3644, %v3281
    %v3680 = vmul.f32 %v3648, %v3281
    %v3681 = vmul.f32 %v3652, %v3281
    %v3682 = vmul.f32 %v3656, %v3281
    %v3683 = vmul.f32 %v3660, %v3281
    %v3684 = vmul.f32 %v3664, %v3281
    %v3685 = vmul.f32 %v3668, %v3281
    %v3686 = vadd.f32 %v3590, %v3670
    %v3687 = vadd.f32 %v3591, %v3671
    %v3688 = vadd.f32 %v3592, %v3672
    %v3689 = vadd.f32 %v3593, %v3673
    %v3690 = vadd.f32 %v3594, %v3674
    %v3691 = vadd.f32 %v3595, %v3675
    %v3692 = vadd.f32 %v3596, %v3676
    %v3693 = vadd.f32 %v3597, %v3677
    %v3694 = vadd.f32 %v3598, %v3678
    %v3695 = vadd.f32 %v3599, %v3679
    %v3696 = vadd.f32 %v3600, %v3680
    %v3697 = vadd.f32 %v3601, %v3681
    %v3698 = vadd.f32 %v3602, %v3682
    %v3699 = vadd.f32 %v3603, %v3683
    %v3700 = vadd.f32 %v3604, %v3684
    %v3701 = vadd.f32 %v3605, %v3685
    %3702 = vset.pattern.permute.xlu0 2
    %3703 = vperm.xlu0 %3702, %v3087
    %v3704 = vpop.permute.xlu0 %3703
    %3706 = vset.pattern.permute.xlu0 2
    %3707 = vperm.xlu0 %3706, %v3088
    %v3708 = vpop.permute.xlu0 %3707
    %3710 = vset.pattern.permute.xlu0 2
    %3711 = vperm.xlu0 %3710, %v3089
    %v3712 = vpop.permute.xlu0 %3711
    %3714 = vset.pattern.permute.xlu0 2
    %3715 = vperm.xlu0 %3714, %v3090
    %v3716 = vpop.permute.xlu0 %3715
    %3718 = vset.pattern.permute.xlu0 2
    %3719 = vperm.xlu0 %3718, %v3091
    %v3720 = vpop.permute.xlu0 %3719
    %3722 = vset.pattern.permute.xlu0 2
    %3723 = vperm.xlu0 %3722, %v3092
    %v3724 = vpop.permute.xlu0 %3723
    %3726 = vset.pattern.permute.xlu0 2
    %3727 = vperm.xlu0 %3726, %v3093
    %v3728 = vpop.permute.xlu0 %3727
    %3730 = vset.pattern.permute.xlu0 2
    %3731 = vperm.xlu0 %3730, %v3094
    %v3732 = vpop.permute.xlu0 %3731
    %3734 = vset.pattern.permute.xlu0 2
    %3735 = vperm.xlu0 %3734, %v3095
    %v3736 = vpop.permute.xlu0 %3735
    %3738 = vset.pattern.permute.xlu0 2
    %3739 = vperm.xlu0 %3738, %v3096
    %v3740 = vpop.permute.xlu0 %3739
    %3742 = vset.pattern.permute.xlu0 2
    %3743 = vperm.xlu0 %3742, %v3097
    %v3744 = vpop.permute.xlu0 %3743
    %3746 = vset.pattern.permute.xlu0 2
    %3747 = vperm.xlu0 %3746, %v3098
    %v3748 = vpop.permute.xlu0 %3747
    %3750 = vset.pattern.permute.xlu0 2
    %3751 = vperm.xlu0 %3750, %v3099
    %v3752 = vpop.permute.xlu0 %3751
    %3754 = vset.pattern.permute.xlu0 2
    %3755 = vperm.xlu0 %3754, %v3100
    %v3756 = vpop.permute.xlu0 %3755
    %3758 = vset.pattern.permute.xlu0 2
    %3759 = vperm.xlu0 %3758, %v3101
    %v3760 = vpop.permute.xlu0 %3759
    %3762 = vset.pattern.permute.xlu0 2
    %3763 = vperm.xlu0 %3762, %v3102
    %v3764 = vpop.permute.xlu0 %3763
    %v3766 = vmul.f32 %v3704, %v3394
    %v3767 = vmul.f32 %v3708, %v3394
    %v3768 = vmul.f32 %v3712, %v3394
    %v3769 = vmul.f32 %v3716, %v3394
    %v3770 = vmul.f32 %v3720, %v3394
    %v3771 = vmul.f32 %v3724, %v3394
    %v3772 = vmul.f32 %v3728, %v3394
    %v3773 = vmul.f32 %v3732, %v3394
    %v3774 = vmul.f32 %v3736, %v3394
    %v3775 = vmul.f32 %v3740, %v3394
    %v3776 = vmul.f32 %v3744, %v3394
    %v3777 = vmul.f32 %v3748, %v3394
    %v3778 = vmul.f32 %v3752, %v3394
    %v3779 = vmul.f32 %v3756, %v3394
    %v3780 = vmul.f32 %v3760, %v3394
    %v3781 = vmul.f32 %v3764, %v3394
    %v3782 = vadd.f32 %v3686, %v3766
    %v3783 = vadd.f32 %v3687, %v3767
    %v3784 = vadd.f32 %v3688, %v3768
    %v3785 = vadd.f32 %v3689, %v3769
    %v3786 = vadd.f32 %v3690, %v3770
    %v3787 = vadd.f32 %v3691, %v3771
    %v3788 = vadd.f32 %v3692, %v3772
    %v3789 = vadd.f32 %v3693, %v3773
    %v3790 = vadd.f32 %v3694, %v3774
    %v3791 = vadd.f32 %v3695, %v3775
    %v3792 = vadd.f32 %v3696, %v3776
    %v3793 = vadd.f32 %v3697, %v3777
    %v3794 = vadd.f32 %v3698, %v3778
    %v3795 = vadd.f32 %v3699, %v3779
    %v3796 = vadd.f32 %v3700, %v3780
    %v3797 = vadd.f32 %v3701, %v3781
    %v3798 = vmul.f32 %v3513, %v3427
    %v3799 = vmul.f32 %v3518, %v3427
    %v3800 = vmul.f32 %v3523, %v3427
    %v3801 = vmul.f32 %v3528, %v3427
    %v3802 = vmul.f32 %v3533, %v3427
    %v3803 = vmul.f32 %v3538, %v3427
    %v3804 = vmul.f32 %v3543, %v3427
    %v3805 = vmul.f32 %v3548, %v3427
    %v3806 = vmul.f32 %v3553, %v3427
    %v3807 = vmul.f32 %v3558, %v3427
    %v3808 = vmul.f32 %v3563, %v3427
    %v3809 = vmul.f32 %v3568, %v3427
    %v3810 = vmul.f32 %v3573, %v3427
    %v3811 = vmul.f32 %v3578, %v3427
    %v3812 = vmul.f32 %v3583, %v3427
    %v3813 = vmul.f32 %v3588, %v3427
    %v3814 = vmul.f32 %v3608, %v3444
    %v3815 = vmul.f32 %v3612, %v3444
    %v3816 = vmul.f32 %v3616, %v3444
    %v3817 = vmul.f32 %v3620, %v3444
    %v3818 = vmul.f32 %v3624, %v3444
    %v3819 = vmul.f32 %v3628, %v3444
    %v3820 = vmul.f32 %v3632, %v3444
    %v3821 = vmul.f32 %v3636, %v3444
    %v3822 = vmul.f32 %v3640, %v3444
    %v3823 = vmul.f32 %v3644, %v3444
    %v3824 = vmul.f32 %v3648, %v3444
    %v3825 = vmul.f32 %v3652, %v3444
    %v3826 = vmul.f32 %v3656, %v3444
    %v3827 = vmul.f32 %v3660, %v3444
    %v3828 = vmul.f32 %v3664, %v3444
    %v3829 = vmul.f32 %v3668, %v3444
    %v3830 = vadd.f32 %v3798, %v3814
    %v3831 = vadd.f32 %v3799, %v3815
    %v3832 = vadd.f32 %v3800, %v3816
    %v3833 = vadd.f32 %v3801, %v3817
    %v3834 = vadd.f32 %v3802, %v3818
    %v3835 = vadd.f32 %v3803, %v3819
    %v3836 = vadd.f32 %v3804, %v3820
    %v3837 = vadd.f32 %v3805, %v3821
    %v3838 = vadd.f32 %v3806, %v3822
    %v3839 = vadd.f32 %v3807, %v3823
    %v3840 = vadd.f32 %v3808, %v3824
    %v3841 = vadd.f32 %v3809, %v3825
    %v3842 = vadd.f32 %v3810, %v3826
    %v3843 = vadd.f32 %v3811, %v3827
    %v3844 = vadd.f32 %v3812, %v3828
    %v3845 = vadd.f32 %v3813, %v3829
    %v3846 = vmul.f32 %v3704, %v3477
    %v3847 = vmul.f32 %v3708, %v3477
    %v3848 = vmul.f32 %v3712, %v3477
    %v3849 = vmul.f32 %v3716, %v3477
    %v3850 = vmul.f32 %v3720, %v3477
    %v3851 = vmul.f32 %v3724, %v3477
    %v3852 = vmul.f32 %v3728, %v3477
    %v3853 = vmul.f32 %v3732, %v3477
    %v3854 = vmul.f32 %v3736, %v3477
    %v3855 = vmul.f32 %v3740, %v3477
    %v3856 = vmul.f32 %v3744, %v3477
    %v3857 = vmul.f32 %v3748, %v3477
    %v3858 = vmul.f32 %v3752, %v3477
    %v3859 = vmul.f32 %v3756, %v3477
    %v3860 = vmul.f32 %v3760, %v3477
    %v3861 = vmul.f32 %v3764, %v3477
    %v3862 = vadd.f32 %v3830, %v3846
    %v3863 = vadd.f32 %v3831, %v3847
    %v3864 = vadd.f32 %v3832, %v3848
    %v3865 = vadd.f32 %v3833, %v3849
    %v3866 = vadd.f32 %v3834, %v3850
    %v3867 = vadd.f32 %v3835, %v3851
    %v3868 = vadd.f32 %v3836, %v3852
    %v3869 = vadd.f32 %v3837, %v3853
    %v3870 = vadd.f32 %v3838, %v3854
    %v3871 = vadd.f32 %v3839, %v3855
    %v3872 = vadd.f32 %v3840, %v3856
    %v3873 = vadd.f32 %v3841, %v3857
    %v3874 = vadd.f32 %v3842, %v3858
    %v3875 = vadd.f32 %v3843, %v3859
    %v3876 = vadd.f32 %v3844, %v3860
    %v3877 = vadd.f32 %v3845, %v3861
    %v3878 = vmul.f32 %v3411, %v3862
    %v3879 = vmul.f32 %v3412, %v3863
    %v3880 = vmul.f32 %v3413, %v3864
    %v3881 = vmul.f32 %v3414, %v3865
    %v3882 = vmul.f32 %v3415, %v3866
    %v3883 = vmul.f32 %v3416, %v3867
    %v3884 = vmul.f32 %v3417, %v3868
    %v3885 = vmul.f32 %v3418, %v3869
    %v3886 = vmul.f32 %v3419, %v3870
    %v3887 = vmul.f32 %v3420, %v3871
    %v3888 = vmul.f32 %v3421, %v3872
    %v3889 = vmul.f32 %v3422, %v3873
    %v3890 = vmul.f32 %v3423, %v3874
    %v3891 = vmul.f32 %v3424, %v3875
    %v3892 = vmul.f32 %v3425, %v3876
    %v3893 = vmul.f32 %v3426, %v3877
    %v3894 = vmul.f32 %v3494, %v3782
    %v3895 = vmul.f32 %v3495, %v3783
    %v3896 = vmul.f32 %v3496, %v3784
    %v3897 = vmul.f32 %v3497, %v3785
    %v3898 = vmul.f32 %v3498, %v3786
    %v3899 = vmul.f32 %v3499, %v3787
    %v3900 = vmul.f32 %v3500, %v3788
    %v3901 = vmul.f32 %v3501, %v3789
    %v3902 = vmul.f32 %v3502, %v3790
    %v3903 = vmul.f32 %v3503, %v3791
    %v3904 = vmul.f32 %v3504, %v3792
    %v3905 = vmul.f32 %v3505, %v3793
    %v3906 = vmul.f32 %v3506, %v3794
    %v3907 = vmul.f32 %v3507, %v3795
    %v3908 = vmul.f32 %v3508, %v3796
    %v3909 = vmul.f32 %v3509, %v3797
    %v3910 = vadd.f32 %v3878, %v3894
    %v3911 = vadd.f32 %v3879, %v3895
    %v3912 = vadd.f32 %v3880, %v3896
    %v3913 = vadd.f32 %v3881, %v3897
    %v3914 = vadd.f32 %v3882, %v3898
    %v3915 = vadd.f32 %v3883, %v3899
    %v3916 = vadd.f32 %v3884, %v3900
    %v3917 = vadd.f32 %v3885, %v3901
    %v3918 = vadd.f32 %v3886, %v3902
    %v3919 = vadd.f32 %v3887, %v3903
    %v3920 = vadd.f32 %v3888, %v3904
    %v3921 = vadd.f32 %v3889, %v3905
    %v3922 = vadd.f32 %v3890, %v3906
    %v3923 = vadd.f32 %v3891, %v3907
    %v3924 = vadd.f32 %v3892, %v3908
    %v3925 = vadd.f32 %v3893, %v3909
    %3927 = vset.pattern.permute.xlu0 0
    %3928 = vperm.xlu0 %3927, %v3000
    %v3929 = vpop.permute.xlu0 %3928
    %3932 = vset.pattern.permute.xlu0 0
    %3933 = vperm.xlu0 %3932, %v3002
    %v3934 = vpop.permute.xlu0 %3933
    %3937 = vset.pattern.permute.xlu0 0
    %3938 = vperm.xlu0 %3937, %v3005
    %v3939 = vpop.permute.xlu0 %3938
    %3942 = vset.pattern.permute.xlu0 0
    %3943 = vperm.xlu0 %3942, %v3007
    %v3944 = vpop.permute.xlu0 %3943
    %3947 = vset.pattern.permute.xlu0 0
    %3948 = vperm.xlu0 %3947, %v3010
    %v3949 = vpop.permute.xlu0 %3948
    %3952 = vset.pattern.permute.xlu0 0
    %3953 = vperm.xlu0 %3952, %v3012
    %v3954 = vpop.permute.xlu0 %3953
    %3957 = vset.pattern.permute.xlu0 0
    %3958 = vperm.xlu0 %3957, %v3015
    %v3959 = vpop.permute.xlu0 %3958
    %3962 = vset.pattern.permute.xlu0 0
    %3963 = vperm.xlu0 %3962, %v3017
    %v3964 = vpop.permute.xlu0 %3963
    %3967 = vset.pattern.permute.xlu0 0
    %3968 = vperm.xlu0 %3967, %v3020
    %v3969 = vpop.permute.xlu0 %3968
    %3972 = vset.pattern.permute.xlu0 0
    %3973 = vperm.xlu0 %3972, %v3022
    %v3974 = vpop.permute.xlu0 %3973
    %3977 = vset.pattern.permute.xlu0 0
    %3978 = vperm.xlu0 %3977, %v3025
    %v3979 = vpop.permute.xlu0 %3978
    %3982 = vset.pattern.permute.xlu0 0
    %3983 = vperm.xlu0 %3982, %v3027
    %v3984 = vpop.permute.xlu0 %3983
    %3987 = vset.pattern.permute.xlu0 0
    %3988 = vperm.xlu0 %3987, %v3030
    %v3989 = vpop.permute.xlu0 %3988
    %3992 = vset.pattern.permute.xlu0 0
    %3993 = vperm.xlu0 %3992, %v3032
    %v3994 = vpop.permute.xlu0 %3993
    %3997 = vset.pattern.permute.xlu0 0
    %3998 = vperm.xlu0 %3997, %v3035
    %v3999 = vpop.permute.xlu0 %3998
    %4002 = vset.pattern.permute.xlu0 0
    %4003 = vperm.xlu0 %4002, %v3037
    %v4004 = vpop.permute.xlu0 %4003
    %v4006 = vperm.slane %v3103, 6
    %v4007 = vmul.f32 %v3929, %v4006
    %v4008 = vmul.f32 %v3934, %v4006
    %v4009 = vmul.f32 %v3939, %v4006
    %v4010 = vmul.f32 %v3944, %v4006
    %v4011 = vmul.f32 %v3949, %v4006
    %v4012 = vmul.f32 %v3954, %v4006
    %v4013 = vmul.f32 %v3959, %v4006
    %v4014 = vmul.f32 %v3964, %v4006
    %v4015 = vmul.f32 %v3969, %v4006
    %v4016 = vmul.f32 %v3974, %v4006
    %v4017 = vmul.f32 %v3979, %v4006
    %v4018 = vmul.f32 %v3984, %v4006
    %v4019 = vmul.f32 %v3989, %v4006
    %v4020 = vmul.f32 %v3994, %v4006
    %v4021 = vmul.f32 %v3999, %v4006
    %v4022 = vmul.f32 %v4004, %v4006
    %v4023 = vadd.f32 %v3910, %v4007
    %v4024 = vadd.f32 %v3911, %v4008
    %v4025 = vadd.f32 %v3912, %v4009
    %v4026 = vadd.f32 %v3913, %v4010
    %v4027 = vadd.f32 %v3914, %v4011
    %v4028 = vadd.f32 %v3915, %v4012
    %v4029 = vadd.f32 %v3916, %v4013
    %v4030 = vadd.f32 %v3917, %v4014
    %v4031 = vadd.f32 %v3918, %v4015
    %v4032 = vadd.f32 %v3919, %v4016
    %v4033 = vadd.f32 %v3920, %v4017
    %v4034 = vadd.f32 %v3921, %v4018
    %v4035 = vadd.f32 %v3922, %v4019
    %v4036 = vadd.f32 %v3923, %v4020
    %v4037 = vadd.f32 %v3924, %v4021
    %v4038 = vadd.f32 %v3925, %v4022
    %v4039 = vld [vmem:[%s135] sm:$0x1]
    %v4040 = vlaneseq
    %v4041 = vshrl.u32 %v4040, 7
    %v4042 = vperm.slane %v4039, 0
    %vm4043 = vcmp.eq.s32.totalorder %v4041, %v4042
    %v4044 = vsel %vm4043, 1, 0
    %v4045 = vcvt.s32.f32 %v4044
    %4046 = vmatpush.msra.mxu0 %v4038
    %4047 = vmatpush.msra.mxu0 %v4037
    %4048 = vmatpush.msra.mxu0 %v4036
    %4049 = vmatpush.msra.mxu0 %v4035
    %4050 = vmatpush.msra.mxu0 %v4034
    %4051 = vmatpush.msra.mxu0 %v4033
    %4052 = vmatpush.msra.mxu0 %v4032
    %4053 = vmatpush.msra.mxu0 %v4031
    %4054 = vmatpush.msra.mxu0 %v4030
    %4055 = vmatpush.msra.mxu0 %v4029
    %4056 = vmatpush.msra.mxu0 %v4028
    %4057 = vmatpush.msra.mxu0 %v4027
    %4058 = vmatpush.msra.mxu0 %v4026
    %4059 = vmatpush.msra.mxu0 %v4025
    %4060 = vmatpush.msra.mxu0 %v4024
    %4061 = vmatpush.msra.mxu0 %v4023
    %4062 = vmatmul.f32.gmra.mxu0 %v4045
    %v4063 = vpop.f32.mrf.mxu0
    %v4064 = vadd.f32 0.0, %v4063
    %4065 = vdwg.mxu0
    %p4066 = scmp.eq.s32.totalorder 0, 0
    // Predicated region
    $region70: #{tpu_custom_call.1} parent=1 // pred_check
      %p4067 = pneg %p4066
    $region71: #{tpu_custom_call.1} parent=1 // pred_check_branch
      %4069 = sbr.rel (%p4067) target = $region73
    $region72: #{tpu_custom_call.1} parent=1 // pred_region
      %4070 = vst [vmem:[#allocation2] sm:$0xff] 0.0
    $region73: #{tpu_custom_call.1} parent=1 // pred_fallthru
      _
    %v4071 = vld [vmem:[#allocation2] sm:$0xff]
    %v4072 = vadd.f32 %v4071, %v4064
    %4073 = vst [vmem:[#allocation2] sm:$0xff] %v4072
    // Predicated region
    $region74: #{tpu_custom_call.1} parent=1 // pred_check
      _
    $region75: #{tpu_custom_call.1} parent=1 // pred_check_branch
      %4075 = sbr.rel (0) target = $region77
    $region76: #{tpu_custom_call.1} parent=1 // pred_region
      %4077 = vsyncadd [#allocation3], 0
      %s4079 = sshll.u32 [#allocation2], 4
      %s4080 = int_to_ptr.vmem [resolvable:$true] %s4079
      %s4081 = sshll.u32 %s17, 4
      %s4082 = int_to_ptr.hbm [resolvable:$true] %s4081
      %4084 = dma.vmem_to_hbm [thread:$0]  %s4080, 128, %s4082, [#allocation3]
    $region77: #{tpu_custom_call.1} parent=1 // pred_fallthru
      _
    // Predicated region
    $region78: #{tpu_custom_call.1} parent=1 // pred_check
      _
    $region79: #{tpu_custom_call.1} parent=1 // pred_check_branch
      %4086 = sbr.rel (0) target = $region81
    $region80: #{tpu_custom_call.1} parent=1 // pred_region
      %4088 = dma.done [#allocation3], 128
    $region81: #{tpu_custom_call.1} parent=1 // pred_fallthru
      _
    %4089 = vsyncpa [#allocation3], 1

</llo_original>
